<compile_context>
chip_gen: v7x
topology: tpu7x:2x2x1
jax: 0.10.0
libtpu: 0.0.40
codegen_flags: <defaults>
</compile_context>

<pallas_src>
import functools

import jax
import jax.numpy as jnp
from jax.experimental import pallas as pl
from jax.experimental.pallas import tpu as pltpu


def _greedy_decode_loop(max_len, gru_gate_matmuls,
                        x0_ref, h0_ref,
                        b_r_ref, b_z_ref, b_in_ref, b_hn_ref,
                        w_out_ref, b_out_ref, emb_ref,
                        ids_ref, h_out_ref):
    """Shared decode loop. gru_gate_matmuls(xb, hb) -> six (B,H) f32 gate pre-acts."""
    bsz = h0_ref.shape[0]
    n_vocab = w_out_ref.shape[1]
    n_emb = emb_ref.shape[0]

    # Loop-invariant small tensors hoisted once (JAX does not CSE broadcasts).
    b_r, b_z = b_r_ref[...], b_z_ref[...]
    b_in, b_hn = b_in_ref[...], b_hn_ref[...]
    b_out = b_out_ref[...]
    col_v = jax.lax.broadcasted_iota(jnp.int32, (bsz, n_vocab), 1)
    col_e = jax.lax.broadcasted_iota(jnp.int32, (bsz, n_emb), 1)
    col_t = jax.lax.broadcasted_iota(jnp.int32, (bsz, max_len), 1)

    x0 = x0_ref[...].astype(jnp.bfloat16)   # (B, H) embedded start token (bf16 feed)
    h0 = h0_ref[...]                        # (B, H) f32 hidden state
    hb0 = h0.astype(jnp.bfloat16)
    ids0 = jnp.zeros((bsz, max_len), jnp.int32)

    def step(t, carry):
        xb, hb, h, ids = carry
        gx_r, gx_z, gx_n, gh_r, gh_z, gh_n = gru_gate_matmuls(xb, hb)

        # --- GRU cell (PyTorch gate order r, z, n); gate math in f32 (EUP) ---
        r = jax.nn.sigmoid(gx_r + gh_r + b_r)
        z = jax.nn.sigmoid(gx_z + gh_z + b_z)
        n = jnp.tanh(gx_n + b_in + r * (gh_n + b_hn))
        h_new = (1.0 - z) * n + z * h
        hb_new = h_new.astype(jnp.bfloat16)   # reused for out-proj AND next step

        # --- Output projection: Linear(H, V) ---
        logits = jnp.dot(hb_new, w_out_ref[...],
                         preferred_element_type=jnp.float32) + b_out

        # --- Greedy argmax (first occurrence on ties, matches jnp.argmax) ---
        max_val = jnp.max(logits, axis=1, keepdims=True)
        cand = jnp.where(logits == max_val, col_v, n_vocab)
        predicted = jnp.min(cand, axis=1, keepdims=True).astype(jnp.int32)

        ids_new = jnp.where(col_t == t, predicted, ids)

        # --- Embedding lookup for next input: one-hot(predicted) @ table (MXU) ---
        # TODO(synk): predicted ids >= emb_size yield a zero embedding here,
        # whereas PyTorch nn.Embedding would raise (only if output_size > emb_size).
        onehot = (col_e == predicted).astype(jnp.bfloat16)
        x_new = jnp.dot(onehot, emb_ref[...],
                        preferred_element_type=jnp.float32).astype(jnp.bfloat16)
        return (x_new, hb_new, h_new, ids_new)

    _, _, h_fin, ids_fin = jax.lax.fori_loop(
        0, max_len, step, (x0, hb0, h0, ids0), unroll=(max_len <= 32))

    # Single lane-dense HBM writeback at the very end.
    ids_ref[...] = ids_fin
    h_out_ref[...] = h_fin


def decode_kernel_split(x0_ref, h0_ref,
                        w_ih_r_ref, w_ih_z_ref, w_ih_n_ref,
                        w_hh_r_ref, w_hh_z_ref, w_hh_n_ref,
                        b_r_ref, b_z_ref, b_in_ref, b_hn_ref,
                        w_out_ref, b_out_ref, emb_ref,
                        ids_ref, h_out_ref, *, max_len):
    """Per-gate (H,H) matmuls: used when H is NOT a multiple of 128."""
    def gates(xb, hb):
        mm = lambda a, w_ref: jnp.dot(a, w_ref[...],
                                      preferred_element_type=jnp.float32)
        return (mm(xb, w_ih_r_ref), mm(xb, w_ih_z_ref), mm(xb, w_ih_n_ref),
                mm(hb, w_hh_r_ref), mm(hb, w_hh_z_ref), mm(hb, w_hh_n_ref))

    _greedy_decode_loop(max_len, gates, x0_ref, h0_ref,
                        b_r_ref, b_z_ref, b_in_ref, b_hn_ref,
                        w_out_ref, b_out_ref, emb_ref, ids_ref, h_out_ref)


def decode_kernel_packed(x0_ref, h0_ref, w_ih_ref, w_hh_ref,
                         b_r_ref, b_z_ref, b_in_ref, b_hn_ref,
                         w_out_ref, b_out_ref, emb_ref,
                         ids_ref, h_out_ref, *, max_len):
    """Packed (H,3H) matmuls + lane-aligned result slices: H % 128 == 0."""
    hid = h0_ref.shape[1]

    def gates(xb, hb):
        gi = jnp.dot(xb, w_ih_ref[...], preferred_element_type=jnp.float32)
        gh = jnp.dot(hb, w_hh_ref[...], preferred_element_type=jnp.float32)
        return (gi[:, 0:hid], gi[:, hid:2 * hid], gi[:, 2 * hid:3 * hid],
                gh[:, 0:hid], gh[:, hid:2 * hid], gh[:, 2 * hid:3 * hid])

    _greedy_decode_loop(max_len, gates, x0_ref, h0_ref,
                        b_r_ref, b_z_ref, b_in_ref, b_hn_ref,
                        w_out_ref, b_out_ref, emb_ref, ids_ref, h_out_ref)


def prepare_decoder_params(params, embedding_table):
    """One-time parameter prep: gate split (if needed), bf16 casts, bias fusing.

    Done once at load time so the jitted forward does no per-call HBM traffic
    re-materializing bf16 weight copies.
    """
    H = params["w_ih"].shape[0]
    b_ih, b_hh = params["b_ih"], params["b_hh"]
    prep = {
        # r/z biases can be pre-summed; n-gate biases must stay separate since
        # b_hn sits inside the r * (...) term.
        "b_r": (b_ih[:, 0:H] + b_hh[:, 0:H]).astype(jnp.float32),
        "b_z": (b_ih[:, H:2 * H] + b_hh[:, H:2 * H]).astype(jnp.float32),
        "b_in": b_ih[:, 2 * H:3 * H].astype(jnp.float32),
        "b_hn": b_hh[:, 2 * H:3 * H].astype(jnp.float32),
        "w_out": params["w_out"].astype(jnp.bfloat16),
        "b_out": params["b_out"].astype(jnp.float32),
        "emb": embedding_table.astype(jnp.bfloat16),
    }
    if H % 128 == 0:
        # Gate boundaries are lane-tile aligned -> keep packed, slice in-kernel.
        prep["w_ih"] = params["w_ih"].astype(jnp.bfloat16)
        prep["w_hh"] = params["w_hh"].astype(jnp.bfloat16)
    else:
        for g, name in enumerate(("r", "z", "n")):
            prep[f"w_ih_{name}"] = params["w_ih"][:, g * H:(g + 1) * H].astype(jnp.bfloat16)
            prep[f"w_hh_{name}"] = params["w_hh"][:, g * H:(g + 1) * H].astype(jnp.bfloat16)
    return prep


@functools.partial(jax.jit, static_argnames=("max_len",))
def text_decoder_forward(inputs, hidden, max_len, prep):
    """Greedy decode loop fused into a single gridless Pallas call.

    inputs:  (B, H) embedded start token
    hidden:  (B, H) initial GRU hidden state (num_layers=1, unidirectional)
    returns: sampled_ids (B, max_len) int32, final hidden (B, H) f32
    """
    B, H = hidden.shape
    B_pad = max(16, ((B + 15) // 16) * 16)   # bf16 MXU operands pack 16 sublanes

    x0 = jnp.zeros((B_pad, H), jnp.float32).at[:B].set(inputs.astype(jnp.float32))
    h0 = jnp.zeros((B_pad, H), jnp.float32).at[:B].set(hidden.astype(jnp.float32))

    packed = "w_ih" in prep
    if packed:
        w_args = (prep["w_ih"], prep["w_hh"])
        kern = decode_kernel_packed
    else:
        w_args = (prep["w_ih_r"], prep["w_ih_z"], prep["w_ih_n"],
                  prep["w_hh_r"], prep["w_hh_z"], prep["w_hh_n"])
        kern = decode_kernel_split

    args = (x0, h0, *w_args,
            prep["b_r"], prep["b_z"], prep["b_in"], prep["b_hn"],
            prep["w_out"], prep["b_out"], prep["emb"])

    # Gridless call: every operand is a whole-array VMEM block, DMA'd once and
    # single-buffered. Raise the scoped VMEM limit only if the resident set
    # actually needs it (relevant for realistic H/V/E, esp. v7x / v5e limits).
    in_bytes = sum(a.size * a.dtype.itemsize for a in args)
    out_bytes = B_pad * max_len * 4 + B_pad * H * 4
    need = int(1.5 * (in_bytes + out_bytes)) + (2 << 20)
    pallas_kwargs = {}
    if need > (32 << 20):
        pallas_kwargs["compiler_params"] = pltpu.CompilerParams(
            vmem_limit_bytes=min(need, 100 << 20))

    ids_pad, h_pad = pl.pallas_call(
        functools.partial(kern, max_len=max_len),
        out_shape=(jax.ShapeDtypeStruct((B_pad, max_len), jnp.int32),
                   jax.ShapeDtypeStruct((B_pad, H), jnp.float32)),
        **pallas_kwargs,
    )(*args)

    # TODO(synk): self.softmax (LogSoftmax) is defined in __init__ but never
    # applied in the reference forward, so it is intentionally omitted.
    return ids_pad[:B, :], h_pad[:B, :]


def init_params(key, hidden_size, output_size, emb_size):
    """Deterministic synthetic init matching nn.GRU / nn.Linear / nn.Embedding
    shapes (GRU weights stored transposed, packed gate order r, z, n)."""
    ks = jax.random.split(key, 7)
    scale = 1.0 / jnp.sqrt(hidden_size)
    params = {
        "w_ih": jax.random.uniform(ks[0], (hidden_size, 3 * hidden_size),
                                   jnp.float32, -scale, scale),
        "w_hh": jax.random.uniform(ks[1], (hidden_size, 3 * hidden_size),
                                   jnp.float32, -scale, scale),
        "b_ih": jax.random.uniform(ks[2], (1, 3 * hidden_size),
                                   jnp.float32, -scale, scale),
        "b_hh": jax.random.uniform(ks[3], (1, 3 * hidden_size),
                                   jnp.float32, -scale, scale),
        "w_out": jax.random.uniform(ks[4], (hidden_size, output_size),
                                    jnp.float32, -scale, scale),
        "b_out": jax.random.uniform(ks[5], (1, output_size),
                                    jnp.float32, -scale, scale),
    }
    # nn.Embedding(emb_size, hidden_size): table of shape (emb_size, hidden_size)
    embedding_table = jax.random.normal(ks[6], (emb_size, hidden_size), jnp.float32)
    return params, embedding_table


if __name__ == "__main__":
    batch = 2
    hidden_size = 32      # hidden_size == embedding dim (GRU input size)
    output_size = 16      # vocab logits size of self.out
    emb_size = 16         # embedding table rows
    max_len = 8

    key = jax.random.PRNGKey(0)
    k_params, k_ids, k_hidden = jax.random.split(key, 3)

    params, embedding_table = init_params(k_params, hidden_size, output_size, emb_size)
    prep = prepare_decoder_params(params, embedding_table)

    start_ids = jax.random.randint(k_ids, (batch,), 0, emb_size)
    inputs = embedding_table[start_ids]                                      # (B, H)
    hidden = jax.random.normal(k_hidden, (batch, hidden_size), jnp.float32)  # (B, H)

    sampled_ids, final_hidden = text_decoder_forward(inputs, hidden, max_len, prep)

    jax.block_until_ready(sampled_ids)
    jax.block_until_ready(final_hidden)

    assert sampled_ids.shape == (batch, max_len)
    assert sampled_ids.dtype == jnp.int32
    assert final_hidden.shape == (batch, hidden_size)
    print("KERNEL_OK")
</pallas_src>

<mosaic_0001>
module attributes {stable_mosaic.version = 11 : i64} {
  func.func @decode_kernel_split(%arg0: memref<16x32xf32, #tpu.memory_space<vmem>>, %arg1: memref<16x32xf32, #tpu.memory_space<vmem>>, %arg2: memref<32x32xbf16, #tpu.memory_space<vmem>>, %arg3: memref<32x32xbf16, #tpu.memory_space<vmem>>, %arg4: memref<32x32xbf16, #tpu.memory_space<vmem>>, %arg5: memref<32x32xbf16, #tpu.memory_space<vmem>>, %arg6: memref<32x32xbf16, #tpu.memory_space<vmem>>, %arg7: memref<32x32xbf16, #tpu.memory_space<vmem>>, %arg8: memref<1x32xf32, #tpu.memory_space<vmem>>, %arg9: memref<1x32xf32, #tpu.memory_space<vmem>>, %arg10: memref<1x32xf32, #tpu.memory_space<vmem>>, %arg11: memref<1x32xf32, #tpu.memory_space<vmem>>, %arg12: memref<32x16xbf16, #tpu.memory_space<vmem>>, %arg13: memref<1x16xf32, #tpu.memory_space<vmem>>, %arg14: memref<16x32xbf16, #tpu.memory_space<vmem>>, %arg15: memref<16x8xi32, #tpu.memory_space<vmem>>, %arg16: memref<16x32xf32, #tpu.memory_space<vmem>>) attributes {dimension_semantics = [], scalar_prefetch = 0 : i64, scratch_operands = 0 : i64, tpu.core_type = #tpu.core_type<tc>} {
    %c0 = arith.constant 0 : index
    %c0_0 = arith.constant 0 : index
    %0 = vector.load %arg8[%c0, %c0_0] : memref<1x32xf32, #tpu.memory_space<vmem>>, vector<1x32xf32>
    %c0_1 = arith.constant 0 : index
    %c0_2 = arith.constant 0 : index
    %1 = vector.load %arg9[%c0_1, %c0_2] : memref<1x32xf32, #tpu.memory_space<vmem>>, vector<1x32xf32>
    %c0_3 = arith.constant 0 : index
    %c0_4 = arith.constant 0 : index
    %2 = vector.load %arg10[%c0_3, %c0_4] : memref<1x32xf32, #tpu.memory_space<vmem>>, vector<1x32xf32>
    %c0_5 = arith.constant 0 : index
    %c0_6 = arith.constant 0 : index
    %3 = vector.load %arg11[%c0_5, %c0_6] : memref<1x32xf32, #tpu.memory_space<vmem>>, vector<1x32xf32>
    %c0_7 = arith.constant 0 : index
    %c0_8 = arith.constant 0 : index
    %4 = vector.load %arg13[%c0_7, %c0_8] : memref<1x16xf32, #tpu.memory_space<vmem>>, vector<1x16xf32>
    %5 = tpu.iota {dimensions = array<i32: 1>} : vector<16x16xi32>
    %6 = tpu.iota {dimensions = array<i32: 1>} : vector<16x16xi32>
    %7 = tpu.iota {dimensions = array<i32: 1>} : vector<16x8xi32>
    %c0_9 = arith.constant 0 : index
    %c0_10 = arith.constant 0 : index
    %8 = vector.load %arg0[%c0_9, %c0_10] : memref<16x32xf32, #tpu.memory_space<vmem>>, vector<16x32xf32>
    %9 = arith.truncf %8 : vector<16x32xf32> to vector<16x32xbf16>
    %c0_11 = arith.constant 0 : index
    %c0_12 = arith.constant 0 : index
    %10 = vector.load %arg1[%c0_11, %c0_12] : memref<16x32xf32, #tpu.memory_space<vmem>>, vector<16x32xf32>
    %11 = arith.truncf %10 : vector<16x32xf32> to vector<16x32xbf16>
    %c0_i32 = arith.constant 0 : i32
    %12 = vector.broadcast %c0_i32 : i32 to vector<16x8xi32>
    %c0_i32_13 = arith.constant 0 : i32
    %c0_14 = arith.constant 0 : index
    %c0_15 = arith.constant 0 : index
    %13 = vector.load %arg2[%c0_14, %c0_15] : memref<32x32xbf16, #tpu.memory_space<vmem>>, vector<32x32xbf16>
    %cst = arith.constant dense<0.000000e+00> : vector<16x32xf32>
    %14 = tpu.matmul %9, %13, %cst {dimension_numbers = #tpu.dot_dimension_numbers<[1], [0], [0], [1], [0, 0, 1, 1], [], []>} : vector<16x32xbf16>, vector<32x32xbf16>, vector<16x32xf32> -> vector<16x32xf32>
    %c0_16 = arith.constant 0 : index
    %c0_17 = arith.constant 0 : index
    %15 = vector.load %arg3[%c0_16, %c0_17] : memref<32x32xbf16, #tpu.memory_space<vmem>>, vector<32x32xbf16>
    %cst_18 = arith.constant dense<0.000000e+00> : vector<16x32xf32>
    %16 = tpu.matmul %9, %15, %cst_18 {dimension_numbers = #tpu.dot_dimension_numbers<[1], [0], [0], [1], [0, 0, 1, 1], [], []>} : vector<16x32xbf16>, vector<32x32xbf16>, vector<16x32xf32> -> vector<16x32xf32>
    %c0_19 = arith.constant 0 : index
    %c0_20 = arith.constant 0 : index
    %17 = vector.load %arg4[%c0_19, %c0_20] : memref<32x32xbf16, #tpu.memory_space<vmem>>, vector<32x32xbf16>
    %cst_21 = arith.constant dense<0.000000e+00> : vector<16x32xf32>
    %18 = tpu.matmul %9, %17, %cst_21 {dimension_numbers = #tpu.dot_dimension_numbers<[1], [0], [0], [1], [0, 0, 1, 1], [], []>} : vector<16x32xbf16>, vector<32x32xbf16>, vector<16x32xf32> -> vector<16x32xf32>
    %c0_22 = arith.constant 0 : index
    %c0_23 = arith.constant 0 : index
    %19 = vector.load %arg5[%c0_22, %c0_23] : memref<32x32xbf16, #tpu.memory_space<vmem>>, vector<32x32xbf16>
    %cst_24 = arith.constant dense<0.000000e+00> : vector<16x32xf32>
    %20 = tpu.matmul %11, %19, %cst_24 {dimension_numbers = #tpu.dot_dimension_numbers<[1], [0], [0], [1], [0, 0, 1, 1], [], []>} : vector<16x32xbf16>, vector<32x32xbf16>, vector<16x32xf32> -> vector<16x32xf32>
    %c0_25 = arith.constant 0 : index
    %c0_26 = arith.constant 0 : index
    %21 = vector.load %arg6[%c0_25, %c0_26] : memref<32x32xbf16, #tpu.memory_space<vmem>>, vector<32x32xbf16>
    %cst_27 = arith.constant dense<0.000000e+00> : vector<16x32xf32>
    %22 = tpu.matmul %11, %21, %cst_27 {dimension_numbers = #tpu.dot_dimension_numbers<[1], [0], [0], [1], [0, 0, 1, 1], [], []>} : vector<16x32xbf16>, vector<32x32xbf16>, vector<16x32xf32> -> vector<16x32xf32>
    %c0_28 = arith.constant 0 : index
    %c0_29 = arith.constant 0 : index
    %23 = vector.load %arg7[%c0_28, %c0_29] : memref<32x32xbf16, #tpu.memory_space<vmem>>, vector<32x32xbf16>
    %cst_30 = arith.constant dense<0.000000e+00> : vector<16x32xf32>
    %24 = tpu.matmul %11, %23, %cst_30 {dimension_numbers = #tpu.dot_dimension_numbers<[1], [0], [0], [1], [0, 0, 1, 1], [], []>} : vector<16x32xbf16>, vector<32x32xbf16>, vector<16x32xf32> -> vector<16x32xf32>
    %25 = arith.addf %14, %20 : vector<16x32xf32>
    %26 = vector.broadcast %0 : vector<1x32xf32> to vector<16x32xf32>
    %27 = arith.addf %25, %26 : vector<16x32xf32>
    %28 = arith.negf %27 : vector<16x32xf32>
    %29 = math.exp %28 : vector<16x32xf32>
    %cst_31 = arith.constant 1.000000e+00 : f32
    %30 = vector.broadcast %cst_31 : f32 to vector<16x32xf32>
    %31 = arith.addf %30, %29 : vector<16x32xf32>
    %32 = arith.divf %30, %31 : vector<16x32xf32>
    %33 = arith.addf %16, %22 : vector<16x32xf32>
    %34 = vector.broadcast %1 : vector<1x32xf32> to vector<16x32xf32>
    %35 = arith.addf %33, %34 : vector<16x32xf32>
    %36 = arith.negf %35 : vector<16x32xf32>
    %37 = math.exp %36 : vector<16x32xf32>
    %cst_32 = arith.constant 1.000000e+00 : f32
    %38 = vector.broadcast %cst_32 : f32 to vector<16x32xf32>
    %39 = arith.addf %38, %37 : vector<16x32xf32>
    %40 = arith.divf %38, %39 : vector<16x32xf32>
    %41 = vector.broadcast %2 : vector<1x32xf32> to vector<16x32xf32>
    %42 = arith.addf %18, %41 : vector<16x32xf32>
    %43 = vector.broadcast %3 : vector<1x32xf32> to vector<16x32xf32>
    %44 = arith.addf %24, %43 : vector<16x32xf32>
    %45 = arith.mulf %32, %44 : vector<16x32xf32>
    %46 = arith.addf %42, %45 : vector<16x32xf32>
    %47 = math.tanh %46 : vector<16x32xf32>
    %cst_33 = arith.constant 1.000000e+00 : f32
    %48 = vector.broadcast %cst_33 : f32 to vector<16x32xf32>
    %49 = arith.subf %48, %40 : vector<16x32xf32>
    %50 = arith.mulf %49, %47 : vector<16x32xf32>
    %51 = arith.mulf %40, %10 : vector<16x32xf32>
    %52 = arith.addf %50, %51 : vector<16x32xf32>
    %53 = arith.truncf %52 : vector<16x32xf32> to vector<16x32xbf16>
    %c0_34 = arith.constant 0 : index
    %c0_35 = arith.constant 0 : index
    %54 = vector.load %arg12[%c0_34, %c0_35] : memref<32x16xbf16, #tpu.memory_space<vmem>>, vector<32x16xbf16>
    %cst_36 = arith.constant dense<0.000000e+00> : vector<16x16xf32>
    %55 = tpu.matmul %53, %54, %cst_36 {dimension_numbers = #tpu.dot_dimension_numbers<[1], [0], [0], [1], [0, 0, 1, 1], [], []>} : vector<16x32xbf16>, vector<32x16xbf16>, vector<16x16xf32> -> vector<16x16xf32>
    %56 = vector.broadcast %4 : vector<1x16xf32> to vector<16x16xf32>
    %57 = arith.addf %55, %56 : vector<16x16xf32>
    %cst_37 = arith.constant dense<0xFF800000> : vector<16xf32>
    %58 = vector.multi_reduction <maximumf>, %57, %cst_37 [1] : vector<16x16xf32> to vector<16xf32>
    %59 = vector.shape_cast %58 : vector<16xf32> to vector<16x1xf32>
    %60 = vector.broadcast %59 : vector<16x1xf32> to vector<16x16xf32>
    %61 = arith.cmpf oeq, %57, %60 : vector<16x16xf32>
    %c16_i32 = arith.constant 16 : i32
    %62 = vector.broadcast %c16_i32 : i32 to vector<16x16xi32>
    %63 = arith.select %61, %5, %62 : vector<16x16xi1>, vector<16x16xi32>
    %cst_38 = arith.constant dense<2147483647> : vector<16xi32>
    %64 = vector.multi_reduction <minsi>, %63, %cst_38 [1] : vector<16x16xi32> to vector<16xi32>
    %65 = vector.shape_cast %64 : vector<16xi32> to vector<16x1xi32>
    %66 = vector.broadcast %c0_i32_13 : i32 to vector<16x8xi32>
    %67 = arith.cmpi eq, %7, %66 : vector<16x8xi32>
    %68 = vector.shape_cast %65 : vector<16x1xi32> to vector<16x1xi32>
    %69 = vector.broadcast %68 : vector<16x1xi32> to vector<16x8xi32>
    %70 = arith.select %67, %69, %12 : vector<16x8xi1>, vector<16x8xi32>
    %71 = vector.broadcast %65 : vector<16x1xi32> to vector<16x16xi32>
    %72 = arith.cmpi eq, %6, %71 : vector<16x16xi32>
    %73 = arith.extui %72 : vector<16x16xi1> to vector<16x16xi32>
    %74 = arith.sitofp %73 : vector<16x16xi32> to vector<16x16xf32>
    %75 = arith.truncf %74 : vector<16x16xf32> to vector<16x16xbf16>
    %c0_39 = arith.constant 0 : index
    %c0_40 = arith.constant 0 : index
    %76 = vector.load %arg14[%c0_39, %c0_40] : memref<16x32xbf16, #tpu.memory_space<vmem>>, vector<16x32xbf16>
    %cst_41 = arith.constant dense<0.000000e+00> : vector<16x32xf32>
    %77 = tpu.matmul %75, %76, %cst_41 {dimension_numbers = #tpu.dot_dimension_numbers<[1], [0], [0], [1], [0, 0, 1, 1], [], []>} : vector<16x16xbf16>, vector<16x32xbf16>, vector<16x32xf32> -> vector<16x32xf32>
    %78 = arith.truncf %77 : vector<16x32xf32> to vector<16x32xbf16>
    %c1_i32 = arith.constant 1 : i32
    %c0_42 = arith.constant 0 : index
    %c0_43 = arith.constant 0 : index
    %79 = vector.load %arg2[%c0_42, %c0_43] : memref<32x32xbf16, #tpu.memory_space<vmem>>, vector<32x32xbf16>
    %cst_44 = arith.constant dense<0.000000e+00> : vector<16x32xf32>
    %80 = tpu.matmul %78, %79, %cst_44 {dimension_numbers = #tpu.dot_dimension_numbers<[1], [0], [0], [1], [0, 0, 1, 1], [], []>} : vector<16x32xbf16>, vector<32x32xbf16>, vector<16x32xf32> -> vector<16x32xf32>
    %c0_45 = arith.constant 0 : index
    %c0_46 = arith.constant 0 : index
    %81 = vector.load %arg3[%c0_45, %c0_46] : memref<32x32xbf16, #tpu.memory_space<vmem>>, vector<32x32xbf16>
    %cst_47 = arith.constant dense<0.000000e+00> : vector<16x32xf32>
    %82 = tpu.matmul %78, %81, %cst_47 {dimension_numbers = #tpu.dot_dimension_numbers<[1], [0], [0], [1], [0, 0, 1, 1], [], []>} : vector<16x32xbf16>, vector<32x32xbf16>, vector<16x32xf32> -> vector<16x32xf32>
    %c0_48 = arith.constant 0 : index
    %c0_49 = arith.constant 0 : index
    %83 = vector.load %arg4[%c0_48, %c0_49] : memref<32x32xbf16, #tpu.memory_space<vmem>>, vector<32x32xbf16>
    %cst_50 = arith.constant dense<0.000000e+00> : vector<16x32xf32>
    %84 = tpu.matmul %78, %83, %cst_50 {dimension_numbers = #tpu.dot_dimension_numbers<[1], [0], [0], [1], [0, 0, 1, 1], [], []>} : vector<16x32xbf16>, vector<32x32xbf16>, vector<16x32xf32> -> vector<16x32xf32>
    %c0_51 = arith.constant 0 : index
    %c0_52 = arith.constant 0 : index
    %85 = vector.load %arg5[%c0_51, %c0_52] : memref<32x32xbf16, #tpu.memory_space<vmem>>, vector<32x32xbf16>
    %cst_53 = arith.constant dense<0.000000e+00> : vector<16x32xf32>
    %86 = tpu.matmul %53, %85, %cst_53 {dimension_numbers = #tpu.dot_dimension_numbers<[1], [0], [0], [1], [0, 0, 1, 1], [], []>} : vector<16x32xbf16>, vector<32x32xbf16>, vector<16x32xf32> -> vector<16x32xf32>
    %c0_54 = arith.constant 0 : index
    %c0_55 = arith.constant 0 : index
    %87 = vector.load %arg6[%c0_54, %c0_55] : memref<32x32xbf16, #tpu.memory_space<vmem>>, vector<32x32xbf16>
    %cst_56 = arith.constant dense<0.000000e+00> : vector<16x32xf32>
    %88 = tpu.matmul %53, %87, %cst_56 {dimension_numbers = #tpu.dot_dimension_numbers<[1], [0], [0], [1], [0, 0, 1, 1], [], []>} : vector<16x32xbf16>, vector<32x32xbf16>, vector<16x32xf32> -> vector<16x32xf32>
    %c0_57 = arith.constant 0 : index
    %c0_58 = arith.constant 0 : index
    %89 = vector.load %arg7[%c0_57, %c0_58] : memref<32x32xbf16, #tpu.memory_space<vmem>>, vector<32x32xbf16>
    %cst_59 = arith.constant dense<0.000000e+00> : vector<16x32xf32>
    %90 = tpu.matmul %53, %89, %cst_59 {dimension_numbers = #tpu.dot_dimension_numbers<[1], [0], [0], [1], [0, 0, 1, 1], [], []>} : vector<16x32xbf16>, vector<32x32xbf16>, vector<16x32xf32> -> vector<16x32xf32>
    %91 = arith.addf %80, %86 : vector<16x32xf32>
    %92 = vector.broadcast %0 : vector<1x32xf32> to vector<16x32xf32>
    %93 = arith.addf %91, %92 : vector<16x32xf32>
    %94 = arith.negf %93 : vector<16x32xf32>
    %95 = math.exp %94 : vector<16x32xf32>
    %cst_60 = arith.constant 1.000000e+00 : f32
    %96 = vector.broadcast %cst_60 : f32 to vector<16x32xf32>
    %97 = arith.addf %96, %95 : vector<16x32xf32>
    %98 = arith.divf %96, %97 : vector<16x32xf32>
    %99 = arith.addf %82, %88 : vector<16x32xf32>
    %100 = vector.broadcast %1 : vector<1x32xf32> to vector<16x32xf32>
    %101 = arith.addf %99, %100 : vector<16x32xf32>
    %102 = arith.negf %101 : vector<16x32xf32>
    %103 = math.exp %102 : vector<16x32xf32>
    %cst_61 = arith.constant 1.000000e+00 : f32
    %104 = vector.broadcast %cst_61 : f32 to vector<16x32xf32>
    %105 = arith.addf %104, %103 : vector<16x32xf32>
    %106 = arith.divf %104, %105 : vector<16x32xf32>
    %107 = vector.broadcast %2 : vector<1x32xf32> to vector<16x32xf32>
    %108 = arith.addf %84, %107 : vector<16x32xf32>
    %109 = vector.broadcast %3 : vector<1x32xf32> to vector<16x32xf32>
    %110 = arith.addf %90, %109 : vector<16x32xf32>
    %111 = arith.mulf %98, %110 : vector<16x32xf32>
    %112 = arith.addf %108, %111 : vector<16x32xf32>
    %113 = math.tanh %112 : vector<16x32xf32>
    %cst_62 = arith.constant 1.000000e+00 : f32
    %114 = vector.broadcast %cst_62 : f32 to vector<16x32xf32>
    %115 = arith.subf %114, %106 : vector<16x32xf32>
    %116 = arith.mulf %115, %113 : vector<16x32xf32>
    %117 = arith.mulf %106, %52 : vector<16x32xf32>
    %118 = arith.addf %116, %117 : vector<16x32xf32>
    %119 = arith.truncf %118 : vector<16x32xf32> to vector<16x32xbf16>
    %c0_63 = arith.constant 0 : index
    %c0_64 = arith.constant 0 : index
    %120 = vector.load %arg12[%c0_63, %c0_64] : memref<32x16xbf16, #tpu.memory_space<vmem>>, vector<32x16xbf16>
    %cst_65 = arith.constant dense<0.000000e+00> : vector<16x16xf32>
    %121 = tpu.matmul %119, %120, %cst_65 {dimension_numbers = #tpu.dot_dimension_numbers<[1], [0], [0], [1], [0, 0, 1, 1], [], []>} : vector<16x32xbf16>, vector<32x16xbf16>, vector<16x16xf32> -> vector<16x16xf32>
    %122 = vector.broadcast %4 : vector<1x16xf32> to vector<16x16xf32>
    %123 = arith.addf %121, %122 : vector<16x16xf32>
    %cst_66 = arith.constant dense<0xFF800000> : vector<16xf32>
    %124 = vector.multi_reduction <maximumf>, %123, %cst_66 [1] : vector<16x16xf32> to vector<16xf32>
    %125 = vector.shape_cast %124 : vector<16xf32> to vector<16x1xf32>
    %126 = vector.broadcast %125 : vector<16x1xf32> to vector<16x16xf32>
    %127 = arith.cmpf oeq, %123, %126 : vector<16x16xf32>
    %c16_i32_67 = arith.constant 16 : i32
    %128 = vector.broadcast %c16_i32_67 : i32 to vector<16x16xi32>
    %129 = arith.select %127, %5, %128 : vector<16x16xi1>, vector<16x16xi32>
    %cst_68 = arith.constant dense<2147483647> : vector<16xi32>
    %130 = vector.multi_reduction <minsi>, %129, %cst_68 [1] : vector<16x16xi32> to vector<16xi32>
    %131 = vector.shape_cast %130 : vector<16xi32> to vector<16x1xi32>
    %132 = vector.broadcast %c1_i32 : i32 to vector<16x8xi32>
    %133 = arith.cmpi eq, %7, %132 : vector<16x8xi32>
    %134 = vector.shape_cast %131 : vector<16x1xi32> to vector<16x1xi32>
    %135 = vector.broadcast %134 : vector<16x1xi32> to vector<16x8xi32>
    %136 = arith.select %133, %135, %70 : vector<16x8xi1>, vector<16x8xi32>
    %137 = vector.broadcast %131 : vector<16x1xi32> to vector<16x16xi32>
    %138 = arith.cmpi eq, %6, %137 : vector<16x16xi32>
    %139 = arith.extui %138 : vector<16x16xi1> to vector<16x16xi32>
    %140 = arith.sitofp %139 : vector<16x16xi32> to vector<16x16xf32>
    %141 = arith.truncf %140 : vector<16x16xf32> to vector<16x16xbf16>
    %c0_69 = arith.constant 0 : index
    %c0_70 = arith.constant 0 : index
    %142 = vector.load %arg14[%c0_69, %c0_70] : memref<16x32xbf16, #tpu.memory_space<vmem>>, vector<16x32xbf16>
    %cst_71 = arith.constant dense<0.000000e+00> : vector<16x32xf32>
    %143 = tpu.matmul %141, %142, %cst_71 {dimension_numbers = #tpu.dot_dimension_numbers<[1], [0], [0], [1], [0, 0, 1, 1], [], []>} : vector<16x16xbf16>, vector<16x32xbf16>, vector<16x32xf32> -> vector<16x32xf32>
    %144 = arith.truncf %143 : vector<16x32xf32> to vector<16x32xbf16>
    %c2_i32 = arith.constant 2 : i32
    %c0_72 = arith.constant 0 : index
    %c0_73 = arith.constant 0 : index
    %145 = vector.load %arg2[%c0_72, %c0_73] : memref<32x32xbf16, #tpu.memory_space<vmem>>, vector<32x32xbf16>
    %cst_74 = arith.constant dense<0.000000e+00> : vector<16x32xf32>
    %146 = tpu.matmul %144, %145, %cst_74 {dimension_numbers = #tpu.dot_dimension_numbers<[1], [0], [0], [1], [0, 0, 1, 1], [], []>} : vector<16x32xbf16>, vector<32x32xbf16>, vector<16x32xf32> -> vector<16x32xf32>
    %c0_75 = arith.constant 0 : index
    %c0_76 = arith.constant 0 : index
    %147 = vector.load %arg3[%c0_75, %c0_76] : memref<32x32xbf16, #tpu.memory_space<vmem>>, vector<32x32xbf16>
    %cst_77 = arith.constant dense<0.000000e+00> : vector<16x32xf32>
    %148 = tpu.matmul %144, %147, %cst_77 {dimension_numbers = #tpu.dot_dimension_numbers<[1], [0], [0], [1], [0, 0, 1, 1], [], []>} : vector<16x32xbf16>, vector<32x32xbf16>, vector<16x32xf32> -> vector<16x32xf32>
    %c0_78 = arith.constant 0 : index
    %c0_79 = arith.constant 0 : index
    %149 = vector.load %arg4[%c0_78, %c0_79] : memref<32x32xbf16, #tpu.memory_space<vmem>>, vector<32x32xbf16>
    %cst_80 = arith.constant dense<0.000000e+00> : vector<16x32xf32>
    %150 = tpu.matmul %144, %149, %cst_80 {dimension_numbers = #tpu.dot_dimension_numbers<[1], [0], [0], [1], [0, 0, 1, 1], [], []>} : vector<16x32xbf16>, vector<32x32xbf16>, vector<16x32xf32> -> vector<16x32xf32>
    %c0_81 = arith.constant 0 : index
    %c0_82 = arith.constant 0 : index
    %151 = vector.load %arg5[%c0_81, %c0_82] : memref<32x32xbf16, #tpu.memory_space<vmem>>, vector<32x32xbf16>
    %cst_83 = arith.constant dense<0.000000e+00> : vector<16x32xf32>
    %152 = tpu.matmul %119, %151, %cst_83 {dimension_numbers = #tpu.dot_dimension_numbers<[1], [0], [0], [1], [0, 0, 1, 1], [], []>} : vector<16x32xbf16>, vector<32x32xbf16>, vector<16x32xf32> -> vector<16x32xf32>
    %c0_84 = arith.constant 0 : index
    %c0_85 = arith.constant 0 : index
    %153 = vector.load %arg6[%c0_84, %c0_85] : memref<32x32xbf16, #tpu.memory_space<vmem>>, vector<32x32xbf16>
    %cst_86 = arith.constant dense<0.000000e+00> : vector<16x32xf32>
    %154 = tpu.matmul %119, %153, %cst_86 {dimension_numbers = #tpu.dot_dimension_numbers<[1], [0], [0], [1], [0, 0, 1, 1], [], []>} : vector<16x32xbf16>, vector<32x32xbf16>, vector<16x32xf32> -> vector<16x32xf32>
    %c0_87 = arith.constant 0 : index
    %c0_88 = arith.constant 0 : index
    %155 = vector.load %arg7[%c0_87, %c0_88] : memref<32x32xbf16, #tpu.memory_space<vmem>>, vector<32x32xbf16>
    %cst_89 = arith.constant dense<0.000000e+00> : vector<16x32xf32>
    %156 = tpu.matmul %119, %155, %cst_89 {dimension_numbers = #tpu.dot_dimension_numbers<[1], [0], [0], [1], [0, 0, 1, 1], [], []>} : vector<16x32xbf16>, vector<32x32xbf16>, vector<16x32xf32> -> vector<16x32xf32>
    %157 = arith.addf %146, %152 : vector<16x32xf32>
    %158 = vector.broadcast %0 : vector<1x32xf32> to vector<16x32xf32>
    %159 = arith.addf %157, %158 : vector<16x32xf32>
    %160 = arith.negf %159 : vector<16x32xf32>
    %161 = math.exp %160 : vector<16x32xf32>
    %cst_90 = arith.constant 1.000000e+00 : f32
    %162 = vector.broadcast %cst_90 : f32 to vector<16x32xf32>
    %163 = arith.addf %162, %161 : vector<16x32xf32>
    %164 = arith.divf %162, %163 : vector<16x32xf32>
    %165 = arith.addf %148, %154 : vector<16x32xf32>
    %166 = vector.broadcast %1 : vector<1x32xf32> to vector<16x32xf32>
    %167 = arith.addf %165, %166 : vector<16x32xf32>
    %168 = arith.negf %167 : vector<16x32xf32>
    %169 = math.exp %168 : vector<16x32xf32>
    %cst_91 = arith.constant 1.000000e+00 : f32
    %170 = vector.broadcast %cst_91 : f32 to vector<16x32xf32>
    %171 = arith.addf %170, %169 : vector<16x32xf32>
    %172 = arith.divf %170, %171 : vector<16x32xf32>
    %173 = vector.broadcast %2 : vector<1x32xf32> to vector<16x32xf32>
    %174 = arith.addf %150, %173 : vector<16x32xf32>
    %175 = vector.broadcast %3 : vector<1x32xf32> to vector<16x32xf32>
    %176 = arith.addf %156, %175 : vector<16x32xf32>
    %177 = arith.mulf %164, %176 : vector<16x32xf32>
    %178 = arith.addf %174, %177 : vector<16x32xf32>
    %179 = math.tanh %178 : vector<16x32xf32>
    %cst_92 = arith.constant 1.000000e+00 : f32
    %180 = vector.broadcast %cst_92 : f32 to vector<16x32xf32>
    %181 = arith.subf %180, %172 : vector<16x32xf32>
    %182 = arith.mulf %181, %179 : vector<16x32xf32>
    %183 = arith.mulf %172, %118 : vector<16x32xf32>
    %184 = arith.addf %182, %183 : vector<16x32xf32>
    %185 = arith.truncf %184 : vector<16x32xf32> to vector<16x32xbf16>
    %c0_93 = arith.constant 0 : index
    %c0_94 = arith.constant 0 : index
    %186 = vector.load %arg12[%c0_93, %c0_94] : memref<32x16xbf16, #tpu.memory_space<vmem>>, vector<32x16xbf16>
    %cst_95 = arith.constant dense<0.000000e+00> : vector<16x16xf32>
    %187 = tpu.matmul %185, %186, %cst_95 {dimension_numbers = #tpu.dot_dimension_numbers<[1], [0], [0], [1], [0, 0, 1, 1], [], []>} : vector<16x32xbf16>, vector<32x16xbf16>, vector<16x16xf32> -> vector<16x16xf32>
    %188 = vector.broadcast %4 : vector<1x16xf32> to vector<16x16xf32>
    %189 = arith.addf %187, %188 : vector<16x16xf32>
    %cst_96 = arith.constant dense<0xFF800000> : vector<16xf32>
    %190 = vector.multi_reduction <maximumf>, %189, %cst_96 [1] : vector<16x16xf32> to vector<16xf32>
    %191 = vector.shape_cast %190 : vector<16xf32> to vector<16x1xf32>
    %192 = vector.broadcast %191 : vector<16x1xf32> to vector<16x16xf32>
    %193 = arith.cmpf oeq, %189, %192 : vector<16x16xf32>
    %c16_i32_97 = arith.constant 16 : i32
    %194 = vector.broadcast %c16_i32_97 : i32 to vector<16x16xi32>
    %195 = arith.select %193, %5, %194 : vector<16x16xi1>, vector<16x16xi32>
    %cst_98 = arith.constant dense<2147483647> : vector<16xi32>
    %196 = vector.multi_reduction <minsi>, %195, %cst_98 [1] : vector<16x16xi32> to vector<16xi32>
    %197 = vector.shape_cast %196 : vector<16xi32> to vector<16x1xi32>
    %198 = vector.broadcast %c2_i32 : i32 to vector<16x8xi32>
    %199 = arith.cmpi eq, %7, %198 : vector<16x8xi32>
    %200 = vector.shape_cast %197 : vector<16x1xi32> to vector<16x1xi32>
    %201 = vector.broadcast %200 : vector<16x1xi32> to vector<16x8xi32>
    %202 = arith.select %199, %201, %136 : vector<16x8xi1>, vector<16x8xi32>
    %203 = vector.broadcast %197 : vector<16x1xi32> to vector<16x16xi32>
    %204 = arith.cmpi eq, %6, %203 : vector<16x16xi32>
    %205 = arith.extui %204 : vector<16x16xi1> to vector<16x16xi32>
    %206 = arith.sitofp %205 : vector<16x16xi32> to vector<16x16xf32>
    %207 = arith.truncf %206 : vector<16x16xf32> to vector<16x16xbf16>
    %c0_99 = arith.constant 0 : index
    %c0_100 = arith.constant 0 : index
    %208 = vector.load %arg14[%c0_99, %c0_100] : memref<16x32xbf16, #tpu.memory_space<vmem>>, vector<16x32xbf16>
    %cst_101 = arith.constant dense<0.000000e+00> : vector<16x32xf32>
    %209 = tpu.matmul %207, %208, %cst_101 {dimension_numbers = #tpu.dot_dimension_numbers<[1], [0], [0], [1], [0, 0, 1, 1], [], []>} : vector<16x16xbf16>, vector<16x32xbf16>, vector<16x32xf32> -> vector<16x32xf32>
    %210 = arith.truncf %209 : vector<16x32xf32> to vector<16x32xbf16>
    %c3_i32 = arith.constant 3 : i32
    %c0_102 = arith.constant 0 : index
    %c0_103 = arith.constant 0 : index
    %211 = vector.load %arg2[%c0_102, %c0_103] : memref<32x32xbf16, #tpu.memory_space<vmem>>, vector<32x32xbf16>
    %cst_104 = arith.constant dense<0.000000e+00> : vector<16x32xf32>
    %212 = tpu.matmul %210, %211, %cst_104 {dimension_numbers = #tpu.dot_dimension_numbers<[1], [0], [0], [1], [0, 0, 1, 1], [], []>} : vector<16x32xbf16>, vector<32x32xbf16>, vector<16x32xf32> -> vector<16x32xf32>
    %c0_105 = arith.constant 0 : index
    %c0_106 = arith.constant 0 : index
    %213 = vector.load %arg3[%c0_105, %c0_106] : memref<32x32xbf16, #tpu.memory_space<vmem>>, vector<32x32xbf16>
    %cst_107 = arith.constant dense<0.000000e+00> : vector<16x32xf32>
    %214 = tpu.matmul %210, %213, %cst_107 {dimension_numbers = #tpu.dot_dimension_numbers<[1], [0], [0], [1], [0, 0, 1, 1], [], []>} : vector<16x32xbf16>, vector<32x32xbf16>, vector<16x32xf32> -> vector<16x32xf32>
    %c0_108 = arith.constant 0 : index
    %c0_109 = arith.constant 0 : index
    %215 = vector.load %arg4[%c0_108, %c0_109] : memref<32x32xbf16, #tpu.memory_space<vmem>>, vector<32x32xbf16>
    %cst_110 = arith.constant dense<0.000000e+00> : vector<16x32xf32>
    %216 = tpu.matmul %210, %215, %cst_110 {dimension_numbers = #tpu.dot_dimension_numbers<[1], [0], [0], [1], [0, 0, 1, 1], [], []>} : vector<16x32xbf16>, vector<32x32xbf16>, vector<16x32xf32> -> vector<16x32xf32>
    %c0_111 = arith.constant 0 : index
    %c0_112 = arith.constant 0 : index
    %217 = vector.load %arg5[%c0_111, %c0_112] : memref<32x32xbf16, #tpu.memory_space<vmem>>, vector<32x32xbf16>
    %cst_113 = arith.constant dense<0.000000e+00> : vector<16x32xf32>
    %218 = tpu.matmul %185, %217, %cst_113 {dimension_numbers = #tpu.dot_dimension_numbers<[1], [0], [0], [1], [0, 0, 1, 1], [], []>} : vector<16x32xbf16>, vector<32x32xbf16>, vector<16x32xf32> -> vector<16x32xf32>
    %c0_114 = arith.constant 0 : index
    %c0_115 = arith.constant 0 : index
    %219 = vector.load %arg6[%c0_114, %c0_115] : memref<32x32xbf16, #tpu.memory_space<vmem>>, vector<32x32xbf16>
    %cst_116 = arith.constant dense<0.000000e+00> : vector<16x32xf32>
    %220 = tpu.matmul %185, %219, %cst_116 {dimension_numbers = #tpu.dot_dimension_numbers<[1], [0], [0], [1], [0, 0, 1, 1], [], []>} : vector<16x32xbf16>, vector<32x32xbf16>, vector<16x32xf32> -> vector<16x32xf32>
    %c0_117 = arith.constant 0 : index
    %c0_118 = arith.constant 0 : index
    %221 = vector.load %arg7[%c0_117, %c0_118] : memref<32x32xbf16, #tpu.memory_space<vmem>>, vector<32x32xbf16>
    %cst_119 = arith.constant dense<0.000000e+00> : vector<16x32xf32>
    %222 = tpu.matmul %185, %221, %cst_119 {dimension_numbers = #tpu.dot_dimension_numbers<[1], [0], [0], [1], [0, 0, 1, 1], [], []>} : vector<16x32xbf16>, vector<32x32xbf16>, vector<16x32xf32> -> vector<16x32xf32>
    %223 = arith.addf %212, %218 : vector<16x32xf32>
    %224 = vector.broadcast %0 : vector<1x32xf32> to vector<16x32xf32>
    %225 = arith.addf %223, %224 : vector<16x32xf32>
    %226 = arith.negf %225 : vector<16x32xf32>
    %227 = math.exp %226 : vector<16x32xf32>
    %cst_120 = arith.constant 1.000000e+00 : f32
    %228 = vector.broadcast %cst_120 : f32 to vector<16x32xf32>
    %229 = arith.addf %228, %227 : vector<16x32xf32>
    %230 = arith.divf %228, %229 : vector<16x32xf32>
    %231 = arith.addf %214, %220 : vector<16x32xf32>
    %232 = vector.broadcast %1 : vector<1x32xf32> to vector<16x32xf32>
    %233 = arith.addf %231, %232 : vector<16x32xf32>
    %234 = arith.negf %233 : vector<16x32xf32>
    %235 = math.exp %234 : vector<16x32xf32>
    %cst_121 = arith.constant 1.000000e+00 : f32
    %236 = vector.broadcast %cst_121 : f32 to vector<16x32xf32>
    %237 = arith.addf %236, %235 : vector<16x32xf32>
    %238 = arith.divf %236, %237 : vector<16x32xf32>
    %239 = vector.broadcast %2 : vector<1x32xf32> to vector<16x32xf32>
    %240 = arith.addf %216, %239 : vector<16x32xf32>
    %241 = vector.broadcast %3 : vector<1x32xf32> to vector<16x32xf32>
    %242 = arith.addf %222, %241 : vector<16x32xf32>
    %243 = arith.mulf %230, %242 : vector<16x32xf32>
    %244 = arith.addf %240, %243 : vector<16x32xf32>
    %245 = math.tanh %244 : vector<16x32xf32>
    %cst_122 = arith.constant 1.000000e+00 : f32
    %246 = vector.broadcast %cst_122 : f32 to vector<16x32xf32>
    %247 = arith.subf %246, %238 : vector<16x32xf32>
    %248 = arith.mulf %247, %245 : vector<16x32xf32>
    %249 = arith.mulf %238, %184 : vector<16x32xf32>
    %250 = arith.addf %248, %249 : vector<16x32xf32>
    %251 = arith.truncf %250 : vector<16x32xf32> to vector<16x32xbf16>
    %c0_123 = arith.constant 0 : index
    %c0_124 = arith.constant 0 : index
    %252 = vector.load %arg12[%c0_123, %c0_124] : memref<32x16xbf16, #tpu.memory_space<vmem>>, vector<32x16xbf16>
    %cst_125 = arith.constant dense<0.000000e+00> : vector<16x16xf32>
    %253 = tpu.matmul %251, %252, %cst_125 {dimension_numbers = #tpu.dot_dimension_numbers<[1], [0], [0], [1], [0, 0, 1, 1], [], []>} : vector<16x32xbf16>, vector<32x16xbf16>, vector<16x16xf32> -> vector<16x16xf32>
    %254 = vector.broadcast %4 : vector<1x16xf32> to vector<16x16xf32>
    %255 = arith.addf %253, %254 : vector<16x16xf32>
    %cst_126 = arith.constant dense<0xFF800000> : vector<16xf32>
    %256 = vector.multi_reduction <maximumf>, %255, %cst_126 [1] : vector<16x16xf32> to vector<16xf32>
    %257 = vector.shape_cast %256 : vector<16xf32> to vector<16x1xf32>
    %258 = vector.broadcast %257 : vector<16x1xf32> to vector<16x16xf32>
    %259 = arith.cmpf oeq, %255, %258 : vector<16x16xf32>
    %c16_i32_127 = arith.constant 16 : i32
    %260 = vector.broadcast %c16_i32_127 : i32 to vector<16x16xi32>
    %261 = arith.select %259, %5, %260 : vector<16x16xi1>, vector<16x16xi32>
    %cst_128 = arith.constant dense<2147483647> : vector<16xi32>
    %262 = vector.multi_reduction <minsi>, %261, %cst_128 [1] : vector<16x16xi32> to vector<16xi32>
    %263 = vector.shape_cast %262 : vector<16xi32> to vector<16x1xi32>
    %264 = vector.broadcast %c3_i32 : i32 to vector<16x8xi32>
    %265 = arith.cmpi eq, %7, %264 : vector<16x8xi32>
    %266 = vector.shape_cast %263 : vector<16x1xi32> to vector<16x1xi32>
    %267 = vector.broadcast %266 : vector<16x1xi32> to vector<16x8xi32>
    %268 = arith.select %265, %267, %202 : vector<16x8xi1>, vector<16x8xi32>
    %269 = vector.broadcast %263 : vector<16x1xi32> to vector<16x16xi32>
    %270 = arith.cmpi eq, %6, %269 : vector<16x16xi32>
    %271 = arith.extui %270 : vector<16x16xi1> to vector<16x16xi32>
    %272 = arith.sitofp %271 : vector<16x16xi32> to vector<16x16xf32>
    %273 = arith.truncf %272 : vector<16x16xf32> to vector<16x16xbf16>
    %c0_129 = arith.constant 0 : index
    %c0_130 = arith.constant 0 : index
    %274 = vector.load %arg14[%c0_129, %c0_130] : memref<16x32xbf16, #tpu.memory_space<vmem>>, vector<16x32xbf16>
    %cst_131 = arith.constant dense<0.000000e+00> : vector<16x32xf32>
    %275 = tpu.matmul %273, %274, %cst_131 {dimension_numbers = #tpu.dot_dimension_numbers<[1], [0], [0], [1], [0, 0, 1, 1], [], []>} : vector<16x16xbf16>, vector<16x32xbf16>, vector<16x32xf32> -> vector<16x32xf32>
    %276 = arith.truncf %275 : vector<16x32xf32> to vector<16x32xbf16>
    %c4_i32 = arith.constant 4 : i32
    %c0_132 = arith.constant 0 : index
    %c0_133 = arith.constant 0 : index
    %277 = vector.load %arg2[%c0_132, %c0_133] : memref<32x32xbf16, #tpu.memory_space<vmem>>, vector<32x32xbf16>
    %cst_134 = arith.constant dense<0.000000e+00> : vector<16x32xf32>
    %278 = tpu.matmul %276, %277, %cst_134 {dimension_numbers = #tpu.dot_dimension_numbers<[1], [0], [0], [1], [0, 0, 1, 1], [], []>} : vector<16x32xbf16>, vector<32x32xbf16>, vector<16x32xf32> -> vector<16x32xf32>
    %c0_135 = arith.constant 0 : index
    %c0_136 = arith.constant 0 : index
    %279 = vector.load %arg3[%c0_135, %c0_136] : memref<32x32xbf16, #tpu.memory_space<vmem>>, vector<32x32xbf16>
    %cst_137 = arith.constant dense<0.000000e+00> : vector<16x32xf32>
    %280 = tpu.matmul %276, %279, %cst_137 {dimension_numbers = #tpu.dot_dimension_numbers<[1], [0], [0], [1], [0, 0, 1, 1], [], []>} : vector<16x32xbf16>, vector<32x32xbf16>, vector<16x32xf32> -> vector<16x32xf32>
    %c0_138 = arith.constant 0 : index
    %c0_139 = arith.constant 0 : index
    %281 = vector.load %arg4[%c0_138, %c0_139] : memref<32x32xbf16, #tpu.memory_space<vmem>>, vector<32x32xbf16>
    %cst_140 = arith.constant dense<0.000000e+00> : vector<16x32xf32>
    %282 = tpu.matmul %276, %281, %cst_140 {dimension_numbers = #tpu.dot_dimension_numbers<[1], [0], [0], [1], [0, 0, 1, 1], [], []>} : vector<16x32xbf16>, vector<32x32xbf16>, vector<16x32xf32> -> vector<16x32xf32>
    %c0_141 = arith.constant 0 : index
    %c0_142 = arith.constant 0 : index
    %283 = vector.load %arg5[%c0_141, %c0_142] : memref<32x32xbf16, #tpu.memory_space<vmem>>, vector<32x32xbf16>
    %cst_143 = arith.constant dense<0.000000e+00> : vector<16x32xf32>
    %284 = tpu.matmul %251, %283, %cst_143 {dimension_numbers = #tpu.dot_dimension_numbers<[1], [0], [0], [1], [0, 0, 1, 1], [], []>} : vector<16x32xbf16>, vector<32x32xbf16>, vector<16x32xf32> -> vector<16x32xf32>
    %c0_144 = arith.constant 0 : index
    %c0_145 = arith.constant 0 : index
    %285 = vector.load %arg6[%c0_144, %c0_145] : memref<32x32xbf16, #tpu.memory_space<vmem>>, vector<32x32xbf16>
    %cst_146 = arith.constant dense<0.000000e+00> : vector<16x32xf32>
    %286 = tpu.matmul %251, %285, %cst_146 {dimension_numbers = #tpu.dot_dimension_numbers<[1], [0], [0], [1], [0, 0, 1, 1], [], []>} : vector<16x32xbf16>, vector<32x32xbf16>, vector<16x32xf32> -> vector<16x32xf32>
    %c0_147 = arith.constant 0 : index
    %c0_148 = arith.constant 0 : index
    %287 = vector.load %arg7[%c0_147, %c0_148] : memref<32x32xbf16, #tpu.memory_space<vmem>>, vector<32x32xbf16>
    %cst_149 = arith.constant dense<0.000000e+00> : vector<16x32xf32>
    %288 = tpu.matmul %251, %287, %cst_149 {dimension_numbers = #tpu.dot_dimension_numbers<[1], [0], [0], [1], [0, 0, 1, 1], [], []>} : vector<16x32xbf16>, vector<32x32xbf16>, vector<16x32xf32> -> vector<16x32xf32>
    %289 = arith.addf %278, %284 : vector<16x32xf32>
    %290 = vector.broadcast %0 : vector<1x32xf32> to vector<16x32xf32>
    %291 = arith.addf %289, %290 : vector<16x32xf32>
    %292 = arith.negf %291 : vector<16x32xf32>
    %293 = math.exp %292 : vector<16x32xf32>
    %cst_150 = arith.constant 1.000000e+00 : f32
    %294 = vector.broadcast %cst_150 : f32 to vector<16x32xf32>
    %295 = arith.addf %294, %293 : vector<16x32xf32>
    %296 = arith.divf %294, %295 : vector<16x32xf32>
    %297 = arith.addf %280, %286 : vector<16x32xf32>
    %298 = vector.broadcast %1 : vector<1x32xf32> to vector<16x32xf32>
    %299 = arith.addf %297, %298 : vector<16x32xf32>
    %300 = arith.negf %299 : vector<16x32xf32>
    %301 = math.exp %300 : vector<16x32xf32>
    %cst_151 = arith.constant 1.000000e+00 : f32
    %302 = vector.broadcast %cst_151 : f32 to vector<16x32xf32>
    %303 = arith.addf %302, %301 : vector<16x32xf32>
    %304 = arith.divf %302, %303 : vector<16x32xf32>
    %305 = vector.broadcast %2 : vector<1x32xf32> to vector<16x32xf32>
    %306 = arith.addf %282, %305 : vector<16x32xf32>
    %307 = vector.broadcast %3 : vector<1x32xf32> to vector<16x32xf32>
    %308 = arith.addf %288, %307 : vector<16x32xf32>
    %309 = arith.mulf %296, %308 : vector<16x32xf32>
    %310 = arith.addf %306, %309 : vector<16x32xf32>
    %311 = math.tanh %310 : vector<16x32xf32>
    %cst_152 = arith.constant 1.000000e+00 : f32
    %312 = vector.broadcast %cst_152 : f32 to vector<16x32xf32>
    %313 = arith.subf %312, %304 : vector<16x32xf32>
    %314 = arith.mulf %313, %311 : vector<16x32xf32>
    %315 = arith.mulf %304, %250 : vector<16x32xf32>
    %316 = arith.addf %314, %315 : vector<16x32xf32>
    %317 = arith.truncf %316 : vector<16x32xf32> to vector<16x32xbf16>
    %c0_153 = arith.constant 0 : index
    %c0_154 = arith.constant 0 : index
    %318 = vector.load %arg12[%c0_153, %c0_154] : memref<32x16xbf16, #tpu.memory_space<vmem>>, vector<32x16xbf16>
    %cst_155 = arith.constant dense<0.000000e+00> : vector<16x16xf32>
    %319 = tpu.matmul %317, %318, %cst_155 {dimension_numbers = #tpu.dot_dimension_numbers<[1], [0], [0], [1], [0, 0, 1, 1], [], []>} : vector<16x32xbf16>, vector<32x16xbf16>, vector<16x16xf32> -> vector<16x16xf32>
    %320 = vector.broadcast %4 : vector<1x16xf32> to vector<16x16xf32>
    %321 = arith.addf %319, %320 : vector<16x16xf32>
    %cst_156 = arith.constant dense<0xFF800000> : vector<16xf32>
    %322 = vector.multi_reduction <maximumf>, %321, %cst_156 [1] : vector<16x16xf32> to vector<16xf32>
    %323 = vector.shape_cast %322 : vector<16xf32> to vector<16x1xf32>
    %324 = vector.broadcast %323 : vector<16x1xf32> to vector<16x16xf32>
    %325 = arith.cmpf oeq, %321, %324 : vector<16x16xf32>
    %c16_i32_157 = arith.constant 16 : i32
    %326 = vector.broadcast %c16_i32_157 : i32 to vector<16x16xi32>
    %327 = arith.select %325, %5, %326 : vector<16x16xi1>, vector<16x16xi32>
    %cst_158 = arith.constant dense<2147483647> : vector<16xi32>
    %328 = vector.multi_reduction <minsi>, %327, %cst_158 [1] : vector<16x16xi32> to vector<16xi32>
    %329 = vector.shape_cast %328 : vector<16xi32> to vector<16x1xi32>
    %330 = vector.broadcast %c4_i32 : i32 to vector<16x8xi32>
    %331 = arith.cmpi eq, %7, %330 : vector<16x8xi32>
    %332 = vector.shape_cast %329 : vector<16x1xi32> to vector<16x1xi32>
    %333 = vector.broadcast %332 : vector<16x1xi32> to vector<16x8xi32>
    %334 = arith.select %331, %333, %268 : vector<16x8xi1>, vector<16x8xi32>
    %335 = vector.broadcast %329 : vector<16x1xi32> to vector<16x16xi32>
    %336 = arith.cmpi eq, %6, %335 : vector<16x16xi32>
    %337 = arith.extui %336 : vector<16x16xi1> to vector<16x16xi32>
    %338 = arith.sitofp %337 : vector<16x16xi32> to vector<16x16xf32>
    %339 = arith.truncf %338 : vector<16x16xf32> to vector<16x16xbf16>
    %c0_159 = arith.constant 0 : index
    %c0_160 = arith.constant 0 : index
    %340 = vector.load %arg14[%c0_159, %c0_160] : memref<16x32xbf16, #tpu.memory_space<vmem>>, vector<16x32xbf16>
    %cst_161 = arith.constant dense<0.000000e+00> : vector<16x32xf32>
    %341 = tpu.matmul %339, %340, %cst_161 {dimension_numbers = #tpu.dot_dimension_numbers<[1], [0], [0], [1], [0, 0, 1, 1], [], []>} : vector<16x16xbf16>, vector<16x32xbf16>, vector<16x32xf32> -> vector<16x32xf32>
    %342 = arith.truncf %341 : vector<16x32xf32> to vector<16x32xbf16>
    %c5_i32 = arith.constant 5 : i32
    %c0_162 = arith.constant 0 : index
    %c0_163 = arith.constant 0 : index
    %343 = vector.load %arg2[%c0_162, %c0_163] : memref<32x32xbf16, #tpu.memory_space<vmem>>, vector<32x32xbf16>
    %cst_164 = arith.constant dense<0.000000e+00> : vector<16x32xf32>
    %344 = tpu.matmul %342, %343, %cst_164 {dimension_numbers = #tpu.dot_dimension_numbers<[1], [0], [0], [1], [0, 0, 1, 1], [], []>} : vector<16x32xbf16>, vector<32x32xbf16>, vector<16x32xf32> -> vector<16x32xf32>
    %c0_165 = arith.constant 0 : index
    %c0_166 = arith.constant 0 : index
    %345 = vector.load %arg3[%c0_165, %c0_166] : memref<32x32xbf16, #tpu.memory_space<vmem>>, vector<32x32xbf16>
    %cst_167 = arith.constant dense<0.000000e+00> : vector<16x32xf32>
    %346 = tpu.matmul %342, %345, %cst_167 {dimension_numbers = #tpu.dot_dimension_numbers<[1], [0], [0], [1], [0, 0, 1, 1], [], []>} : vector<16x32xbf16>, vector<32x32xbf16>, vector<16x32xf32> -> vector<16x32xf32>
    %c0_168 = arith.constant 0 : index
    %c0_169 = arith.constant 0 : index
    %347 = vector.load %arg4[%c0_168, %c0_169] : memref<32x32xbf16, #tpu.memory_space<vmem>>, vector<32x32xbf16>
    %cst_170 = arith.constant dense<0.000000e+00> : vector<16x32xf32>
    %348 = tpu.matmul %342, %347, %cst_170 {dimension_numbers = #tpu.dot_dimension_numbers<[1], [0], [0], [1], [0, 0, 1, 1], [], []>} : vector<16x32xbf16>, vector<32x32xbf16>, vector<16x32xf32> -> vector<16x32xf32>
    %c0_171 = arith.constant 0 : index
    %c0_172 = arith.constant 0 : index
    %349 = vector.load %arg5[%c0_171, %c0_172] : memref<32x32xbf16, #tpu.memory_space<vmem>>, vector<32x32xbf16>
    %cst_173 = arith.constant dense<0.000000e+00> : vector<16x32xf32>
    %350 = tpu.matmul %317, %349, %cst_173 {dimension_numbers = #tpu.dot_dimension_numbers<[1], [0], [0], [1], [0, 0, 1, 1], [], []>} : vector<16x32xbf16>, vector<32x32xbf16>, vector<16x32xf32> -> vector<16x32xf32>
    %c0_174 = arith.constant 0 : index
    %c0_175 = arith.constant 0 : index
    %351 = vector.load %arg6[%c0_174, %c0_175] : memref<32x32xbf16, #tpu.memory_space<vmem>>, vector<32x32xbf16>
    %cst_176 = arith.constant dense<0.000000e+00> : vector<16x32xf32>
    %352 = tpu.matmul %317, %351, %cst_176 {dimension_numbers = #tpu.dot_dimension_numbers<[1], [0], [0], [1], [0, 0, 1, 1], [], []>} : vector<16x32xbf16>, vector<32x32xbf16>, vector<16x32xf32> -> vector<16x32xf32>
    %c0_177 = arith.constant 0 : index
    %c0_178 = arith.constant 0 : index
    %353 = vector.load %arg7[%c0_177, %c0_178] : memref<32x32xbf16, #tpu.memory_space<vmem>>, vector<32x32xbf16>
    %cst_179 = arith.constant dense<0.000000e+00> : vector<16x32xf32>
    %354 = tpu.matmul %317, %353, %cst_179 {dimension_numbers = #tpu.dot_dimension_numbers<[1], [0], [0], [1], [0, 0, 1, 1], [], []>} : vector<16x32xbf16>, vector<32x32xbf16>, vector<16x32xf32> -> vector<16x32xf32>
    %355 = arith.addf %344, %350 : vector<16x32xf32>
    %356 = vector.broadcast %0 : vector<1x32xf32> to vector<16x32xf32>
    %357 = arith.addf %355, %356 : vector<16x32xf32>
    %358 = arith.negf %357 : vector<16x32xf32>
    %359 = math.exp %358 : vector<16x32xf32>
    %cst_180 = arith.constant 1.000000e+00 : f32
    %360 = vector.broadcast %cst_180 : f32 to vector<16x32xf32>
    %361 = arith.addf %360, %359 : vector<16x32xf32>
    %362 = arith.divf %360, %361 : vector<16x32xf32>
    %363 = arith.addf %346, %352 : vector<16x32xf32>
    %364 = vector.broadcast %1 : vector<1x32xf32> to vector<16x32xf32>
    %365 = arith.addf %363, %364 : vector<16x32xf32>
    %366 = arith.negf %365 : vector<16x32xf32>
    %367 = math.exp %366 : vector<16x32xf32>
    %cst_181 = arith.constant 1.000000e+00 : f32
    %368 = vector.broadcast %cst_181 : f32 to vector<16x32xf32>
    %369 = arith.addf %368, %367 : vector<16x32xf32>
    %370 = arith.divf %368, %369 : vector<16x32xf32>
    %371 = vector.broadcast %2 : vector<1x32xf32> to vector<16x32xf32>
    %372 = arith.addf %348, %371 : vector<16x32xf32>
    %373 = vector.broadcast %3 : vector<1x32xf32> to vector<16x32xf32>
    %374 = arith.addf %354, %373 : vector<16x32xf32>
    %375 = arith.mulf %362, %374 : vector<16x32xf32>
    %376 = arith.addf %372, %375 : vector<16x32xf32>
    %377 = math.tanh %376 : vector<16x32xf32>
    %cst_182 = arith.constant 1.000000e+00 : f32
    %378 = vector.broadcast %cst_182 : f32 to vector<16x32xf32>
    %379 = arith.subf %378, %370 : vector<16x32xf32>
    %380 = arith.mulf %379, %377 : vector<16x32xf32>
    %381 = arith.mulf %370, %316 : vector<16x32xf32>
    %382 = arith.addf %380, %381 : vector<16x32xf32>
    %383 = arith.truncf %382 : vector<16x32xf32> to vector<16x32xbf16>
    %c0_183 = arith.constant 0 : index
    %c0_184 = arith.constant 0 : index
    %384 = vector.load %arg12[%c0_183, %c0_184] : memref<32x16xbf16, #tpu.memory_space<vmem>>, vector<32x16xbf16>
    %cst_185 = arith.constant dense<0.000000e+00> : vector<16x16xf32>
    %385 = tpu.matmul %383, %384, %cst_185 {dimension_numbers = #tpu.dot_dimension_numbers<[1], [0], [0], [1], [0, 0, 1, 1], [], []>} : vector<16x32xbf16>, vector<32x16xbf16>, vector<16x16xf32> -> vector<16x16xf32>
    %386 = vector.broadcast %4 : vector<1x16xf32> to vector<16x16xf32>
    %387 = arith.addf %385, %386 : vector<16x16xf32>
    %cst_186 = arith.constant dense<0xFF800000> : vector<16xf32>
    %388 = vector.multi_reduction <maximumf>, %387, %cst_186 [1] : vector<16x16xf32> to vector<16xf32>
    %389 = vector.shape_cast %388 : vector<16xf32> to vector<16x1xf32>
    %390 = vector.broadcast %389 : vector<16x1xf32> to vector<16x16xf32>
    %391 = arith.cmpf oeq, %387, %390 : vector<16x16xf32>
    %c16_i32_187 = arith.constant 16 : i32
    %392 = vector.broadcast %c16_i32_187 : i32 to vector<16x16xi32>
    %393 = arith.select %391, %5, %392 : vector<16x16xi1>, vector<16x16xi32>
    %cst_188 = arith.constant dense<2147483647> : vector<16xi32>
    %394 = vector.multi_reduction <minsi>, %393, %cst_188 [1] : vector<16x16xi32> to vector<16xi32>
    %395 = vector.shape_cast %394 : vector<16xi32> to vector<16x1xi32>
    %396 = vector.broadcast %c5_i32 : i32 to vector<16x8xi32>
    %397 = arith.cmpi eq, %7, %396 : vector<16x8xi32>
    %398 = vector.shape_cast %395 : vector<16x1xi32> to vector<16x1xi32>
    %399 = vector.broadcast %398 : vector<16x1xi32> to vector<16x8xi32>
    %400 = arith.select %397, %399, %334 : vector<16x8xi1>, vector<16x8xi32>
    %401 = vector.broadcast %395 : vector<16x1xi32> to vector<16x16xi32>
    %402 = arith.cmpi eq, %6, %401 : vector<16x16xi32>
    %403 = arith.extui %402 : vector<16x16xi1> to vector<16x16xi32>
    %404 = arith.sitofp %403 : vector<16x16xi32> to vector<16x16xf32>
    %405 = arith.truncf %404 : vector<16x16xf32> to vector<16x16xbf16>
    %c0_189 = arith.constant 0 : index
    %c0_190 = arith.constant 0 : index
    %406 = vector.load %arg14[%c0_189, %c0_190] : memref<16x32xbf16, #tpu.memory_space<vmem>>, vector<16x32xbf16>
    %cst_191 = arith.constant dense<0.000000e+00> : vector<16x32xf32>
    %407 = tpu.matmul %405, %406, %cst_191 {dimension_numbers = #tpu.dot_dimension_numbers<[1], [0], [0], [1], [0, 0, 1, 1], [], []>} : vector<16x16xbf16>, vector<16x32xbf16>, vector<16x32xf32> -> vector<16x32xf32>
    %408 = arith.truncf %407 : vector<16x32xf32> to vector<16x32xbf16>
    %c6_i32 = arith.constant 6 : i32
    %c0_192 = arith.constant 0 : index
    %c0_193 = arith.constant 0 : index
    %409 = vector.load %arg2[%c0_192, %c0_193] : memref<32x32xbf16, #tpu.memory_space<vmem>>, vector<32x32xbf16>
    %cst_194 = arith.constant dense<0.000000e+00> : vector<16x32xf32>
    %410 = tpu.matmul %408, %409, %cst_194 {dimension_numbers = #tpu.dot_dimension_numbers<[1], [0], [0], [1], [0, 0, 1, 1], [], []>} : vector<16x32xbf16>, vector<32x32xbf16>, vector<16x32xf32> -> vector<16x32xf32>
    %c0_195 = arith.constant 0 : index
    %c0_196 = arith.constant 0 : index
    %411 = vector.load %arg3[%c0_195, %c0_196] : memref<32x32xbf16, #tpu.memory_space<vmem>>, vector<32x32xbf16>
    %cst_197 = arith.constant dense<0.000000e+00> : vector<16x32xf32>
    %412 = tpu.matmul %408, %411, %cst_197 {dimension_numbers = #tpu.dot_dimension_numbers<[1], [0], [0], [1], [0, 0, 1, 1], [], []>} : vector<16x32xbf16>, vector<32x32xbf16>, vector<16x32xf32> -> vector<16x32xf32>
    %c0_198 = arith.constant 0 : index
    %c0_199 = arith.constant 0 : index
    %413 = vector.load %arg4[%c0_198, %c0_199] : memref<32x32xbf16, #tpu.memory_space<vmem>>, vector<32x32xbf16>
    %cst_200 = arith.constant dense<0.000000e+00> : vector<16x32xf32>
    %414 = tpu.matmul %408, %413, %cst_200 {dimension_numbers = #tpu.dot_dimension_numbers<[1], [0], [0], [1], [0, 0, 1, 1], [], []>} : vector<16x32xbf16>, vector<32x32xbf16>, vector<16x32xf32> -> vector<16x32xf32>
    %c0_201 = arith.constant 0 : index
    %c0_202 = arith.constant 0 : index
    %415 = vector.load %arg5[%c0_201, %c0_202] : memref<32x32xbf16, #tpu.memory_space<vmem>>, vector<32x32xbf16>
    %cst_203 = arith.constant dense<0.000000e+00> : vector<16x32xf32>
    %416 = tpu.matmul %383, %415, %cst_203 {dimension_numbers = #tpu.dot_dimension_numbers<[1], [0], [0], [1], [0, 0, 1, 1], [], []>} : vector<16x32xbf16>, vector<32x32xbf16>, vector<16x32xf32> -> vector<16x32xf32>
    %c0_204 = arith.constant 0 : index
    %c0_205 = arith.constant 0 : index
    %417 = vector.load %arg6[%c0_204, %c0_205] : memref<32x32xbf16, #tpu.memory_space<vmem>>, vector<32x32xbf16>
    %cst_206 = arith.constant dense<0.000000e+00> : vector<16x32xf32>
    %418 = tpu.matmul %383, %417, %cst_206 {dimension_numbers = #tpu.dot_dimension_numbers<[1], [0], [0], [1], [0, 0, 1, 1], [], []>} : vector<16x32xbf16>, vector<32x32xbf16>, vector<16x32xf32> -> vector<16x32xf32>
    %c0_207 = arith.constant 0 : index
    %c0_208 = arith.constant 0 : index
    %419 = vector.load %arg7[%c0_207, %c0_208] : memref<32x32xbf16, #tpu.memory_space<vmem>>, vector<32x32xbf16>
    %cst_209 = arith.constant dense<0.000000e+00> : vector<16x32xf32>
    %420 = tpu.matmul %383, %419, %cst_209 {dimension_numbers = #tpu.dot_dimension_numbers<[1], [0], [0], [1], [0, 0, 1, 1], [], []>} : vector<16x32xbf16>, vector<32x32xbf16>, vector<16x32xf32> -> vector<16x32xf32>
    %421 = arith.addf %410, %416 : vector<16x32xf32>
    %422 = vector.broadcast %0 : vector<1x32xf32> to vector<16x32xf32>
    %423 = arith.addf %421, %422 : vector<16x32xf32>
    %424 = arith.negf %423 : vector<16x32xf32>
    %425 = math.exp %424 : vector<16x32xf32>
    %cst_210 = arith.constant 1.000000e+00 : f32
    %426 = vector.broadcast %cst_210 : f32 to vector<16x32xf32>
    %427 = arith.addf %426, %425 : vector<16x32xf32>
    %428 = arith.divf %426, %427 : vector<16x32xf32>
    %429 = arith.addf %412, %418 : vector<16x32xf32>
    %430 = vector.broadcast %1 : vector<1x32xf32> to vector<16x32xf32>
    %431 = arith.addf %429, %430 : vector<16x32xf32>
    %432 = arith.negf %431 : vector<16x32xf32>
    %433 = math.exp %432 : vector<16x32xf32>
    %cst_211 = arith.constant 1.000000e+00 : f32
    %434 = vector.broadcast %cst_211 : f32 to vector<16x32xf32>
    %435 = arith.addf %434, %433 : vector<16x32xf32>
    %436 = arith.divf %434, %435 : vector<16x32xf32>
    %437 = vector.broadcast %2 : vector<1x32xf32> to vector<16x32xf32>
    %438 = arith.addf %414, %437 : vector<16x32xf32>
    %439 = vector.broadcast %3 : vector<1x32xf32> to vector<16x32xf32>
    %440 = arith.addf %420, %439 : vector<16x32xf32>
    %441 = arith.mulf %428, %440 : vector<16x32xf32>
    %442 = arith.addf %438, %441 : vector<16x32xf32>
    %443 = math.tanh %442 : vector<16x32xf32>
    %cst_212 = arith.constant 1.000000e+00 : f32
    %444 = vector.broadcast %cst_212 : f32 to vector<16x32xf32>
    %445 = arith.subf %444, %436 : vector<16x32xf32>
    %446 = arith.mulf %445, %443 : vector<16x32xf32>
    %447 = arith.mulf %436, %382 : vector<16x32xf32>
    %448 = arith.addf %446, %447 : vector<16x32xf32>
    %449 = arith.truncf %448 : vector<16x32xf32> to vector<16x32xbf16>
    %c0_213 = arith.constant 0 : index
    %c0_214 = arith.constant 0 : index
    %450 = vector.load %arg12[%c0_213, %c0_214] : memref<32x16xbf16, #tpu.memory_space<vmem>>, vector<32x16xbf16>
    %cst_215 = arith.constant dense<0.000000e+00> : vector<16x16xf32>
    %451 = tpu.matmul %449, %450, %cst_215 {dimension_numbers = #tpu.dot_dimension_numbers<[1], [0], [0], [1], [0, 0, 1, 1], [], []>} : vector<16x32xbf16>, vector<32x16xbf16>, vector<16x16xf32> -> vector<16x16xf32>
    %452 = vector.broadcast %4 : vector<1x16xf32> to vector<16x16xf32>
    %453 = arith.addf %451, %452 : vector<16x16xf32>
    %cst_216 = arith.constant dense<0xFF800000> : vector<16xf32>
    %454 = vector.multi_reduction <maximumf>, %453, %cst_216 [1] : vector<16x16xf32> to vector<16xf32>
    %455 = vector.shape_cast %454 : vector<16xf32> to vector<16x1xf32>
    %456 = vector.broadcast %455 : vector<16x1xf32> to vector<16x16xf32>
    %457 = arith.cmpf oeq, %453, %456 : vector<16x16xf32>
    %c16_i32_217 = arith.constant 16 : i32
    %458 = vector.broadcast %c16_i32_217 : i32 to vector<16x16xi32>
    %459 = arith.select %457, %5, %458 : vector<16x16xi1>, vector<16x16xi32>
    %cst_218 = arith.constant dense<2147483647> : vector<16xi32>
    %460 = vector.multi_reduction <minsi>, %459, %cst_218 [1] : vector<16x16xi32> to vector<16xi32>
    %461 = vector.shape_cast %460 : vector<16xi32> to vector<16x1xi32>
    %462 = vector.broadcast %c6_i32 : i32 to vector<16x8xi32>
    %463 = arith.cmpi eq, %7, %462 : vector<16x8xi32>
    %464 = vector.shape_cast %461 : vector<16x1xi32> to vector<16x1xi32>
    %465 = vector.broadcast %464 : vector<16x1xi32> to vector<16x8xi32>
    %466 = arith.select %463, %465, %400 : vector<16x8xi1>, vector<16x8xi32>
    %467 = vector.broadcast %461 : vector<16x1xi32> to vector<16x16xi32>
    %468 = arith.cmpi eq, %6, %467 : vector<16x16xi32>
    %469 = arith.extui %468 : vector<16x16xi1> to vector<16x16xi32>
    %470 = arith.sitofp %469 : vector<16x16xi32> to vector<16x16xf32>
    %471 = arith.truncf %470 : vector<16x16xf32> to vector<16x16xbf16>
    %c0_219 = arith.constant 0 : index
    %c0_220 = arith.constant 0 : index
    %472 = vector.load %arg14[%c0_219, %c0_220] : memref<16x32xbf16, #tpu.memory_space<vmem>>, vector<16x32xbf16>
    %cst_221 = arith.constant dense<0.000000e+00> : vector<16x32xf32>
    %473 = tpu.matmul %471, %472, %cst_221 {dimension_numbers = #tpu.dot_dimension_numbers<[1], [0], [0], [1], [0, 0, 1, 1], [], []>} : vector<16x16xbf16>, vector<16x32xbf16>, vector<16x32xf32> -> vector<16x32xf32>
    %474 = arith.truncf %473 : vector<16x32xf32> to vector<16x32xbf16>
    %c7_i32 = arith.constant 7 : i32
    %c0_222 = arith.constant 0 : index
    %c0_223 = arith.constant 0 : index
    %475 = vector.load %arg2[%c0_222, %c0_223] : memref<32x32xbf16, #tpu.memory_space<vmem>>, vector<32x32xbf16>
    %cst_224 = arith.constant dense<0.000000e+00> : vector<16x32xf32>
    %476 = tpu.matmul %474, %475, %cst_224 {dimension_numbers = #tpu.dot_dimension_numbers<[1], [0], [0], [1], [0, 0, 1, 1], [], []>} : vector<16x32xbf16>, vector<32x32xbf16>, vector<16x32xf32> -> vector<16x32xf32>
    %c0_225 = arith.constant 0 : index
    %c0_226 = arith.constant 0 : index
    %477 = vector.load %arg3[%c0_225, %c0_226] : memref<32x32xbf16, #tpu.memory_space<vmem>>, vector<32x32xbf16>
    %cst_227 = arith.constant dense<0.000000e+00> : vector<16x32xf32>
    %478 = tpu.matmul %474, %477, %cst_227 {dimension_numbers = #tpu.dot_dimension_numbers<[1], [0], [0], [1], [0, 0, 1, 1], [], []>} : vector<16x32xbf16>, vector<32x32xbf16>, vector<16x32xf32> -> vector<16x32xf32>
    %c0_228 = arith.constant 0 : index
    %c0_229 = arith.constant 0 : index
    %479 = vector.load %arg4[%c0_228, %c0_229] : memref<32x32xbf16, #tpu.memory_space<vmem>>, vector<32x32xbf16>
    %cst_230 = arith.constant dense<0.000000e+00> : vector<16x32xf32>
    %480 = tpu.matmul %474, %479, %cst_230 {dimension_numbers = #tpu.dot_dimension_numbers<[1], [0], [0], [1], [0, 0, 1, 1], [], []>} : vector<16x32xbf16>, vector<32x32xbf16>, vector<16x32xf32> -> vector<16x32xf32>
    %c0_231 = arith.constant 0 : index
    %c0_232 = arith.constant 0 : index
    %481 = vector.load %arg5[%c0_231, %c0_232] : memref<32x32xbf16, #tpu.memory_space<vmem>>, vector<32x32xbf16>
    %cst_233 = arith.constant dense<0.000000e+00> : vector<16x32xf32>
    %482 = tpu.matmul %449, %481, %cst_233 {dimension_numbers = #tpu.dot_dimension_numbers<[1], [0], [0], [1], [0, 0, 1, 1], [], []>} : vector<16x32xbf16>, vector<32x32xbf16>, vector<16x32xf32> -> vector<16x32xf32>
    %c0_234 = arith.constant 0 : index
    %c0_235 = arith.constant 0 : index
    %483 = vector.load %arg6[%c0_234, %c0_235] : memref<32x32xbf16, #tpu.memory_space<vmem>>, vector<32x32xbf16>
    %cst_236 = arith.constant dense<0.000000e+00> : vector<16x32xf32>
    %484 = tpu.matmul %449, %483, %cst_236 {dimension_numbers = #tpu.dot_dimension_numbers<[1], [0], [0], [1], [0, 0, 1, 1], [], []>} : vector<16x32xbf16>, vector<32x32xbf16>, vector<16x32xf32> -> vector<16x32xf32>
    %c0_237 = arith.constant 0 : index
    %c0_238 = arith.constant 0 : index
    %485 = vector.load %arg7[%c0_237, %c0_238] : memref<32x32xbf16, #tpu.memory_space<vmem>>, vector<32x32xbf16>
    %cst_239 = arith.constant dense<0.000000e+00> : vector<16x32xf32>
    %486 = tpu.matmul %449, %485, %cst_239 {dimension_numbers = #tpu.dot_dimension_numbers<[1], [0], [0], [1], [0, 0, 1, 1], [], []>} : vector<16x32xbf16>, vector<32x32xbf16>, vector<16x32xf32> -> vector<16x32xf32>
    %487 = arith.addf %476, %482 : vector<16x32xf32>
    %488 = vector.broadcast %0 : vector<1x32xf32> to vector<16x32xf32>
    %489 = arith.addf %487, %488 : vector<16x32xf32>
    %490 = arith.negf %489 : vector<16x32xf32>
    %491 = math.exp %490 : vector<16x32xf32>
    %cst_240 = arith.constant 1.000000e+00 : f32
    %492 = vector.broadcast %cst_240 : f32 to vector<16x32xf32>
    %493 = arith.addf %492, %491 : vector<16x32xf32>
    %494 = arith.divf %492, %493 : vector<16x32xf32>
    %495 = arith.addf %478, %484 : vector<16x32xf32>
    %496 = vector.broadcast %1 : vector<1x32xf32> to vector<16x32xf32>
    %497 = arith.addf %495, %496 : vector<16x32xf32>
    %498 = arith.negf %497 : vector<16x32xf32>
    %499 = math.exp %498 : vector<16x32xf32>
    %cst_241 = arith.constant 1.000000e+00 : f32
    %500 = vector.broadcast %cst_241 : f32 to vector<16x32xf32>
    %501 = arith.addf %500, %499 : vector<16x32xf32>
    %502 = arith.divf %500, %501 : vector<16x32xf32>
    %503 = vector.broadcast %2 : vector<1x32xf32> to vector<16x32xf32>
    %504 = arith.addf %480, %503 : vector<16x32xf32>
    %505 = vector.broadcast %3 : vector<1x32xf32> to vector<16x32xf32>
    %506 = arith.addf %486, %505 : vector<16x32xf32>
    %507 = arith.mulf %494, %506 : vector<16x32xf32>
    %508 = arith.addf %504, %507 : vector<16x32xf32>
    %509 = math.tanh %508 : vector<16x32xf32>
    %cst_242 = arith.constant 1.000000e+00 : f32
    %510 = vector.broadcast %cst_242 : f32 to vector<16x32xf32>
    %511 = arith.subf %510, %502 : vector<16x32xf32>
    %512 = arith.mulf %511, %509 : vector<16x32xf32>
    %513 = arith.mulf %502, %448 : vector<16x32xf32>
    %514 = arith.addf %512, %513 : vector<16x32xf32>
    %515 = arith.truncf %514 : vector<16x32xf32> to vector<16x32xbf16>
    %c0_243 = arith.constant 0 : index
    %c0_244 = arith.constant 0 : index
    %516 = vector.load %arg12[%c0_243, %c0_244] : memref<32x16xbf16, #tpu.memory_space<vmem>>, vector<32x16xbf16>
    %cst_245 = arith.constant dense<0.000000e+00> : vector<16x16xf32>
    %517 = tpu.matmul %515, %516, %cst_245 {dimension_numbers = #tpu.dot_dimension_numbers<[1], [0], [0], [1], [0, 0, 1, 1], [], []>} : vector<16x32xbf16>, vector<32x16xbf16>, vector<16x16xf32> -> vector<16x16xf32>
    %518 = vector.broadcast %4 : vector<1x16xf32> to vector<16x16xf32>
    %519 = arith.addf %517, %518 : vector<16x16xf32>
    %cst_246 = arith.constant dense<0xFF800000> : vector<16xf32>
    %520 = vector.multi_reduction <maximumf>, %519, %cst_246 [1] : vector<16x16xf32> to vector<16xf32>
    %521 = vector.shape_cast %520 : vector<16xf32> to vector<16x1xf32>
    %522 = vector.broadcast %521 : vector<16x1xf32> to vector<16x16xf32>
    %523 = arith.cmpf oeq, %519, %522 : vector<16x16xf32>
    %c16_i32_247 = arith.constant 16 : i32
    %524 = vector.broadcast %c16_i32_247 : i32 to vector<16x16xi32>
    %525 = arith.select %523, %5, %524 : vector<16x16xi1>, vector<16x16xi32>
    %cst_248 = arith.constant dense<2147483647> : vector<16xi32>
    %526 = vector.multi_reduction <minsi>, %525, %cst_248 [1] : vector<16x16xi32> to vector<16xi32>
    %527 = vector.shape_cast %526 : vector<16xi32> to vector<16x1xi32>
    %528 = vector.broadcast %c7_i32 : i32 to vector<16x8xi32>
    %529 = arith.cmpi eq, %7, %528 : vector<16x8xi32>
    %530 = vector.shape_cast %527 : vector<16x1xi32> to vector<16x1xi32>
    %531 = vector.broadcast %530 : vector<16x1xi32> to vector<16x8xi32>
    %532 = arith.select %529, %531, %466 : vector<16x8xi1>, vector<16x8xi32>
    %533 = vector.broadcast %527 : vector<16x1xi32> to vector<16x16xi32>
    %534 = arith.cmpi eq, %6, %533 : vector<16x16xi32>
    %535 = arith.extui %534 : vector<16x16xi1> to vector<16x16xi32>
    %536 = arith.sitofp %535 : vector<16x16xi32> to vector<16x16xf32>
    %537 = arith.truncf %536 : vector<16x16xf32> to vector<16x16xbf16>
    %c0_249 = arith.constant 0 : index
    %c0_250 = arith.constant 0 : index
    %538 = vector.load %arg14[%c0_249, %c0_250] : memref<16x32xbf16, #tpu.memory_space<vmem>>, vector<16x32xbf16>
    %cst_251 = arith.constant dense<0.000000e+00> : vector<16x32xf32>
    %539 = tpu.matmul %537, %538, %cst_251 {dimension_numbers = #tpu.dot_dimension_numbers<[1], [0], [0], [1], [0, 0, 1, 1], [], []>} : vector<16x16xbf16>, vector<16x32xbf16>, vector<16x32xf32> -> vector<16x32xf32>
    %540 = arith.truncf %539 : vector<16x32xf32> to vector<16x32xbf16>
    %c8_i32 = arith.constant 8 : i32
    %c0_252 = arith.constant 0 : index
    %c0_253 = arith.constant 0 : index
    %541 = vector.load %arg15[%c0_252, %c0_253] : memref<16x8xi32, #tpu.memory_space<vmem>>, vector<16x8xi32>
    tpu.vector_store %arg15[%c0_252, %c0_253], %532 {strides = array<i32>} : memref<16x8xi32, #tpu.memory_space<vmem>>, vector<16x8xi32>,
    %c0_254 = arith.constant 0 : index
    %c0_255 = arith.constant 0 : index
    %542 = vector.load %arg16[%c0_254, %c0_255] : memref<16x32xf32, #tpu.memory_space<vmem>>, vector<16x32xf32>
    tpu.vector_store %arg16[%c0_254, %c0_255], %514 {strides = array<i32>} : memref<16x32xf32, #tpu.memory_space<vmem>>, vector<16x32xf32>,
    return
  }
}

</mosaic_0001>

<llo_original>
// kernel: text_decoder_forward.1
$region0: #{text_decoder_forward.1}
  #allocation0 [shape = 'u32[]', space=smem, size = 0x4, offset = 0x4, fixed_abs, tag = 'smem constant byte address 0x4 - core index']
  #allocation1 [shape = 'u32[144,128]{1,0:T(1,128)}', space=vmem, size = 0x12000, scoped, tag = 'internal scratch']
  %s0 = inlined_call_operand.vmem [shape: f32[16,32], index: 0, kind: input, shape index: {}]
  %s1 = inlined_call_operand.vmem [shape: f32[16,32], index: 1, kind: input, shape index: {}]
  %s2 = inlined_call_operand.vmem [shape: bf16[32,32], index: 2, kind: input, shape index: {}]
  %s3 = inlined_call_operand.vmem [shape: bf16[32,32], index: 3, kind: input, shape index: {}]
  %s4 = inlined_call_operand.vmem [shape: bf16[32,32], index: 4, kind: input, shape index: {}]
  %s5 = inlined_call_operand.vmem [shape: bf16[32,32], index: 5, kind: input, shape index: {}]
  %s6 = inlined_call_operand.vmem [shape: bf16[32,32], index: 6, kind: input, shape index: {}]
  %s7 = inlined_call_operand.hbm [shape: bf16[32,32], index: 7, kind: input, shape index: {}]
  %s8 = inlined_call_operand.hbm [shape: f32[1,32], index: 8, kind: input, shape index: {}]
  %s9 = inlined_call_operand.hbm [shape: f32[1,32], index: 9, kind: input, shape index: {}]
  %s10 = inlined_call_operand.hbm [shape: f32[1,32], index: 10, kind: input, shape index: {}]
  %s11 = inlined_call_operand.hbm [shape: f32[1,32], index: 11, kind: input, shape index: {}]
  %s12 = inlined_call_operand.vmem [shape: bf16[32,16], index: 12, kind: input, shape index: {}]
  %s13 = inlined_call_operand.hbm [shape: f32[1,16], index: 13, kind: input, shape index: {}]
  %s14 = inlined_call_operand.hbm [shape: bf16[16,32], index: 14, kind: input, shape index: {}]
  %s15 = inlined_call_operand.vmem [shape: s32[16,8], index: 15, kind: output, shape index: {0}]
  %s16 = inlined_call_operand.vmem [shape: f32[16,32], index: 16, kind: output, shape index: {1}]
  %17 = xla_tuple %s15, %s16
  %s18 = sld [smem:[#allocation0]]
  $region106: #{text_decoder_forward.1} parent=0
    _
  %s20 = ssub.s32 1, %s18
  %s21 = scalar_select 0, %s20, %s18
  $region1: #{text_decoder_forward.1} parent=0
    #allocation2 [shape = 'u8[8192]{0}', space=vmem, size = 0x2000, scoped, tag = 'input window, operand 7, single buffered']
    #allocation3 [shape = 's32[1]{0}', space=sflag, size = 0x4, scoped, tag = 'scoped memory for text_decoder_forward.1']
    #allocation4 [shape = 'u8[512]{0}', space=vmem, size = 0x400, scoped, tag = 'input window, operand 8, single buffered']
    #allocation5 [shape = 's32[1]{0}', space=sflag, size = 0x4, scoped, tag = 'scoped memory for text_decoder_forward.1']
    #allocation6 [shape = 'u8[512]{0}', space=vmem, size = 0x400, scoped, tag = 'input window, operand 9, single buffered']
    #allocation7 [shape = 'u8[512]{0}', space=vmem, size = 0x400, scoped, tag = 'input window, operand 10, single buffered']
    #allocation8 [shape = 's32[1]{0}', space=sflag, size = 0x4, scoped, tag = 'scoped memory for text_decoder_forward.1']
    #allocation9 [shape = 'u8[512]{0}', space=vmem, size = 0x400, scoped, tag = 'input window, operand 11, single buffered']
    #allocation10 [shape = 'u8[512]{0}', space=vmem, size = 0x400, scoped, tag = 'input window, operand 13, single buffered']
    #allocation11 [shape = 's32[1]{0}', space=sflag, size = 0x4, scoped, tag = 'scoped memory for text_decoder_forward.1']
    #allocation12 [shape = 'u8[4096]{0}', space=vmem, size = 0x1000, scoped, tag = 'input window, operand 14, single buffered']
    %22 = vsyncpa [#allocation3], 0
    %23 = vsyncpa [#allocation5], 0
    %24 = vsyncpa [#allocation8], 0
    %25 = vsyncpa [#allocation11], 0
    // Predicated region
    $region2: #{text_decoder_forward.1} parent=1 // pred_check
      _
    $region3: #{text_decoder_forward.1} parent=1 // pred_check_branch
      %27 = sbr.rel (0) target = $region5
    $region4: #{text_decoder_forward.1} parent=1 // pred_region
      _
    $region5: #{text_decoder_forward.1} parent=1 // pred_fallthru
      _
    // Predicated region
    $region6: #{text_decoder_forward.1} parent=1 // pred_check
      _
    $region7: #{text_decoder_forward.1} parent=1 // pred_check_branch
      %29 = sbr.rel (0) target = $region9
    $region8: #{text_decoder_forward.1} parent=1 // pred_region
      _
    $region9: #{text_decoder_forward.1} parent=1 // pred_fallthru
      _
    // Predicated region
    $region10: #{text_decoder_forward.1} parent=1 // pred_check
      _
    $region11: #{text_decoder_forward.1} parent=1 // pred_check_branch
      %31 = sbr.rel (0) target = $region13
    $region12: #{text_decoder_forward.1} parent=1 // pred_region
      _
    $region13: #{text_decoder_forward.1} parent=1 // pred_fallthru
      _
    // Predicated region
    $region14: #{text_decoder_forward.1} parent=1 // pred_check
      _
    $region15: #{text_decoder_forward.1} parent=1 // pred_check_branch
      %33 = sbr.rel (0) target = $region17
    $region16: #{text_decoder_forward.1} parent=1 // pred_region
      _
    $region17: #{text_decoder_forward.1} parent=1 // pred_fallthru
      _
    // Predicated region
    $region18: #{text_decoder_forward.1} parent=1 // pred_check
      _
    $region19: #{text_decoder_forward.1} parent=1 // pred_check_branch
      %35 = sbr.rel (0) target = $region21
    $region20: #{text_decoder_forward.1} parent=1 // pred_region
      _
    $region21: #{text_decoder_forward.1} parent=1 // pred_fallthru
      _
    // Predicated region
    $region22: #{text_decoder_forward.1} parent=1 // pred_check
      _
    $region23: #{text_decoder_forward.1} parent=1 // pred_check_branch
      %37 = sbr.rel (0) target = $region25
    $region24: #{text_decoder_forward.1} parent=1 // pred_region
      _
    $region25: #{text_decoder_forward.1} parent=1 // pred_fallthru
      _
    // Predicated region
    $region26: #{text_decoder_forward.1} parent=1 // pred_check
      _
    $region27: #{text_decoder_forward.1} parent=1 // pred_check_branch
      %39 = sbr.rel (0) target = $region29
    $region28: #{text_decoder_forward.1} parent=1 // pred_region
      _
    $region29: #{text_decoder_forward.1} parent=1 // pred_fallthru
      _
    // Predicated region
    $region30: #{text_decoder_forward.1} parent=1 // pred_check
      _
    $region31: #{text_decoder_forward.1} parent=1 // pred_check_branch
      %41 = sbr.rel (0) target = $region33
    $region32: #{text_decoder_forward.1} parent=1 // pred_region
      %s43 = ssub.s32 256, 256
      %44 = vsyncadd [#allocation3], %s43
      %s45 = sshll.u32 [#allocation2], 4
      %s46 = int_to_ptr.vmem [resolvable:$true] %s45
      %51 = dma.hbm_to_vmem [thread:$0]  %s7, 256, %s46, [#allocation3], 64, 64, 4
    $region33: #{text_decoder_forward.1} parent=1 // pred_fallthru
      _
    // Predicated region
    $region34: #{text_decoder_forward.1} parent=1 // pred_check
      _
    $region35: #{text_decoder_forward.1} parent=1 // pred_check_branch
      %53 = sbr.rel (0) target = $region37
    $region36: #{text_decoder_forward.1} parent=1 // pred_region
      %s55 = ssub.s32 16, 16
      %56 = vsyncadd [#allocation5], %s55
      %s58 = sshll.u32 [#allocation4], 4
      %s59 = int_to_ptr.vmem [resolvable:$true] %s58
      %61 = dma.hbm_to_vmem [thread:$0]  %s8, 16, %s59, [#allocation5]
    $region37: #{text_decoder_forward.1} parent=1 // pred_fallthru
      _
    // Predicated region
    $region38: #{text_decoder_forward.1} parent=1 // pred_check
      _
    $region39: #{text_decoder_forward.1} parent=1 // pred_check_branch
      %63 = sbr.rel (0) target = $region41
    $region40: #{text_decoder_forward.1} parent=1 // pred_region
      %s65 = ssub.s32 16, 16
      %66 = vsyncadd [#allocation5], %s65
      %s68 = sshll.u32 [#allocation6], 4
      %s69 = int_to_ptr.vmem [resolvable:$true] %s68
      %71 = dma.hbm_to_vmem [thread:$0]  %s9, 16, %s69, [#allocation5]
    $region41: #{text_decoder_forward.1} parent=1 // pred_fallthru
      _
    // Predicated region
    $region42: #{text_decoder_forward.1} parent=1 // pred_check
      _
    $region43: #{text_decoder_forward.1} parent=1 // pred_check_branch
      %73 = sbr.rel (0) target = $region45
    $region44: #{text_decoder_forward.1} parent=1 // pred_region
      %s75 = ssub.s32 16, 16
      %76 = vsyncadd [#allocation8], %s75
      %s78 = sshll.u32 [#allocation7], 4
      %s79 = int_to_ptr.vmem [resolvable:$true] %s78
      %81 = dma.hbm_to_vmem [thread:$0]  %s10, 16, %s79, [#allocation8]
    $region45: #{text_decoder_forward.1} parent=1 // pred_fallthru
      _
    // Predicated region
    $region46: #{text_decoder_forward.1} parent=1 // pred_check
      _
    $region47: #{text_decoder_forward.1} parent=1 // pred_check_branch
      %83 = sbr.rel (0) target = $region49
    $region48: #{text_decoder_forward.1} parent=1 // pred_region
      %s85 = ssub.s32 16, 16
      %86 = vsyncadd [#allocation8], %s85
      %s88 = sshll.u32 [#allocation9], 4
      %s89 = int_to_ptr.vmem [resolvable:$true] %s88
      %91 = dma.hbm_to_vmem [thread:$0]  %s11, 16, %s89, [#allocation8]
    $region49: #{text_decoder_forward.1} parent=1 // pred_fallthru
      _
    // Predicated region
    $region50: #{text_decoder_forward.1} parent=1 // pred_check
      _
    $region51: #{text_decoder_forward.1} parent=1 // pred_check_branch
      %93 = sbr.rel (0) target = $region53
    $region52: #{text_decoder_forward.1} parent=1 // pred_region
      _
    $region53: #{text_decoder_forward.1} parent=1 // pred_fallthru
      _
    // Predicated region
    $region54: #{text_decoder_forward.1} parent=1 // pred_check
      _
    $region55: #{text_decoder_forward.1} parent=1 // pred_check_branch
      %95 = sbr.rel (0) target = $region57
    $region56: #{text_decoder_forward.1} parent=1 // pred_region
      %s97 = ssub.s32 16, 16
      %98 = vsyncadd [#allocation11], %s97
      %s100 = sshll.u32 [#allocation10], 4
      %s101 = int_to_ptr.vmem [resolvable:$true] %s100
      %103 = dma.hbm_to_vmem [thread:$0]  %s13, 16, %s101, [#allocation11]
    $region57: #{text_decoder_forward.1} parent=1 // pred_fallthru
      _
    // Predicated region
    $region58: #{text_decoder_forward.1} parent=1 // pred_check
      _
    $region59: #{text_decoder_forward.1} parent=1 // pred_check_branch
      %105 = sbr.rel (0) target = $region61
    $region60: #{text_decoder_forward.1} parent=1 // pred_region
      %s107 = ssub.s32 128, 128
      %108 = vsyncadd [#allocation11], %s107
      %s109 = sshll.u32 [#allocation12], 4
      %s110 = int_to_ptr.vmem [resolvable:$true] %s109
      %115 = dma.hbm_to_vmem [thread:$0]  %s14, 128, %s110, [#allocation11], 64, 64, 4
    $region61: #{text_decoder_forward.1} parent=1 // pred_fallthru
      _
    // Predicated region
    $region62: #{text_decoder_forward.1} parent=1 // pred_check
      _
    $region63: #{text_decoder_forward.1} parent=1 // pred_check_branch
      %117 = sbr.rel (0) target = $region65
    $region64: #{text_decoder_forward.1} parent=1 // pred_region
      %118 = dma.done [#allocation3], 256
    $region65: #{text_decoder_forward.1} parent=1 // pred_fallthru
      _
    // Predicated region
    $region66: #{text_decoder_forward.1} parent=1 // pred_check
      _
    $region67: #{text_decoder_forward.1} parent=1 // pred_check_branch
      %120 = sbr.rel (0) target = $region69
    $region68: #{text_decoder_forward.1} parent=1 // pred_region
      %121 = dma.done [#allocation5], 16
    $region69: #{text_decoder_forward.1} parent=1 // pred_fallthru
      _
    // Predicated region
    $region70: #{text_decoder_forward.1} parent=1 // pred_check
      _
    $region71: #{text_decoder_forward.1} parent=1 // pred_check_branch
      %123 = sbr.rel (0) target = $region73
    $region72: #{text_decoder_forward.1} parent=1 // pred_region
      %124 = dma.done [#allocation5], 16
    $region73: #{text_decoder_forward.1} parent=1 // pred_fallthru
      _
    // Predicated region
    $region74: #{text_decoder_forward.1} parent=1 // pred_check
      _
    $region75: #{text_decoder_forward.1} parent=1 // pred_check_branch
      %126 = sbr.rel (0) target = $region77
    $region76: #{text_decoder_forward.1} parent=1 // pred_region
      %127 = dma.done [#allocation8], 16
    $region77: #{text_decoder_forward.1} parent=1 // pred_fallthru
      _
    // Predicated region
    $region78: #{text_decoder_forward.1} parent=1 // pred_check
      _
    $region79: #{text_decoder_forward.1} parent=1 // pred_check_branch
      %129 = sbr.rel (0) target = $region81
    $region80: #{text_decoder_forward.1} parent=1 // pred_region
      %130 = dma.done [#allocation8], 16
    $region81: #{text_decoder_forward.1} parent=1 // pred_fallthru
      _
    // Predicated region
    $region82: #{text_decoder_forward.1} parent=1 // pred_check
      _
    $region83: #{text_decoder_forward.1} parent=1 // pred_check_branch
      %132 = sbr.rel (0) target = $region85
    $region84: #{text_decoder_forward.1} parent=1 // pred_region
      %133 = dma.done [#allocation11], 16
    $region85: #{text_decoder_forward.1} parent=1 // pred_fallthru
      _
    // Predicated region
    $region86: #{text_decoder_forward.1} parent=1 // pred_check
      _
    $region87: #{text_decoder_forward.1} parent=1 // pred_check_branch
      %135 = sbr.rel (0) target = $region89
    $region88: #{text_decoder_forward.1} parent=1 // pred_region
      %136 = dma.done [#allocation11], 128
    $region89: #{text_decoder_forward.1} parent=1 // pred_fallthru
      _
    %v138 = vld [vmem:[#allocation4] sm:$0x1]
    %v139 = vld [vmem:[#allocation6] sm:$0x1]
    %v140 = vld [vmem:[#allocation7] sm:$0x1]
    %v141 = vld [vmem:[#allocation9] sm:$0x1]
    %v142 = vld [vmem:[#allocation10] sm:$0x1]
    %v143 = vlaneseq
    %v144 = vand.u32 %v143, 127
    %v145 = vld [vmem:[%s0] sm:$0xff]
    %v146 = vld [vmem:[%s0 + $0x8] sm:$0xff]
    %v147 = vpack.c.bf16 %v146, %v145
    %v148 = vld [vmem:[%s1] sm:$0xff]
    %v149 = vld [vmem:[%s1 + $0x8] sm:$0xff]
    %v150 = vpack.c.bf16 %v149, %v148
    %v151 = vld [vmem:[%s2] sm:$0xf]
    %v152 = vld [vmem:[%s2 + $0x4] sm:$0xf]
    %v153 = vld [vmem:[%s2 + $0x8] sm:$0xf]
    %v154 = vld [vmem:[%s2 + $0xc] sm:$0xf]
    %v155 = vld [vmem:[%s3] sm:$0xf]
    %v156 = vld [vmem:[%s3 + $0x4] sm:$0xf]
    %v157 = vld [vmem:[%s3 + $0x8] sm:$0xf]
    %v158 = vld [vmem:[%s3 + $0xc] sm:$0xf]
    %v159 = vld [vmem:[%s4] sm:$0xf]
    %v160 = vld [vmem:[%s4 + $0x4] sm:$0xf]
    %v161 = vld [vmem:[%s4 + $0x8] sm:$0xf]
    %v162 = vld [vmem:[%s4 + $0xc] sm:$0xf]
    %v163 = vld [vmem:[%s5] sm:$0xf]
    %v164 = vld [vmem:[%s5 + $0x4] sm:$0xf]
    %v165 = vld [vmem:[%s5 + $0x8] sm:$0xf]
    %v166 = vld [vmem:[%s5 + $0xc] sm:$0xf]
    %v171 = vunpack.c.l.b16 %v163
    %v172 = vunpack.c.l.b16 %v164
    %v173 = vunpack.c.l.b16 %v165
    %v174 = vunpack.c.l.b16 %v166
    %v175 = vpack.c.b16 %v172, %v171
    %v176 = vpack.c.b16 %v174, %v173
    %vm179 = vcmask 261120
    %v181 = vsel %vm179, %v150, 0
    %183 = vmatprep.subr.bf16.mxu0 0
    %184 = vmatpush1.bf16.msra.mxu0 %v175
    %185 = vmatprep.subr.bf16.mxu0 0
    %186 = vmatpush1.bf16.msra.mxu0 %v176
    %187 = vmatprep.subr.bf16.mxu0 0
    %188 = vmatpush1.bf16.msra.mxu0 0
    %189 = vmatprep.subr.bf16.mxu0 0
    %190 = vmatpush1.bf16.msra.mxu0 0
    %191 = vmatprep.subr.bf16.mxu0 0
    %192 = vmatpush1.bf16.msra.mxu0 0
    %193 = vmatprep.subr.bf16.mxu0 0
    %194 = vmatpush1.bf16.msra.mxu0 0
    %195 = vmatprep.subr.bf16.mxu0 0
    %196 = vmatpush1.bf16.msra.mxu0 0
    %197 = vmatprep.subr.bf16.mxu0 0
    %198 = vmatpush1.bf16.msra.mxu0 0
    %199 = vmatprep.subr.bf16.mxu0 0
    %200 = vmatpush1.bf16.msra.mxu0 0
    %201 = vmatprep.subr.bf16.mxu0 0
    %202 = vmatpush1.bf16.msra.mxu0 0
    %203 = vmatprep.subr.bf16.mxu0 0
    %204 = vmatpush1.bf16.msra.mxu0 0
    %205 = vmatprep.subr.bf16.mxu0 0
    %206 = vmatpush1.bf16.msra.mxu0 0
    %207 = vmatprep.subr.bf16.mxu0 0
    %208 = vmatpush1.bf16.msra.mxu0 0
    %209 = vmatprep.subr.bf16.mxu0 0
    %210 = vmatpush1.bf16.msra.mxu0 0
    %211 = vmatprep.subr.bf16.mxu0 0
    %212 = vmatpush1.bf16.msra.mxu0 0
    %213 = vmatprep.subr.bf16.mxu0 0
    %214 = vmatpush1.bf16.msra.mxu0 0
    %215 = vmatprep.mubr.bf16.mxu0 0
    %216 = vmatmul.mubr.bf16.gmra.mrb[0].mxu0 %v181
    %v217 = vpop.f32.mrb[0].mxu0
    %v218 = vadd.f32 0.0, %v217
    %v219 = vpop.f32.mrb[0].mxu0
    %v220 = vpop.f32.mrb[0].mxu0
    %v221 = vadd.f32 0.0, %v220
    %v222 = vpop.f32.mrb[0].mxu0
    %223 = vdwg.mxu0
    %v224 = vld [vmem:[%s6] sm:$0xf]
    %v225 = vld [vmem:[%s6 + $0x4] sm:$0xf]
    %v226 = vld [vmem:[%s6 + $0x8] sm:$0xf]
    %v227 = vld [vmem:[%s6 + $0xc] sm:$0xf]
    %v232 = vunpack.c.l.b16 %v224
    %v233 = vunpack.c.l.b16 %v225
    %v234 = vunpack.c.l.b16 %v226
    %v235 = vunpack.c.l.b16 %v227
    %v236 = vpack.c.b16 %v233, %v232
    %v237 = vpack.c.b16 %v235, %v234
    %240 = vmatprep.subr.bf16.mxu0 0
    %241 = vmatpush1.bf16.msra.mxu0 %v236
    %242 = vmatprep.subr.bf16.mxu0 0
    %243 = vmatpush1.bf16.msra.mxu0 %v237
    %244 = vmatprep.subr.bf16.mxu0 0
    %245 = vmatpush1.bf16.msra.mxu0 0
    %246 = vmatprep.subr.bf16.mxu0 0
    %247 = vmatpush1.bf16.msra.mxu0 0
    %248 = vmatprep.subr.bf16.mxu0 0
    %249 = vmatpush1.bf16.msra.mxu0 0
    %250 = vmatprep.subr.bf16.mxu0 0
    %251 = vmatpush1.bf16.msra.mxu0 0
    %252 = vmatprep.subr.bf16.mxu0 0
    %253 = vmatpush1.bf16.msra.mxu0 0
    %254 = vmatprep.subr.bf16.mxu0 0
    %255 = vmatpush1.bf16.msra.mxu0 0
    %256 = vmatprep.subr.bf16.mxu0 0
    %257 = vmatpush1.bf16.msra.mxu0 0
    %258 = vmatprep.subr.bf16.mxu0 0
    %259 = vmatpush1.bf16.msra.mxu0 0
    %260 = vmatprep.subr.bf16.mxu0 0
    %261 = vmatpush1.bf16.msra.mxu0 0
    %262 = vmatprep.subr.bf16.mxu0 0
    %263 = vmatpush1.bf16.msra.mxu0 0
    %264 = vmatprep.subr.bf16.mxu0 0
    %265 = vmatpush1.bf16.msra.mxu0 0
    %266 = vmatprep.subr.bf16.mxu0 0
    %267 = vmatpush1.bf16.msra.mxu0 0
    %268 = vmatprep.subr.bf16.mxu0 0
    %269 = vmatpush1.bf16.msra.mxu0 0
    %270 = vmatprep.subr.bf16.mxu0 0
    %271 = vmatpush1.bf16.msra.mxu0 0
    %272 = vmatprep.mubr.bf16.mxu0 0
    %273 = vmatmul.mubr.bf16.gmra.mrb[0].mxu0 %v181
    %v274 = vpop.f32.mrb[0].mxu0
    %v275 = vadd.f32 0.0, %v274
    %v276 = vpop.f32.mrb[0].mxu0
    %v277 = vpop.f32.mrb[0].mxu0
    %v278 = vadd.f32 0.0, %v277
    %v279 = vpop.f32.mrb[0].mxu0
    %280 = vdwg.mxu0
    %v281 = vld [vmem:[#allocation2] sm:$0xf]
    %v282 = vld [vmem:[#allocation2 + $0x4] sm:$0xf]
    %v283 = vld [vmem:[#allocation2 + $0x8] sm:$0xf]
    %v284 = vld [vmem:[#allocation2 + $0xc] sm:$0xf]
    %v289 = vunpack.c.l.b16 %v151
    %v290 = vunpack.c.l.b16 %v152
    %v291 = vunpack.c.l.b16 %v153
    %v292 = vunpack.c.l.b16 %v154
    %v293 = vpack.c.b16 %v290, %v289
    %v294 = vpack.c.b16 %v292, %v291
    %v298 = vsel %vm179, %v147, 0
    %300 = vmatprep.subr.bf16.mxu0 0
    %301 = vmatpush1.bf16.msra.mxu0 %v293
    %302 = vmatprep.subr.bf16.mxu0 0
    %303 = vmatpush1.bf16.msra.mxu0 %v294
    %304 = vmatprep.subr.bf16.mxu0 0
    %305 = vmatpush1.bf16.msra.mxu0 0
    %306 = vmatprep.subr.bf16.mxu0 0
    %307 = vmatpush1.bf16.msra.mxu0 0
    %308 = vmatprep.subr.bf16.mxu0 0
    %309 = vmatpush1.bf16.msra.mxu0 0
    %310 = vmatprep.subr.bf16.mxu0 0
    %311 = vmatpush1.bf16.msra.mxu0 0
    %312 = vmatprep.subr.bf16.mxu0 0
    %313 = vmatpush1.bf16.msra.mxu0 0
    %314 = vmatprep.subr.bf16.mxu0 0
    %315 = vmatpush1.bf16.msra.mxu0 0
    %316 = vmatprep.subr.bf16.mxu0 0
    %317 = vmatpush1.bf16.msra.mxu0 0
    %318 = vmatprep.subr.bf16.mxu0 0
    %319 = vmatpush1.bf16.msra.mxu0 0
    %320 = vmatprep.subr.bf16.mxu0 0
    %321 = vmatpush1.bf16.msra.mxu0 0
    %322 = vmatprep.subr.bf16.mxu0 0
    %323 = vmatpush1.bf16.msra.mxu0 0
    %324 = vmatprep.subr.bf16.mxu0 0
    %325 = vmatpush1.bf16.msra.mxu0 0
    %326 = vmatprep.subr.bf16.mxu0 0
    %327 = vmatpush1.bf16.msra.mxu0 0
    %328 = vmatprep.subr.bf16.mxu0 0
    %329 = vmatpush1.bf16.msra.mxu0 0
    %330 = vmatprep.subr.bf16.mxu0 0
    %331 = vmatpush1.bf16.msra.mxu0 0
    %332 = vmatprep.mubr.bf16.mxu0 0
    %333 = vmatmul.mubr.bf16.gmra.mrb[0].mxu0 %v298
    %v334 = vpop.f32.mrb[0].mxu0
    %v335 = vadd.f32 %v218, %v334
    %v336 = vpop.f32.mrb[0].mxu0
    %v337 = vpop.f32.mrb[0].mxu0
    %v338 = vadd.f32 %v221, %v337
    %v339 = vpop.f32.mrb[0].mxu0
    %340 = vdwg.mxu0
    %v342 = vlaneseq
    %v343 = vshrl.u32 %v342, 7
    %v344 = vsub.s32 0, %v343
    %v345 = vrot.slane %v138, %v344
    %v347 = vadd.f32 %v335, %v345
    %v348 = vadd.f32 %v338, %v345
    %v349 = vxor.u32 %v347, 2147483648
    %v350 = vxor.u32 %v348, 2147483648
    %v351 = vmul.f32 %v349, 1.442695
    %v352 = vpow.pop %v351
    %v353 = vmul.f32 %v350, 1.442695
    %v354 = vpow.pop %v353
    %v355 = vadd.f32 %v352, 1.0
    %v356 = vadd.f32 %v354, 1.0
    %v357 = vrcp.pop %v355
    %v358 = vmul.f32 1.0, %v357
    %v359 = vrcp.pop %v356
    %v360 = vmul.f32 1.0, %v359
    %v365 = vunpack.c.l.b16 %v155
    %v366 = vunpack.c.l.b16 %v156
    %v367 = vunpack.c.l.b16 %v157
    %v368 = vunpack.c.l.b16 %v158
    %v369 = vpack.c.b16 %v366, %v365
    %v370 = vpack.c.b16 %v368, %v367
    %373 = vmatprep.subr.bf16.mxu0 0
    %374 = vmatpush1.bf16.msra.mxu0 %v369
    %375 = vmatprep.subr.bf16.mxu0 0
    %376 = vmatpush1.bf16.msra.mxu0 %v370
    %377 = vmatprep.subr.bf16.mxu0 0
    %378 = vmatpush1.bf16.msra.mxu0 0
    %379 = vmatprep.subr.bf16.mxu0 0
    %380 = vmatpush1.bf16.msra.mxu0 0
    %381 = vmatprep.subr.bf16.mxu0 0
    %382 = vmatpush1.bf16.msra.mxu0 0
    %383 = vmatprep.subr.bf16.mxu0 0
    %384 = vmatpush1.bf16.msra.mxu0 0
    %385 = vmatprep.subr.bf16.mxu0 0
    %386 = vmatpush1.bf16.msra.mxu0 0
    %387 = vmatprep.subr.bf16.mxu0 0
    %388 = vmatpush1.bf16.msra.mxu0 0
    %389 = vmatprep.subr.bf16.mxu0 0
    %390 = vmatpush1.bf16.msra.mxu0 0
    %391 = vmatprep.subr.bf16.mxu0 0
    %392 = vmatpush1.bf16.msra.mxu0 0
    %393 = vmatprep.subr.bf16.mxu0 0
    %394 = vmatpush1.bf16.msra.mxu0 0
    %395 = vmatprep.subr.bf16.mxu0 0
    %396 = vmatpush1.bf16.msra.mxu0 0
    %397 = vmatprep.subr.bf16.mxu0 0
    %398 = vmatpush1.bf16.msra.mxu0 0
    %399 = vmatprep.subr.bf16.mxu0 0
    %400 = vmatpush1.bf16.msra.mxu0 0
    %401 = vmatprep.subr.bf16.mxu0 0
    %402 = vmatpush1.bf16.msra.mxu0 0
    %403 = vmatprep.subr.bf16.mxu0 0
    %404 = vmatpush1.bf16.msra.mxu0 0
    %405 = vmatprep.mubr.bf16.mxu0 0
    %406 = vmatmul.mubr.bf16.gmra.mrb[0].mxu0 %v298
    %v407 = vpop.f32.mrb[0].mxu0
    %v408 = vadd.f32 %v275, %v407
    %v409 = vpop.f32.mrb[0].mxu0
    %v410 = vpop.f32.mrb[0].mxu0
    %v411 = vadd.f32 %v278, %v410
    %v412 = vpop.f32.mrb[0].mxu0
    %413 = vdwg.mxu0
    %v415 = vlaneseq
    %v416 = vshrl.u32 %v415, 7
    %v417 = vsub.s32 0, %v416
    %v418 = vrot.slane %v139, %v417
    %v420 = vadd.f32 %v408, %v418
    %v421 = vadd.f32 %v411, %v418
    %v422 = vxor.u32 %v420, 2147483648
    %v423 = vxor.u32 %v421, 2147483648
    %v424 = vmul.f32 %v422, 1.442695
    %v425 = vpow.pop %v424
    %v426 = vmul.f32 %v423, 1.442695
    %v427 = vpow.pop %v426
    %v428 = vadd.f32 %v425, 1.0
    %v429 = vadd.f32 %v427, 1.0
    %v430 = vrcp.pop %v428
    %v431 = vmul.f32 1.0, %v430
    %v432 = vrcp.pop %v429
    %v433 = vmul.f32 1.0, %v432
    %v435 = vlaneseq
    %v436 = vshrl.u32 %v435, 7
    %v437 = vsub.s32 0, %v436
    %v438 = vrot.slane %v140, %v437
    %v444 = vunpack.c.l.b16 %v159
    %v445 = vunpack.c.l.b16 %v160
    %v446 = vunpack.c.l.b16 %v161
    %v447 = vunpack.c.l.b16 %v162
    %v448 = vpack.c.b16 %v445, %v444
    %v449 = vpack.c.b16 %v447, %v446
    %452 = vmatprep.subr.bf16.mxu0 0
    %453 = vmatpush1.bf16.msra.mxu0 %v448
    %454 = vmatprep.subr.bf16.mxu0 0
    %455 = vmatpush1.bf16.msra.mxu0 %v449
    %456 = vmatprep.subr.bf16.mxu0 0
    %457 = vmatpush1.bf16.msra.mxu0 0
    %458 = vmatprep.subr.bf16.mxu0 0
    %459 = vmatpush1.bf16.msra.mxu0 0
    %460 = vmatprep.subr.bf16.mxu0 0
    %461 = vmatpush1.bf16.msra.mxu0 0
    %462 = vmatprep.subr.bf16.mxu0 0
    %463 = vmatpush1.bf16.msra.mxu0 0
    %464 = vmatprep.subr.bf16.mxu0 0
    %465 = vmatpush1.bf16.msra.mxu0 0
    %466 = vmatprep.subr.bf16.mxu0 0
    %467 = vmatpush1.bf16.msra.mxu0 0
    %468 = vmatprep.subr.bf16.mxu0 0
    %469 = vmatpush1.bf16.msra.mxu0 0
    %470 = vmatprep.subr.bf16.mxu0 0
    %471 = vmatpush1.bf16.msra.mxu0 0
    %472 = vmatprep.subr.bf16.mxu0 0
    %473 = vmatpush1.bf16.msra.mxu0 0
    %474 = vmatprep.subr.bf16.mxu0 0
    %475 = vmatpush1.bf16.msra.mxu0 0
    %476 = vmatprep.subr.bf16.mxu0 0
    %477 = vmatpush1.bf16.msra.mxu0 0
    %478 = vmatprep.subr.bf16.mxu0 0
    %479 = vmatpush1.bf16.msra.mxu0 0
    %480 = vmatprep.subr.bf16.mxu0 0
    %481 = vmatpush1.bf16.msra.mxu0 0
    %482 = vmatprep.subr.bf16.mxu0 0
    %483 = vmatpush1.bf16.msra.mxu0 0
    %484 = vmatprep.mubr.bf16.mxu0 0
    %485 = vmatmul.mubr.bf16.gmra.mrb[0].mxu0 %v298
    %v486 = vpop.f32.mrb[0].mxu0
    %v487 = vadd.f32 %v438, %v486
    %v488 = vpop.f32.mrb[0].mxu0
    %v489 = vpop.f32.mrb[0].mxu0
    %v490 = vadd.f32 %v438, %v489
    %v491 = vpop.f32.mrb[0].mxu0
    %492 = vdwg.mxu0
    %v494 = vlaneseq
    %v495 = vshrl.u32 %v494, 7
    %v496 = vsub.s32 0, %v495
    %v497 = vrot.slane %v141, %v496
    %v503 = vunpack.c.l.b16 %v281
    %v504 = vunpack.c.l.b16 %v282
    %v505 = vunpack.c.l.b16 %v283
    %v506 = vunpack.c.l.b16 %v284
    %v507 = vpack.c.b16 %v504, %v503
    %v508 = vpack.c.b16 %v506, %v505
    %511 = vmatprep.subr.bf16.mxu0 0
    %512 = vmatpush1.bf16.msra.mxu0 %v507
    %513 = vmatprep.subr.bf16.mxu0 0
    %514 = vmatpush1.bf16.msra.mxu0 %v508
    %515 = vmatprep.subr.bf16.mxu0 0
    %516 = vmatpush1.bf16.msra.mxu0 0
    %517 = vmatprep.subr.bf16.mxu0 0
    %518 = vmatpush1.bf16.msra.mxu0 0
    %519 = vmatprep.subr.bf16.mxu0 0
    %520 = vmatpush1.bf16.msra.mxu0 0
    %521 = vmatprep.subr.bf16.mxu0 0
    %522 = vmatpush1.bf16.msra.mxu0 0
    %523 = vmatprep.subr.bf16.mxu0 0
    %524 = vmatpush1.bf16.msra.mxu0 0
    %525 = vmatprep.subr.bf16.mxu0 0
    %526 = vmatpush1.bf16.msra.mxu0 0
    %527 = vmatprep.subr.bf16.mxu0 0
    %528 = vmatpush1.bf16.msra.mxu0 0
    %529 = vmatprep.subr.bf16.mxu0 0
    %530 = vmatpush1.bf16.msra.mxu0 0
    %531 = vmatprep.subr.bf16.mxu0 0
    %532 = vmatpush1.bf16.msra.mxu0 0
    %533 = vmatprep.subr.bf16.mxu0 0
    %534 = vmatpush1.bf16.msra.mxu0 0
    %535 = vmatprep.subr.bf16.mxu0 0
    %536 = vmatpush1.bf16.msra.mxu0 0
    %537 = vmatprep.subr.bf16.mxu0 0
    %538 = vmatpush1.bf16.msra.mxu0 0
    %539 = vmatprep.subr.bf16.mxu0 0
    %540 = vmatpush1.bf16.msra.mxu0 0
    %541 = vmatprep.subr.bf16.mxu0 0
    %542 = vmatpush1.bf16.msra.mxu0 0
    %543 = vmatprep.mubr.bf16.mxu0 0
    %544 = vmatmul.mubr.bf16.gmra.mrb[0].mxu0 %v181
    %v545 = vpop.f32.mrb[0].mxu0
    %v546 = vadd.f32 %v497, %v545
    %v547 = vpop.f32.mrb[0].mxu0
    %v548 = vpop.f32.mrb[0].mxu0
    %v549 = vadd.f32 %v497, %v548
    %v550 = vpop.f32.mrb[0].mxu0
    %551 = vdwg.mxu0
    %v552 = vmul.f32 %v358, %v546
    %v553 = vmul.f32 %v360, %v549
    %v554 = vadd.f32 %v487, %v552
    %v555 = vadd.f32 %v490, %v553
    %v556 = vtanh.pop %v554
    %v557 = vtanh.pop %v555
    %v558 = vsub.f32 1.0, %v431
    %v559 = vsub.f32 1.0, %v433
    %v560 = vmul.f32 %v558, %v556
    %v561 = vmul.f32 %v559, %v557
    %v562 = vmul.f32 %v431, %v148
    %v563 = vmul.f32 %v433, %v149
    %v564 = vadd.f32 %v560, %v562
    %v565 = vadd.f32 %v561, %v563
    %v566 = vpack.c.bf16 %v565, %v564
    %v567 = vld [vmem:[%s12] sm:$0xf]
    %v568 = vld [vmem:[%s12 + $0x4] sm:$0xf]
    %v569 = vld [vmem:[%s12 + $0x8] sm:$0xf]
    %v570 = vld [vmem:[%s12 + $0xc] sm:$0xf]
    %v572 = vlaneseq
    %v573 = vshrl.u32 %v572, 7
    %v574 = vsub.s32 0, %v573
    %v575 = vrot.slane %v142, %v574
    %v581 = vunpack.c.l.b16 %v567
    %v582 = vunpack.c.l.b16 %v568
    %v583 = vunpack.c.l.b16 %v569
    %v584 = vunpack.c.l.b16 %v570
    %v585 = vpack.c.b16 %v582, %v581
    %v586 = vpack.c.b16 %v584, %v583
    %v590 = vsel %vm179, %v566, 0
    %592 = vmatprep.subr.bf16.mxu0 0
    %593 = vmatpush1.bf16.msra.mxu0 %v585
    %594 = vmatprep.subr.bf16.mxu0 0
    %595 = vmatpush1.bf16.msra.mxu0 %v586
    %596 = vmatprep.subr.bf16.mxu0 0
    %597 = vmatpush1.bf16.msra.mxu0 0
    %598 = vmatprep.subr.bf16.mxu0 0
    %599 = vmatpush1.bf16.msra.mxu0 0
    %600 = vmatprep.subr.bf16.mxu0 0
    %601 = vmatpush1.bf16.msra.mxu0 0
    %602 = vmatprep.subr.bf16.mxu0 0
    %603 = vmatpush1.bf16.msra.mxu0 0
    %604 = vmatprep.subr.bf16.mxu0 0
    %605 = vmatpush1.bf16.msra.mxu0 0
    %606 = vmatprep.subr.bf16.mxu0 0
    %607 = vmatpush1.bf16.msra.mxu0 0
    %608 = vmatprep.subr.bf16.mxu0 0
    %609 = vmatpush1.bf16.msra.mxu0 0
    %610 = vmatprep.subr.bf16.mxu0 0
    %611 = vmatpush1.bf16.msra.mxu0 0
    %612 = vmatprep.subr.bf16.mxu0 0
    %613 = vmatpush1.bf16.msra.mxu0 0
    %614 = vmatprep.subr.bf16.mxu0 0
    %615 = vmatpush1.bf16.msra.mxu0 0
    %616 = vmatprep.subr.bf16.mxu0 0
    %617 = vmatpush1.bf16.msra.mxu0 0
    %618 = vmatprep.subr.bf16.mxu0 0
    %619 = vmatpush1.bf16.msra.mxu0 0
    %620 = vmatprep.subr.bf16.mxu0 0
    %621 = vmatpush1.bf16.msra.mxu0 0
    %622 = vmatprep.subr.bf16.mxu0 0
    %623 = vmatpush1.bf16.msra.mxu0 0
    %624 = vmatprep.mubr.bf16.mxu0 0
    %625 = vmatmul.mubr.bf16.gmra.mrb[0].mxu0 %v590
    %v626 = vpop.f32.mrb[0].mxu0
    %v627 = vadd.f32 %v575, %v626
    %v628 = vpop.f32.mrb[0].mxu0
    %v629 = vpop.f32.mrb[0].mxu0
    %v630 = vadd.f32 %v575, %v629
    %v631 = vpop.f32.mrb[0].mxu0
    %632 = vdwg.mxu0
    %vm633 = vcmask 130048
    %v634 = vsel %vm633, %v627, -inf
    %635 = vmax.xlane.f32.xlu0 %v634
    %v636 = vpop.xlane.xlu0 %635
    %v637 = vsel %vm633, %v630, -inf
    %638 = vmax.xlane.f32.xlu0 %v637
    %v639 = vpop.xlane.xlu0 %638
    %vm640 = vcmp.eq.f32.partialorder %v627, %v636
    %vm641 = vcmp.eq.f32.partialorder %v630, %v639
    %v642 = vsel %vm640, %v144, 16
    %v643 = vsel %vm641, %v144, 16
    %v644 = vsel %vm633, %v642, 2147483647
    %v645 = vand.u32 %v644, 65535
    %v646 = vshra.s32 %v644, 16
    %v647 = vcvt.s32.f32 %v645
    %v648 = vcvt.s32.f32 %v646
    %649 = vmin.xlane.f32.xlu0 %v648
    %v650 = vpop.xlane.xlu0 %649
    %vm651 = vcmp.eq.f32.partialorder %v648, %v650
    %v652 = vsel %vm651, %v647, inf
    %653 = vmin.xlane.f32.xlu0 %v652
    %v654 = vpop.xlane.xlu0 %653
    %v655 = vcvt.f32.s32 %v654
    %v656 = vcvt.f32.s32 %v650
    %v657 = vshll.u32 %v656, 16
    %v658 = vadd.s32 %v657, %v655
    %v659 = vsel %vm633, %v643, 2147483647
    %v660 = vand.u32 %v659, 65535
    %v661 = vshra.s32 %v659, 16
    %v662 = vcvt.s32.f32 %v660
    %v663 = vcvt.s32.f32 %v661
    %664 = vmin.xlane.f32.xlu0 %v663
    %v665 = vpop.xlane.xlu0 %664
    %vm666 = vcmp.eq.f32.partialorder %v663, %v665
    %v667 = vsel %vm666, %v662, inf
    %668 = vmin.xlane.f32.xlu0 %v667
    %v669 = vpop.xlane.xlu0 %668
    %v670 = vcvt.f32.s32 %v669
    %v671 = vcvt.f32.s32 %v665
    %v672 = vshll.u32 %v671, 16
    %v673 = vadd.s32 %v672, %v670
    %vm674 = vcmp.eq.s32.totalorder %v144, 0
    %v675 = vsel %vm674, %v658, 0
    %v676 = vsel %vm674, %v673, 0
    %vm677 = vcmp.eq.s32.totalorder %v144, %v658
    %vm678 = vcmp.eq.s32.totalorder %v144, %v673
    %v679 = vsel %vm677, 1, 0
    %v680 = vsel %vm678, 1, 0
    %v681 = vcvt.s32.f32 %v679
    %v682 = vcvt.s32.f32 %v680
    %v683 = vpack.c.bf16 %v682, %v681
    %v684 = vld [vmem:[#allocation12] sm:$0xf]
    %v685 = vld [vmem:[#allocation12 + $0x4] sm:$0xf]
    %v688 = vunpack.c.l.b16 %v684
    %v689 = vunpack.c.l.b16 %v685
    %v690 = vpack.c.b16 %v689, %v688
    %v693 = vsel %vm633, %v683, 0
    %695 = vmatprep.subr.bf16.mxu0 0
    %696 = vmatpush1.bf16.msra.mxu0 %v690
    %697 = vmatprep.subr.bf16.mxu0 0
    %698 = vmatpush1.bf16.msra.mxu0 0
    %699 = vmatprep.subr.bf16.mxu0 0
    %700 = vmatpush1.bf16.msra.mxu0 0
    %701 = vmatprep.subr.bf16.mxu0 0
    %702 = vmatpush1.bf16.msra.mxu0 0
    %703 = vmatprep.subr.bf16.mxu0 0
    %704 = vmatpush1.bf16.msra.mxu0 0
    %705 = vmatprep.subr.bf16.mxu0 0
    %706 = vmatpush1.bf16.msra.mxu0 0
    %707 = vmatprep.subr.bf16.mxu0 0
    %708 = vmatpush1.bf16.msra.mxu0 0
    %709 = vmatprep.subr.bf16.mxu0 0
    %710 = vmatpush1.bf16.msra.mxu0 0
    %711 = vmatprep.subr.bf16.mxu0 0
    %712 = vmatpush1.bf16.msra.mxu0 0
    %713 = vmatprep.subr.bf16.mxu0 0
    %714 = vmatpush1.bf16.msra.mxu0 0
    %715 = vmatprep.subr.bf16.mxu0 0
    %716 = vmatpush1.bf16.msra.mxu0 0
    %717 = vmatprep.subr.bf16.mxu0 0
    %718 = vmatpush1.bf16.msra.mxu0 0
    %719 = vmatprep.subr.bf16.mxu0 0
    %720 = vmatpush1.bf16.msra.mxu0 0
    %721 = vmatprep.subr.bf16.mxu0 0
    %722 = vmatpush1.bf16.msra.mxu0 0
    %723 = vmatprep.subr.bf16.mxu0 0
    %724 = vmatpush1.bf16.msra.mxu0 0
    %725 = vmatprep.subr.bf16.mxu0 0
    %726 = vmatpush1.bf16.msra.mxu0 0
    %727 = vmatprep.mubr.bf16.mxu0 0
    %728 = vmatmul.mubr.bf16.gmra.mrb[0].mxu0 %v693
    %v729 = vpop.f32.mrb[0].mxu0
    %v730 = vadd.f32 0.0, %v729
    %v731 = vpop.f32.mrb[0].mxu0
    %v732 = vpop.f32.mrb[0].mxu0
    %v733 = vadd.f32 0.0, %v732
    %v734 = vpop.f32.mrb[0].mxu0
    %735 = vdwg.mxu0
    %v736 = vpack.c.bf16 %v733, %v730
    %737 = vmatprep.subr.bf16.mxu0 0
    %738 = vmatpush1.bf16.msra.mxu0 %v175
    %739 = vmatprep.subr.bf16.mxu0 0
    %740 = vmatpush1.bf16.msra.mxu0 %v176
    %741 = vmatprep.subr.bf16.mxu0 0
    %742 = vmatpush1.bf16.msra.mxu0 0
    %743 = vmatprep.subr.bf16.mxu0 0
    %744 = vmatpush1.bf16.msra.mxu0 0
    %745 = vmatprep.subr.bf16.mxu0 0
    %746 = vmatpush1.bf16.msra.mxu0 0
    %747 = vmatprep.subr.bf16.mxu0 0
    %748 = vmatpush1.bf16.msra.mxu0 0
    %749 = vmatprep.subr.bf16.mxu0 0
    %750 = vmatpush1.bf16.msra.mxu0 0
    %751 = vmatprep.subr.bf16.mxu0 0
    %752 = vmatpush1.bf16.msra.mxu0 0
    %753 = vmatprep.subr.bf16.mxu0 0
    %754 = vmatpush1.bf16.msra.mxu0 0
    %755 = vmatprep.subr.bf16.mxu0 0
    %756 = vmatpush1.bf16.msra.mxu0 0
    %757 = vmatprep.subr.bf16.mxu0 0
    %758 = vmatpush1.bf16.msra.mxu0 0
    %759 = vmatprep.subr.bf16.mxu0 0
    %760 = vmatpush1.bf16.msra.mxu0 0
    %761 = vmatprep.subr.bf16.mxu0 0
    %762 = vmatpush1.bf16.msra.mxu0 0
    %763 = vmatprep.subr.bf16.mxu0 0
    %764 = vmatpush1.bf16.msra.mxu0 0
    %765 = vmatprep.subr.bf16.mxu0 0
    %766 = vmatpush1.bf16.msra.mxu0 0
    %767 = vmatprep.subr.bf16.mxu0 0
    %768 = vmatpush1.bf16.msra.mxu0 0
    %769 = vmatprep.mubr.bf16.mxu0 0
    %770 = vmatmul.mubr.bf16.gmra.mrb[0].mxu0 %v590
    %v771 = vpop.f32.mrb[0].mxu0
    %v772 = vadd.f32 0.0, %v771
    %v773 = vpop.f32.mrb[0].mxu0
    %v774 = vpop.f32.mrb[0].mxu0
    %v775 = vadd.f32 0.0, %v774
    %v776 = vpop.f32.mrb[0].mxu0
    %777 = vdwg.mxu0
    %778 = vmatprep.subr.bf16.mxu0 0
    %779 = vmatpush1.bf16.msra.mxu0 %v236
    %780 = vmatprep.subr.bf16.mxu0 0
    %781 = vmatpush1.bf16.msra.mxu0 %v237
    %782 = vmatprep.subr.bf16.mxu0 0
    %783 = vmatpush1.bf16.msra.mxu0 0
    %784 = vmatprep.subr.bf16.mxu0 0
    %785 = vmatpush1.bf16.msra.mxu0 0
    %786 = vmatprep.subr.bf16.mxu0 0
    %787 = vmatpush1.bf16.msra.mxu0 0
    %788 = vmatprep.subr.bf16.mxu0 0
    %789 = vmatpush1.bf16.msra.mxu0 0
    %790 = vmatprep.subr.bf16.mxu0 0
    %791 = vmatpush1.bf16.msra.mxu0 0
    %792 = vmatprep.subr.bf16.mxu0 0
    %793 = vmatpush1.bf16.msra.mxu0 0
    %794 = vmatprep.subr.bf16.mxu0 0
    %795 = vmatpush1.bf16.msra.mxu0 0
    %796 = vmatprep.subr.bf16.mxu0 0
    %797 = vmatpush1.bf16.msra.mxu0 0
    %798 = vmatprep.subr.bf16.mxu0 0
    %799 = vmatpush1.bf16.msra.mxu0 0
    %800 = vmatprep.subr.bf16.mxu0 0
    %801 = vmatpush1.bf16.msra.mxu0 0
    %802 = vmatprep.subr.bf16.mxu0 0
    %803 = vmatpush1.bf16.msra.mxu0 0
    %804 = vmatprep.subr.bf16.mxu0 0
    %805 = vmatpush1.bf16.msra.mxu0 0
    %806 = vmatprep.subr.bf16.mxu0 0
    %807 = vmatpush1.bf16.msra.mxu0 0
    %808 = vmatprep.subr.bf16.mxu0 0
    %809 = vmatpush1.bf16.msra.mxu0 0
    %810 = vmatprep.mubr.bf16.mxu0 0
    %811 = vmatmul.mubr.bf16.gmra.mrb[0].mxu0 %v590
    %v812 = vpop.f32.mrb[0].mxu0
    %v813 = vadd.f32 0.0, %v812
    %v814 = vpop.f32.mrb[0].mxu0
    %v815 = vpop.f32.mrb[0].mxu0
    %v816 = vadd.f32 0.0, %v815
    %v817 = vpop.f32.mrb[0].mxu0
    %818 = vdwg.mxu0
    %v820 = vsel %vm179, %v736, 0
    %822 = vmatprep.subr.bf16.mxu0 0
    %823 = vmatpush1.bf16.msra.mxu0 %v293
    %824 = vmatprep.subr.bf16.mxu0 0
    %825 = vmatpush1.bf16.msra.mxu0 %v294
    %826 = vmatprep.subr.bf16.mxu0 0
    %827 = vmatpush1.bf16.msra.mxu0 0
    %828 = vmatprep.subr.bf16.mxu0 0
    %829 = vmatpush1.bf16.msra.mxu0 0
    %830 = vmatprep.subr.bf16.mxu0 0
    %831 = vmatpush1.bf16.msra.mxu0 0
    %832 = vmatprep.subr.bf16.mxu0 0
    %833 = vmatpush1.bf16.msra.mxu0 0
    %834 = vmatprep.subr.bf16.mxu0 0
    %835 = vmatpush1.bf16.msra.mxu0 0
    %836 = vmatprep.subr.bf16.mxu0 0
    %837 = vmatpush1.bf16.msra.mxu0 0
    %838 = vmatprep.subr.bf16.mxu0 0
    %839 = vmatpush1.bf16.msra.mxu0 0
    %840 = vmatprep.subr.bf16.mxu0 0
    %841 = vmatpush1.bf16.msra.mxu0 0
    %842 = vmatprep.subr.bf16.mxu0 0
    %843 = vmatpush1.bf16.msra.mxu0 0
    %844 = vmatprep.subr.bf16.mxu0 0
    %845 = vmatpush1.bf16.msra.mxu0 0
    %846 = vmatprep.subr.bf16.mxu0 0
    %847 = vmatpush1.bf16.msra.mxu0 0
    %848 = vmatprep.subr.bf16.mxu0 0
    %849 = vmatpush1.bf16.msra.mxu0 0
    %850 = vmatprep.subr.bf16.mxu0 0
    %851 = vmatpush1.bf16.msra.mxu0 0
    %852 = vmatprep.subr.bf16.mxu0 0
    %853 = vmatpush1.bf16.msra.mxu0 0
    %854 = vmatprep.mubr.bf16.mxu0 0
    %855 = vmatmul.mubr.bf16.gmra.mrb[0].mxu0 %v820
    %v856 = vpop.f32.mrb[0].mxu0
    %v857 = vadd.f32 %v772, %v856
    %v858 = vpop.f32.mrb[0].mxu0
    %v859 = vpop.f32.mrb[0].mxu0
    %v860 = vadd.f32 %v775, %v859
    %v861 = vpop.f32.mrb[0].mxu0
    %862 = vdwg.mxu0
    %v863 = vadd.f32 %v857, %v345
    %v864 = vadd.f32 %v860, %v345
    %v865 = vxor.u32 %v863, 2147483648
    %v866 = vxor.u32 %v864, 2147483648
    %v867 = vmul.f32 %v865, 1.442695
    %v868 = vpow.pop %v867
    %v869 = vmul.f32 %v866, 1.442695
    %v870 = vpow.pop %v869
    %v871 = vadd.f32 %v868, 1.0
    %v872 = vadd.f32 %v870, 1.0
    %v873 = vrcp.pop %v871
    %v874 = vmul.f32 1.0, %v873
    %v875 = vrcp.pop %v872
    %v876 = vmul.f32 1.0, %v875
    %877 = vmatprep.subr.bf16.mxu0 0
    %878 = vmatpush1.bf16.msra.mxu0 %v369
    %879 = vmatprep.subr.bf16.mxu0 0
    %880 = vmatpush1.bf16.msra.mxu0 %v370
    %881 = vmatprep.subr.bf16.mxu0 0
    %882 = vmatpush1.bf16.msra.mxu0 0
    %883 = vmatprep.subr.bf16.mxu0 0
    %884 = vmatpush1.bf16.msra.mxu0 0
    %885 = vmatprep.subr.bf16.mxu0 0
    %886 = vmatpush1.bf16.msra.mxu0 0
    %887 = vmatprep.subr.bf16.mxu0 0
    %888 = vmatpush1.bf16.msra.mxu0 0
    %889 = vmatprep.subr.bf16.mxu0 0
    %890 = vmatpush1.bf16.msra.mxu0 0
    %891 = vmatprep.subr.bf16.mxu0 0
    %892 = vmatpush1.bf16.msra.mxu0 0
    %893 = vmatprep.subr.bf16.mxu0 0
    %894 = vmatpush1.bf16.msra.mxu0 0
    %895 = vmatprep.subr.bf16.mxu0 0
    %896 = vmatpush1.bf16.msra.mxu0 0
    %897 = vmatprep.subr.bf16.mxu0 0
    %898 = vmatpush1.bf16.msra.mxu0 0
    %899 = vmatprep.subr.bf16.mxu0 0
    %900 = vmatpush1.bf16.msra.mxu0 0
    %901 = vmatprep.subr.bf16.mxu0 0
    %902 = vmatpush1.bf16.msra.mxu0 0
    %903 = vmatprep.subr.bf16.mxu0 0
    %904 = vmatpush1.bf16.msra.mxu0 0
    %905 = vmatprep.subr.bf16.mxu0 0
    %906 = vmatpush1.bf16.msra.mxu0 0
    %907 = vmatprep.subr.bf16.mxu0 0
    %908 = vmatpush1.bf16.msra.mxu0 0
    %909 = vmatprep.mubr.bf16.mxu0 0
    %910 = vmatmul.mubr.bf16.gmra.mrb[0].mxu0 %v820
    %v911 = vpop.f32.mrb[0].mxu0
    %v912 = vadd.f32 %v813, %v911
    %v913 = vpop.f32.mrb[0].mxu0
    %v914 = vpop.f32.mrb[0].mxu0
    %v915 = vadd.f32 %v816, %v914
    %v916 = vpop.f32.mrb[0].mxu0
    %917 = vdwg.mxu0
    %v918 = vadd.f32 %v912, %v418
    %v919 = vadd.f32 %v915, %v418
    %v920 = vxor.u32 %v918, 2147483648
    %v921 = vxor.u32 %v919, 2147483648
    %v922 = vmul.f32 %v920, 1.442695
    %v923 = vpow.pop %v922
    %v924 = vmul.f32 %v921, 1.442695
    %v925 = vpow.pop %v924
    %v926 = vadd.f32 %v923, 1.0
    %v927 = vadd.f32 %v925, 1.0
    %v928 = vrcp.pop %v926
    %v929 = vmul.f32 1.0, %v928
    %v930 = vrcp.pop %v927
    %v931 = vmul.f32 1.0, %v930
    %932 = vmatprep.subr.bf16.mxu0 0
    %933 = vmatpush1.bf16.msra.mxu0 %v448
    %934 = vmatprep.subr.bf16.mxu0 0
    %935 = vmatpush1.bf16.msra.mxu0 %v449
    %936 = vmatprep.subr.bf16.mxu0 0
    %937 = vmatpush1.bf16.msra.mxu0 0
    %938 = vmatprep.subr.bf16.mxu0 0
    %939 = vmatpush1.bf16.msra.mxu0 0
    %940 = vmatprep.subr.bf16.mxu0 0
    %941 = vmatpush1.bf16.msra.mxu0 0
    %942 = vmatprep.subr.bf16.mxu0 0
    %943 = vmatpush1.bf16.msra.mxu0 0
    %944 = vmatprep.subr.bf16.mxu0 0
    %945 = vmatpush1.bf16.msra.mxu0 0
    %946 = vmatprep.subr.bf16.mxu0 0
    %947 = vmatpush1.bf16.msra.mxu0 0
    %948 = vmatprep.subr.bf16.mxu0 0
    %949 = vmatpush1.bf16.msra.mxu0 0
    %950 = vmatprep.subr.bf16.mxu0 0
    %951 = vmatpush1.bf16.msra.mxu0 0
    %952 = vmatprep.subr.bf16.mxu0 0
    %953 = vmatpush1.bf16.msra.mxu0 0
    %954 = vmatprep.subr.bf16.mxu0 0
    %955 = vmatpush1.bf16.msra.mxu0 0
    %956 = vmatprep.subr.bf16.mxu0 0
    %957 = vmatpush1.bf16.msra.mxu0 0
    %958 = vmatprep.subr.bf16.mxu0 0
    %959 = vmatpush1.bf16.msra.mxu0 0
    %960 = vmatprep.subr.bf16.mxu0 0
    %961 = vmatpush1.bf16.msra.mxu0 0
    %962 = vmatprep.subr.bf16.mxu0 0
    %963 = vmatpush1.bf16.msra.mxu0 0
    %964 = vmatprep.mubr.bf16.mxu0 0
    %965 = vmatmul.mubr.bf16.gmra.mrb[0].mxu0 %v820
    %v966 = vpop.f32.mrb[0].mxu0
    %v967 = vadd.f32 %v438, %v966
    %v968 = vpop.f32.mrb[0].mxu0
    %v969 = vpop.f32.mrb[0].mxu0
    %v970 = vadd.f32 %v438, %v969
    %v971 = vpop.f32.mrb[0].mxu0
    %972 = vdwg.mxu0
    %973 = vmatprep.subr.bf16.mxu0 0
    %974 = vmatpush1.bf16.msra.mxu0 %v507
    %975 = vmatprep.subr.bf16.mxu0 0
    %976 = vmatpush1.bf16.msra.mxu0 %v508
    %977 = vmatprep.subr.bf16.mxu0 0
    %978 = vmatpush1.bf16.msra.mxu0 0
    %979 = vmatprep.subr.bf16.mxu0 0
    %980 = vmatpush1.bf16.msra.mxu0 0
    %981 = vmatprep.subr.bf16.mxu0 0
    %982 = vmatpush1.bf16.msra.mxu0 0
    %983 = vmatprep.subr.bf16.mxu0 0
    %984 = vmatpush1.bf16.msra.mxu0 0
    %985 = vmatprep.subr.bf16.mxu0 0
    %986 = vmatpush1.bf16.msra.mxu0 0
    %987 = vmatprep.subr.bf16.mxu0 0
    %988 = vmatpush1.bf16.msra.mxu0 0
    %989 = vmatprep.subr.bf16.mxu0 0
    %990 = vmatpush1.bf16.msra.mxu0 0
    %991 = vmatprep.subr.bf16.mxu0 0
    %992 = vmatpush1.bf16.msra.mxu0 0
    %993 = vmatprep.subr.bf16.mxu0 0
    %994 = vmatpush1.bf16.msra.mxu0 0
    %995 = vmatprep.subr.bf16.mxu0 0
    %996 = vmatpush1.bf16.msra.mxu0 0
    %997 = vmatprep.subr.bf16.mxu0 0
    %998 = vmatpush1.bf16.msra.mxu0 0
    %999 = vmatprep.subr.bf16.mxu0 0
    %1000 = vmatpush1.bf16.msra.mxu0 0
    %1001 = vmatprep.subr.bf16.mxu0 0
    %1002 = vmatpush1.bf16.msra.mxu0 0
    %1003 = vmatprep.subr.bf16.mxu0 0
    %1004 = vmatpush1.bf16.msra.mxu0 0
    %1005 = vmatprep.mubr.bf16.mxu0 0
    %1006 = vmatmul.mubr.bf16.gmra.mrb[0].mxu0 %v590
    %v1007 = vpop.f32.mrb[0].mxu0
    %v1008 = vadd.f32 %v497, %v1007
    %v1009 = vpop.f32.mrb[0].mxu0
    %v1010 = vpop.f32.mrb[0].mxu0
    %v1011 = vadd.f32 %v497, %v1010
    %v1012 = vpop.f32.mrb[0].mxu0
    %1013 = vdwg.mxu0
    %v1014 = vmul.f32 %v874, %v1008
    %v1015 = vmul.f32 %v876, %v1011
    %v1016 = vadd.f32 %v967, %v1014
    %v1017 = vadd.f32 %v970, %v1015
    %v1018 = vtanh.pop %v1016
    %v1019 = vtanh.pop %v1017
    %v1020 = vsub.f32 1.0, %v929
    %v1021 = vsub.f32 1.0, %v931
    %v1022 = vmul.f32 %v1020, %v1018
    %v1023 = vmul.f32 %v1021, %v1019
    %v1024 = vmul.f32 %v929, %v564
    %v1025 = vmul.f32 %v931, %v565
    %v1026 = vadd.f32 %v1022, %v1024
    %v1027 = vadd.f32 %v1023, %v1025
    %v1028 = vpack.c.bf16 %v1027, %v1026
    %v1030 = vsel %vm179, %v1028, 0
    %1032 = vmatprep.subr.bf16.mxu0 0
    %1033 = vmatpush1.bf16.msra.mxu0 %v585
    %1034 = vmatprep.subr.bf16.mxu0 0
    %1035 = vmatpush1.bf16.msra.mxu0 %v586
    %1036 = vmatprep.subr.bf16.mxu0 0
    %1037 = vmatpush1.bf16.msra.mxu0 0
    %1038 = vmatprep.subr.bf16.mxu0 0
    %1039 = vmatpush1.bf16.msra.mxu0 0
    %1040 = vmatprep.subr.bf16.mxu0 0
    %1041 = vmatpush1.bf16.msra.mxu0 0
    %1042 = vmatprep.subr.bf16.mxu0 0
    %1043 = vmatpush1.bf16.msra.mxu0 0
    %1044 = vmatprep.subr.bf16.mxu0 0
    %1045 = vmatpush1.bf16.msra.mxu0 0
    %1046 = vmatprep.subr.bf16.mxu0 0
    %1047 = vmatpush1.bf16.msra.mxu0 0
    %1048 = vmatprep.subr.bf16.mxu0 0
    %1049 = vmatpush1.bf16.msra.mxu0 0
    %1050 = vmatprep.subr.bf16.mxu0 0
    %1051 = vmatpush1.bf16.msra.mxu0 0
    %1052 = vmatprep.subr.bf16.mxu0 0
    %1053 = vmatpush1.bf16.msra.mxu0 0
    %1054 = vmatprep.subr.bf16.mxu0 0
    %1055 = vmatpush1.bf16.msra.mxu0 0
    %1056 = vmatprep.subr.bf16.mxu0 0
    %1057 = vmatpush1.bf16.msra.mxu0 0
    %1058 = vmatprep.subr.bf16.mxu0 0
    %1059 = vmatpush1.bf16.msra.mxu0 0
    %1060 = vmatprep.subr.bf16.mxu0 0
    %1061 = vmatpush1.bf16.msra.mxu0 0
    %1062 = vmatprep.subr.bf16.mxu0 0
    %1063 = vmatpush1.bf16.msra.mxu0 0
    %1064 = vmatprep.mubr.bf16.mxu0 0
    %1065 = vmatmul.mubr.bf16.gmra.mrb[0].mxu0 %v1030
    %v1066 = vpop.f32.mrb[0].mxu0
    %v1067 = vadd.f32 %v575, %v1066
    %v1068 = vpop.f32.mrb[0].mxu0
    %v1069 = vpop.f32.mrb[0].mxu0
    %v1070 = vadd.f32 %v575, %v1069
    %v1071 = vpop.f32.mrb[0].mxu0
    %1072 = vdwg.mxu0
    %v1073 = vsel %vm633, %v1067, -inf
    %1074 = vmax.xlane.f32.xlu0 %v1073
    %v1075 = vpop.xlane.xlu0 %1074
    %v1076 = vsel %vm633, %v1070, -inf
    %1077 = vmax.xlane.f32.xlu0 %v1076
    %v1078 = vpop.xlane.xlu0 %1077
    %vm1079 = vcmp.eq.f32.partialorder %v1067, %v1075
    %vm1080 = vcmp.eq.f32.partialorder %v1070, %v1078
    %v1081 = vsel %vm1079, %v144, 16
    %v1082 = vsel %vm1080, %v144, 16
    %v1083 = vsel %vm633, %v1081, 2147483647
    %v1084 = vand.u32 %v1083, 65535
    %v1085 = vshra.s32 %v1083, 16
    %v1086 = vcvt.s32.f32 %v1084
    %v1087 = vcvt.s32.f32 %v1085
    %1088 = vmin.xlane.f32.xlu0 %v1087
    %v1089 = vpop.xlane.xlu0 %1088
    %vm1090 = vcmp.eq.f32.partialorder %v1087, %v1089
    %v1091 = vsel %vm1090, %v1086, inf
    %1092 = vmin.xlane.f32.xlu0 %v1091
    %v1093 = vpop.xlane.xlu0 %1092
    %v1094 = vcvt.f32.s32 %v1093
    %v1095 = vcvt.f32.s32 %v1089
    %v1096 = vshll.u32 %v1095, 16
    %v1097 = vadd.s32 %v1096, %v1094
    %v1098 = vsel %vm633, %v1082, 2147483647
    %v1099 = vand.u32 %v1098, 65535
    %v1100 = vshra.s32 %v1098, 16
    %v1101 = vcvt.s32.f32 %v1099
    %v1102 = vcvt.s32.f32 %v1100
    %1103 = vmin.xlane.f32.xlu0 %v1102
    %v1104 = vpop.xlane.xlu0 %1103
    %vm1105 = vcmp.eq.f32.partialorder %v1102, %v1104
    %v1106 = vsel %vm1105, %v1101, inf
    %1107 = vmin.xlane.f32.xlu0 %v1106
    %v1108 = vpop.xlane.xlu0 %1107
    %v1109 = vcvt.f32.s32 %v1108
    %v1110 = vcvt.f32.s32 %v1104
    %v1111 = vshll.u32 %v1110, 16
    %v1112 = vadd.s32 %v1111, %v1109
    %vm1113 = vcmp.eq.s32.totalorder %v144, 1
    %v1114 = vsel %vm1113, %v1097, %v675
    %v1115 = vsel %vm1113, %v1112, %v676
    %vm1116 = vcmp.eq.s32.totalorder %v144, %v1097
    %vm1117 = vcmp.eq.s32.totalorder %v144, %v1112
    %v1118 = vsel %vm1116, 1, 0
    %v1119 = vsel %vm1117, 1, 0
    %v1120 = vcvt.s32.f32 %v1118
    %v1121 = vcvt.s32.f32 %v1119
    %v1122 = vpack.c.bf16 %v1121, %v1120
    %v1124 = vsel %vm633, %v1122, 0
    %1126 = vmatprep.subr.bf16.mxu0 0
    %1127 = vmatpush1.bf16.msra.mxu0 %v690
    %1128 = vmatprep.subr.bf16.mxu0 0
    %1129 = vmatpush1.bf16.msra.mxu0 0
    %1130 = vmatprep.subr.bf16.mxu0 0
    %1131 = vmatpush1.bf16.msra.mxu0 0
    %1132 = vmatprep.subr.bf16.mxu0 0
    %1133 = vmatpush1.bf16.msra.mxu0 0
    %1134 = vmatprep.subr.bf16.mxu0 0
    %1135 = vmatpush1.bf16.msra.mxu0 0
    %1136 = vmatprep.subr.bf16.mxu0 0
    %1137 = vmatpush1.bf16.msra.mxu0 0
    %1138 = vmatprep.subr.bf16.mxu0 0
    %1139 = vmatpush1.bf16.msra.mxu0 0
    %1140 = vmatprep.subr.bf16.mxu0 0
    %1141 = vmatpush1.bf16.msra.mxu0 0
    %1142 = vmatprep.subr.bf16.mxu0 0
    %1143 = vmatpush1.bf16.msra.mxu0 0
    %1144 = vmatprep.subr.bf16.mxu0 0
    %1145 = vmatpush1.bf16.msra.mxu0 0
    %1146 = vmatprep.subr.bf16.mxu0 0
    %1147 = vmatpush1.bf16.msra.mxu0 0
    %1148 = vmatprep.subr.bf16.mxu0 0
    %1149 = vmatpush1.bf16.msra.mxu0 0
    %1150 = vmatprep.subr.bf16.mxu0 0
    %1151 = vmatpush1.bf16.msra.mxu0 0
    %1152 = vmatprep.subr.bf16.mxu0 0
    %1153 = vmatpush1.bf16.msra.mxu0 0
    %1154 = vmatprep.subr.bf16.mxu0 0
    %1155 = vmatpush1.bf16.msra.mxu0 0
    %1156 = vmatprep.subr.bf16.mxu0 0
    %1157 = vmatpush1.bf16.msra.mxu0 0
    %1158 = vmatprep.mubr.bf16.mxu0 0
    %1159 = vmatmul.mubr.bf16.gmra.mrb[0].mxu0 %v1124
    %v1160 = vpop.f32.mrb[0].mxu0
    %v1161 = vadd.f32 0.0, %v1160
    %v1162 = vpop.f32.mrb[0].mxu0
    %v1163 = vpop.f32.mrb[0].mxu0
    %v1164 = vadd.f32 0.0, %v1163
    %v1165 = vpop.f32.mrb[0].mxu0
    %1166 = vdwg.mxu0
    %v1167 = vpack.c.bf16 %v1164, %v1161
    %1168 = vmatprep.subr.bf16.mxu0 0
    %1169 = vmatpush1.bf16.msra.mxu0 %v175
    %1170 = vmatprep.subr.bf16.mxu0 0
    %1171 = vmatpush1.bf16.msra.mxu0 %v176
    %1172 = vmatprep.subr.bf16.mxu0 0
    %1173 = vmatpush1.bf16.msra.mxu0 0
    %1174 = vmatprep.subr.bf16.mxu0 0
    %1175 = vmatpush1.bf16.msra.mxu0 0
    %1176 = vmatprep.subr.bf16.mxu0 0
    %1177 = vmatpush1.bf16.msra.mxu0 0
    %1178 = vmatprep.subr.bf16.mxu0 0
    %1179 = vmatpush1.bf16.msra.mxu0 0
    %1180 = vmatprep.subr.bf16.mxu0 0
    %1181 = vmatpush1.bf16.msra.mxu0 0
    %1182 = vmatprep.subr.bf16.mxu0 0
    %1183 = vmatpush1.bf16.msra.mxu0 0
    %1184 = vmatprep.subr.bf16.mxu0 0
    %1185 = vmatpush1.bf16.msra.mxu0 0
    %1186 = vmatprep.subr.bf16.mxu0 0
    %1187 = vmatpush1.bf16.msra.mxu0 0
    %1188 = vmatprep.subr.bf16.mxu0 0
    %1189 = vmatpush1.bf16.msra.mxu0 0
    %1190 = vmatprep.subr.bf16.mxu0 0
    %1191 = vmatpush1.bf16.msra.mxu0 0
    %1192 = vmatprep.subr.bf16.mxu0 0
    %1193 = vmatpush1.bf16.msra.mxu0 0
    %1194 = vmatprep.subr.bf16.mxu0 0
    %1195 = vmatpush1.bf16.msra.mxu0 0
    %1196 = vmatprep.subr.bf16.mxu0 0
    %1197 = vmatpush1.bf16.msra.mxu0 0
    %1198 = vmatprep.subr.bf16.mxu0 0
    %1199 = vmatpush1.bf16.msra.mxu0 0
    %1200 = vmatprep.mubr.bf16.mxu0 0
    %1201 = vmatmul.mubr.bf16.gmra.mrb[0].mxu0 %v1030
    %v1202 = vpop.f32.mrb[0].mxu0
    %v1203 = vadd.f32 0.0, %v1202
    %v1204 = vpop.f32.mrb[0].mxu0
    %v1205 = vpop.f32.mrb[0].mxu0
    %v1206 = vadd.f32 0.0, %v1205
    %v1207 = vpop.f32.mrb[0].mxu0
    %1208 = vdwg.mxu0
    %1209 = vmatprep.subr.bf16.mxu0 0
    %1210 = vmatpush1.bf16.msra.mxu0 %v236
    %1211 = vmatprep.subr.bf16.mxu0 0
    %1212 = vmatpush1.bf16.msra.mxu0 %v237
    %1213 = vmatprep.subr.bf16.mxu0 0
    %1214 = vmatpush1.bf16.msra.mxu0 0
    %1215 = vmatprep.subr.bf16.mxu0 0
    %1216 = vmatpush1.bf16.msra.mxu0 0
    %1217 = vmatprep.subr.bf16.mxu0 0
    %1218 = vmatpush1.bf16.msra.mxu0 0
    %1219 = vmatprep.subr.bf16.mxu0 0
    %1220 = vmatpush1.bf16.msra.mxu0 0
    %1221 = vmatprep.subr.bf16.mxu0 0
    %1222 = vmatpush1.bf16.msra.mxu0 0
    %1223 = vmatprep.subr.bf16.mxu0 0
    %1224 = vmatpush1.bf16.msra.mxu0 0
    %1225 = vmatprep.subr.bf16.mxu0 0
    %1226 = vmatpush1.bf16.msra.mxu0 0
    %1227 = vmatprep.subr.bf16.mxu0 0
    %1228 = vmatpush1.bf16.msra.mxu0 0
    %1229 = vmatprep.subr.bf16.mxu0 0
    %1230 = vmatpush1.bf16.msra.mxu0 0
    %1231 = vmatprep.subr.bf16.mxu0 0
    %1232 = vmatpush1.bf16.msra.mxu0 0
    %1233 = vmatprep.subr.bf16.mxu0 0
    %1234 = vmatpush1.bf16.msra.mxu0 0
    %1235 = vmatprep.subr.bf16.mxu0 0
    %1236 = vmatpush1.bf16.msra.mxu0 0
    %1237 = vmatprep.subr.bf16.mxu0 0
    %1238 = vmatpush1.bf16.msra.mxu0 0
    %1239 = vmatprep.subr.bf16.mxu0 0
    %1240 = vmatpush1.bf16.msra.mxu0 0
    %1241 = vmatprep.mubr.bf16.mxu0 0
    %1242 = vmatmul.mubr.bf16.gmra.mrb[0].mxu0 %v1030
    %v1243 = vpop.f32.mrb[0].mxu0
    %v1244 = vadd.f32 0.0, %v1243
    %v1245 = vpop.f32.mrb[0].mxu0
    %v1246 = vpop.f32.mrb[0].mxu0
    %v1247 = vadd.f32 0.0, %v1246
    %v1248 = vpop.f32.mrb[0].mxu0
    %1249 = vdwg.mxu0
    %v1251 = vsel %vm179, %v1167, 0
    %1253 = vmatprep.subr.bf16.mxu0 0
    %1254 = vmatpush1.bf16.msra.mxu0 %v293
    %1255 = vmatprep.subr.bf16.mxu0 0
    %1256 = vmatpush1.bf16.msra.mxu0 %v294
    %1257 = vmatprep.subr.bf16.mxu0 0
    %1258 = vmatpush1.bf16.msra.mxu0 0
    %1259 = vmatprep.subr.bf16.mxu0 0
    %1260 = vmatpush1.bf16.msra.mxu0 0
    %1261 = vmatprep.subr.bf16.mxu0 0
    %1262 = vmatpush1.bf16.msra.mxu0 0
    %1263 = vmatprep.subr.bf16.mxu0 0
    %1264 = vmatpush1.bf16.msra.mxu0 0
    %1265 = vmatprep.subr.bf16.mxu0 0
    %1266 = vmatpush1.bf16.msra.mxu0 0
    %1267 = vmatprep.subr.bf16.mxu0 0
    %1268 = vmatpush1.bf16.msra.mxu0 0
    %1269 = vmatprep.subr.bf16.mxu0 0
    %1270 = vmatpush1.bf16.msra.mxu0 0
    %1271 = vmatprep.subr.bf16.mxu0 0
    %1272 = vmatpush1.bf16.msra.mxu0 0
    %1273 = vmatprep.subr.bf16.mxu0 0
    %1274 = vmatpush1.bf16.msra.mxu0 0
    %1275 = vmatprep.subr.bf16.mxu0 0
    %1276 = vmatpush1.bf16.msra.mxu0 0
    %1277 = vmatprep.subr.bf16.mxu0 0
    %1278 = vmatpush1.bf16.msra.mxu0 0
    %1279 = vmatprep.subr.bf16.mxu0 0
    %1280 = vmatpush1.bf16.msra.mxu0 0
    %1281 = vmatprep.subr.bf16.mxu0 0
    %1282 = vmatpush1.bf16.msra.mxu0 0
    %1283 = vmatprep.subr.bf16.mxu0 0
    %1284 = vmatpush1.bf16.msra.mxu0 0
    %1285 = vmatprep.mubr.bf16.mxu0 0
    %1286 = vmatmul.mubr.bf16.gmra.mrb[0].mxu0 %v1251
    %v1287 = vpop.f32.mrb[0].mxu0
    %v1288 = vadd.f32 %v1203, %v1287
    %v1289 = vpop.f32.mrb[0].mxu0
    %v1290 = vpop.f32.mrb[0].mxu0
    %v1291 = vadd.f32 %v1206, %v1290
    %v1292 = vpop.f32.mrb[0].mxu0
    %1293 = vdwg.mxu0
    %v1294 = vadd.f32 %v1288, %v345
    %v1295 = vadd.f32 %v1291, %v345
    %v1296 = vxor.u32 %v1294, 2147483648
    %v1297 = vxor.u32 %v1295, 2147483648
    %v1298 = vmul.f32 %v1296, 1.442695
    %v1299 = vpow.pop %v1298
    %v1300 = vmul.f32 %v1297, 1.442695
    %v1301 = vpow.pop %v1300
    %v1302 = vadd.f32 %v1299, 1.0
    %v1303 = vadd.f32 %v1301, 1.0
    %v1304 = vrcp.pop %v1302
    %v1305 = vmul.f32 1.0, %v1304
    %v1306 = vrcp.pop %v1303
    %v1307 = vmul.f32 1.0, %v1306
    %1308 = vmatprep.subr.bf16.mxu0 0
    %1309 = vmatpush1.bf16.msra.mxu0 %v369
    %1310 = vmatprep.subr.bf16.mxu0 0
    %1311 = vmatpush1.bf16.msra.mxu0 %v370
    %1312 = vmatprep.subr.bf16.mxu0 0
    %1313 = vmatpush1.bf16.msra.mxu0 0
    %1314 = vmatprep.subr.bf16.mxu0 0
    %1315 = vmatpush1.bf16.msra.mxu0 0
    %1316 = vmatprep.subr.bf16.mxu0 0
    %1317 = vmatpush1.bf16.msra.mxu0 0
    %1318 = vmatprep.subr.bf16.mxu0 0
    %1319 = vmatpush1.bf16.msra.mxu0 0
    %1320 = vmatprep.subr.bf16.mxu0 0
    %1321 = vmatpush1.bf16.msra.mxu0 0
    %1322 = vmatprep.subr.bf16.mxu0 0
    %1323 = vmatpush1.bf16.msra.mxu0 0
    %1324 = vmatprep.subr.bf16.mxu0 0
    %1325 = vmatpush1.bf16.msra.mxu0 0
    %1326 = vmatprep.subr.bf16.mxu0 0
    %1327 = vmatpush1.bf16.msra.mxu0 0
    %1328 = vmatprep.subr.bf16.mxu0 0
    %1329 = vmatpush1.bf16.msra.mxu0 0
    %1330 = vmatprep.subr.bf16.mxu0 0
    %1331 = vmatpush1.bf16.msra.mxu0 0
    %1332 = vmatprep.subr.bf16.mxu0 0
    %1333 = vmatpush1.bf16.msra.mxu0 0
    %1334 = vmatprep.subr.bf16.mxu0 0
    %1335 = vmatpush1.bf16.msra.mxu0 0
    %1336 = vmatprep.subr.bf16.mxu0 0
    %1337 = vmatpush1.bf16.msra.mxu0 0
    %1338 = vmatprep.subr.bf16.mxu0 0
    %1339 = vmatpush1.bf16.msra.mxu0 0
    %1340 = vmatprep.mubr.bf16.mxu0 0
    %1341 = vmatmul.mubr.bf16.gmra.mrb[0].mxu0 %v1251
    %v1342 = vpop.f32.mrb[0].mxu0
    %v1343 = vadd.f32 %v1244, %v1342
    %v1344 = vpop.f32.mrb[0].mxu0
    %v1345 = vpop.f32.mrb[0].mxu0
    %v1346 = vadd.f32 %v1247, %v1345
    %v1347 = vpop.f32.mrb[0].mxu0
    %1348 = vdwg.mxu0
    %v1349 = vadd.f32 %v1343, %v418
    %v1350 = vadd.f32 %v1346, %v418
    %v1351 = vxor.u32 %v1349, 2147483648
    %v1352 = vxor.u32 %v1350, 2147483648
    %v1353 = vmul.f32 %v1351, 1.442695
    %v1354 = vpow.pop %v1353
    %v1355 = vmul.f32 %v1352, 1.442695
    %v1356 = vpow.pop %v1355
    %v1357 = vadd.f32 %v1354, 1.0
    %v1358 = vadd.f32 %v1356, 1.0
    %v1359 = vrcp.pop %v1357
    %v1360 = vmul.f32 1.0, %v1359
    %v1361 = vrcp.pop %v1358
    %v1362 = vmul.f32 1.0, %v1361
    %1363 = vmatprep.subr.bf16.mxu0 0
    %1364 = vmatpush1.bf16.msra.mxu0 %v448
    %1365 = vmatprep.subr.bf16.mxu0 0
    %1366 = vmatpush1.bf16.msra.mxu0 %v449
    %1367 = vmatprep.subr.bf16.mxu0 0
    %1368 = vmatpush1.bf16.msra.mxu0 0
    %1369 = vmatprep.subr.bf16.mxu0 0
    %1370 = vmatpush1.bf16.msra.mxu0 0
    %1371 = vmatprep.subr.bf16.mxu0 0
    %1372 = vmatpush1.bf16.msra.mxu0 0
    %1373 = vmatprep.subr.bf16.mxu0 0
    %1374 = vmatpush1.bf16.msra.mxu0 0
    %1375 = vmatprep.subr.bf16.mxu0 0
    %1376 = vmatpush1.bf16.msra.mxu0 0
    %1377 = vmatprep.subr.bf16.mxu0 0
    %1378 = vmatpush1.bf16.msra.mxu0 0
    %1379 = vmatprep.subr.bf16.mxu0 0
    %1380 = vmatpush1.bf16.msra.mxu0 0
    %1381 = vmatprep.subr.bf16.mxu0 0
    %1382 = vmatpush1.bf16.msra.mxu0 0
    %1383 = vmatprep.subr.bf16.mxu0 0
    %1384 = vmatpush1.bf16.msra.mxu0 0
    %1385 = vmatprep.subr.bf16.mxu0 0
    %1386 = vmatpush1.bf16.msra.mxu0 0
    %1387 = vmatprep.subr.bf16.mxu0 0
    %1388 = vmatpush1.bf16.msra.mxu0 0
    %1389 = vmatprep.subr.bf16.mxu0 0
    %1390 = vmatpush1.bf16.msra.mxu0 0
    %1391 = vmatprep.subr.bf16.mxu0 0
    %1392 = vmatpush1.bf16.msra.mxu0 0
    %1393 = vmatprep.subr.bf16.mxu0 0
    %1394 = vmatpush1.bf16.msra.mxu0 0
    %1395 = vmatprep.mubr.bf16.mxu0 0
    %1396 = vmatmul.mubr.bf16.gmra.mrb[0].mxu0 %v1251
    %v1397 = vpop.f32.mrb[0].mxu0
    %v1398 = vadd.f32 %v438, %v1397
    %v1399 = vpop.f32.mrb[0].mxu0
    %v1400 = vpop.f32.mrb[0].mxu0
    %v1401 = vadd.f32 %v438, %v1400
    %v1402 = vpop.f32.mrb[0].mxu0
    %1403 = vdwg.mxu0
    %1404 = vmatprep.subr.bf16.mxu0 0
    %1405 = vmatpush1.bf16.msra.mxu0 %v507
    %1406 = vmatprep.subr.bf16.mxu0 0
    %1407 = vmatpush1.bf16.msra.mxu0 %v508
    %1408 = vmatprep.subr.bf16.mxu0 0
    %1409 = vmatpush1.bf16.msra.mxu0 0
    %1410 = vmatprep.subr.bf16.mxu0 0
    %1411 = vmatpush1.bf16.msra.mxu0 0
    %1412 = vmatprep.subr.bf16.mxu0 0
    %1413 = vmatpush1.bf16.msra.mxu0 0
    %1414 = vmatprep.subr.bf16.mxu0 0
    %1415 = vmatpush1.bf16.msra.mxu0 0
    %1416 = vmatprep.subr.bf16.mxu0 0
    %1417 = vmatpush1.bf16.msra.mxu0 0
    %1418 = vmatprep.subr.bf16.mxu0 0
    %1419 = vmatpush1.bf16.msra.mxu0 0
    %1420 = vmatprep.subr.bf16.mxu0 0
    %1421 = vmatpush1.bf16.msra.mxu0 0
    %1422 = vmatprep.subr.bf16.mxu0 0
    %1423 = vmatpush1.bf16.msra.mxu0 0
    %1424 = vmatprep.subr.bf16.mxu0 0
    %1425 = vmatpush1.bf16.msra.mxu0 0
    %1426 = vmatprep.subr.bf16.mxu0 0
    %1427 = vmatpush1.bf16.msra.mxu0 0
    %1428 = vmatprep.subr.bf16.mxu0 0
    %1429 = vmatpush1.bf16.msra.mxu0 0
    %1430 = vmatprep.subr.bf16.mxu0 0
    %1431 = vmatpush1.bf16.msra.mxu0 0
    %1432 = vmatprep.subr.bf16.mxu0 0
    %1433 = vmatpush1.bf16.msra.mxu0 0
    %1434 = vmatprep.subr.bf16.mxu0 0
    %1435 = vmatpush1.bf16.msra.mxu0 0
    %1436 = vmatprep.mubr.bf16.mxu0 0
    %1437 = vmatmul.mubr.bf16.gmra.mrb[0].mxu0 %v1030
    %v1438 = vpop.f32.mrb[0].mxu0
    %v1439 = vadd.f32 %v497, %v1438
    %v1440 = vpop.f32.mrb[0].mxu0
    %v1441 = vpop.f32.mrb[0].mxu0
    %v1442 = vadd.f32 %v497, %v1441
    %v1443 = vpop.f32.mrb[0].mxu0
    %1444 = vdwg.mxu0
    %v1445 = vmul.f32 %v1305, %v1439
    %v1446 = vmul.f32 %v1307, %v1442
    %v1447 = vadd.f32 %v1398, %v1445
    %v1448 = vadd.f32 %v1401, %v1446
    %v1449 = vtanh.pop %v1447
    %v1450 = vtanh.pop %v1448
    %v1451 = vsub.f32 1.0, %v1360
    %v1452 = vsub.f32 1.0, %v1362
    %v1453 = vmul.f32 %v1451, %v1449
    %v1454 = vmul.f32 %v1452, %v1450
    %v1455 = vmul.f32 %v1360, %v1026
    %v1456 = vmul.f32 %v1362, %v1027
    %v1457 = vadd.f32 %v1453, %v1455
    %v1458 = vadd.f32 %v1454, %v1456
    %v1459 = vpack.c.bf16 %v1458, %v1457
    %v1461 = vsel %vm179, %v1459, 0
    %1463 = vmatprep.subr.bf16.mxu0 0
    %1464 = vmatpush1.bf16.msra.mxu0 %v585
    %1465 = vmatprep.subr.bf16.mxu0 0
    %1466 = vmatpush1.bf16.msra.mxu0 %v586
    %1467 = vmatprep.subr.bf16.mxu0 0
    %1468 = vmatpush1.bf16.msra.mxu0 0
    %1469 = vmatprep.subr.bf16.mxu0 0
    %1470 = vmatpush1.bf16.msra.mxu0 0
    %1471 = vmatprep.subr.bf16.mxu0 0
    %1472 = vmatpush1.bf16.msra.mxu0 0
    %1473 = vmatprep.subr.bf16.mxu0 0
    %1474 = vmatpush1.bf16.msra.mxu0 0
    %1475 = vmatprep.subr.bf16.mxu0 0
    %1476 = vmatpush1.bf16.msra.mxu0 0
    %1477 = vmatprep.subr.bf16.mxu0 0
    %1478 = vmatpush1.bf16.msra.mxu0 0
    %1479 = vmatprep.subr.bf16.mxu0 0
    %1480 = vmatpush1.bf16.msra.mxu0 0
    %1481 = vmatprep.subr.bf16.mxu0 0
    %1482 = vmatpush1.bf16.msra.mxu0 0
    %1483 = vmatprep.subr.bf16.mxu0 0
    %1484 = vmatpush1.bf16.msra.mxu0 0
    %1485 = vmatprep.subr.bf16.mxu0 0
    %1486 = vmatpush1.bf16.msra.mxu0 0
    %1487 = vmatprep.subr.bf16.mxu0 0
    %1488 = vmatpush1.bf16.msra.mxu0 0
    %1489 = vmatprep.subr.bf16.mxu0 0
    %1490 = vmatpush1.bf16.msra.mxu0 0
    %1491 = vmatprep.subr.bf16.mxu0 0
    %1492 = vmatpush1.bf16.msra.mxu0 0
    %1493 = vmatprep.subr.bf16.mxu0 0
    %1494 = vmatpush1.bf16.msra.mxu0 0
    %1495 = vmatprep.mubr.bf16.mxu0 0
    %1496 = vmatmul.mubr.bf16.gmra.mrb[0].mxu0 %v1461
    %v1497 = vpop.f32.mrb[0].mxu0
    %v1498 = vadd.f32 %v575, %v1497
    %v1499 = vpop.f32.mrb[0].mxu0
    %v1500 = vpop.f32.mrb[0].mxu0
    %v1501 = vadd.f32 %v575, %v1500
    %v1502 = vpop.f32.mrb[0].mxu0
    %1503 = vdwg.mxu0
    %v1504 = vsel %vm633, %v1498, -inf
    %1505 = vmax.xlane.f32.xlu0 %v1504
    %v1506 = vpop.xlane.xlu0 %1505
    %v1507 = vsel %vm633, %v1501, -inf
    %1508 = vmax.xlane.f32.xlu0 %v1507
    %v1509 = vpop.xlane.xlu0 %1508
    %vm1510 = vcmp.eq.f32.partialorder %v1498, %v1506
    %vm1511 = vcmp.eq.f32.partialorder %v1501, %v1509
    %v1512 = vsel %vm1510, %v144, 16
    %v1513 = vsel %vm1511, %v144, 16
    %v1514 = vsel %vm633, %v1512, 2147483647
    %v1515 = vand.u32 %v1514, 65535
    %v1516 = vshra.s32 %v1514, 16
    %v1517 = vcvt.s32.f32 %v1515
    %v1518 = vcvt.s32.f32 %v1516
    %1519 = vmin.xlane.f32.xlu0 %v1518
    %v1520 = vpop.xlane.xlu0 %1519
    %vm1521 = vcmp.eq.f32.partialorder %v1518, %v1520
    %v1522 = vsel %vm1521, %v1517, inf
    %1523 = vmin.xlane.f32.xlu0 %v1522
    %v1524 = vpop.xlane.xlu0 %1523
    %v1525 = vcvt.f32.s32 %v1524
    %v1526 = vcvt.f32.s32 %v1520
    %v1527 = vshll.u32 %v1526, 16
    %v1528 = vadd.s32 %v1527, %v1525
    %v1529 = vsel %vm633, %v1513, 2147483647
    %v1530 = vand.u32 %v1529, 65535
    %v1531 = vshra.s32 %v1529, 16
    %v1532 = vcvt.s32.f32 %v1530
    %v1533 = vcvt.s32.f32 %v1531
    %1534 = vmin.xlane.f32.xlu0 %v1533
    %v1535 = vpop.xlane.xlu0 %1534
    %vm1536 = vcmp.eq.f32.partialorder %v1533, %v1535
    %v1537 = vsel %vm1536, %v1532, inf
    %1538 = vmin.xlane.f32.xlu0 %v1537
    %v1539 = vpop.xlane.xlu0 %1538
    %v1540 = vcvt.f32.s32 %v1539
    %v1541 = vcvt.f32.s32 %v1535
    %v1542 = vshll.u32 %v1541, 16
    %v1543 = vadd.s32 %v1542, %v1540
    %vm1544 = vcmp.eq.s32.totalorder %v144, 2
    %v1545 = vsel %vm1544, %v1528, %v1114
    %v1546 = vsel %vm1544, %v1543, %v1115
    %vm1547 = vcmp.eq.s32.totalorder %v144, %v1528
    %vm1548 = vcmp.eq.s32.totalorder %v144, %v1543
    %v1549 = vsel %vm1547, 1, 0
    %v1550 = vsel %vm1548, 1, 0
    %v1551 = vcvt.s32.f32 %v1549
    %v1552 = vcvt.s32.f32 %v1550
    %v1553 = vpack.c.bf16 %v1552, %v1551
    %v1555 = vsel %vm633, %v1553, 0
    %1557 = vmatprep.subr.bf16.mxu0 0
    %1558 = vmatpush1.bf16.msra.mxu0 %v690
    %1559 = vmatprep.subr.bf16.mxu0 0
    %1560 = vmatpush1.bf16.msra.mxu0 0
    %1561 = vmatprep.subr.bf16.mxu0 0
    %1562 = vmatpush1.bf16.msra.mxu0 0
    %1563 = vmatprep.subr.bf16.mxu0 0
    %1564 = vmatpush1.bf16.msra.mxu0 0
    %1565 = vmatprep.subr.bf16.mxu0 0
    %1566 = vmatpush1.bf16.msra.mxu0 0
    %1567 = vmatprep.subr.bf16.mxu0 0
    %1568 = vmatpush1.bf16.msra.mxu0 0
    %1569 = vmatprep.subr.bf16.mxu0 0
    %1570 = vmatpush1.bf16.msra.mxu0 0
    %1571 = vmatprep.subr.bf16.mxu0 0
    %1572 = vmatpush1.bf16.msra.mxu0 0
    %1573 = vmatprep.subr.bf16.mxu0 0
    %1574 = vmatpush1.bf16.msra.mxu0 0
    %1575 = vmatprep.subr.bf16.mxu0 0
    %1576 = vmatpush1.bf16.msra.mxu0 0
    %1577 = vmatprep.subr.bf16.mxu0 0
    %1578 = vmatpush1.bf16.msra.mxu0 0
    %1579 = vmatprep.subr.bf16.mxu0 0
    %1580 = vmatpush1.bf16.msra.mxu0 0
    %1581 = vmatprep.subr.bf16.mxu0 0
    %1582 = vmatpush1.bf16.msra.mxu0 0
    %1583 = vmatprep.subr.bf16.mxu0 0
    %1584 = vmatpush1.bf16.msra.mxu0 0
    %1585 = vmatprep.subr.bf16.mxu0 0
    %1586 = vmatpush1.bf16.msra.mxu0 0
    %1587 = vmatprep.subr.bf16.mxu0 0
    %1588 = vmatpush1.bf16.msra.mxu0 0
    %1589 = vmatprep.mubr.bf16.mxu0 0
    %1590 = vmatmul.mubr.bf16.gmra.mrb[0].mxu0 %v1555
    %v1591 = vpop.f32.mrb[0].mxu0
    %v1592 = vadd.f32 0.0, %v1591
    %v1593 = vpop.f32.mrb[0].mxu0
    %v1594 = vpop.f32.mrb[0].mxu0
    %v1595 = vadd.f32 0.0, %v1594
    %v1596 = vpop.f32.mrb[0].mxu0
    %1597 = vdwg.mxu0
    %v1598 = vpack.c.bf16 %v1595, %v1592
    %1599 = vmatprep.subr.bf16.mxu0 0
    %1600 = vmatpush1.bf16.msra.mxu0 %v175
    %1601 = vmatprep.subr.bf16.mxu0 0
    %1602 = vmatpush1.bf16.msra.mxu0 %v176
    %1603 = vmatprep.subr.bf16.mxu0 0
    %1604 = vmatpush1.bf16.msra.mxu0 0
    %1605 = vmatprep.subr.bf16.mxu0 0
    %1606 = vmatpush1.bf16.msra.mxu0 0
    %1607 = vmatprep.subr.bf16.mxu0 0
    %1608 = vmatpush1.bf16.msra.mxu0 0
    %1609 = vmatprep.subr.bf16.mxu0 0
    %1610 = vmatpush1.bf16.msra.mxu0 0
    %1611 = vmatprep.subr.bf16.mxu0 0
    %1612 = vmatpush1.bf16.msra.mxu0 0
    %1613 = vmatprep.subr.bf16.mxu0 0
    %1614 = vmatpush1.bf16.msra.mxu0 0
    %1615 = vmatprep.subr.bf16.mxu0 0
    %1616 = vmatpush1.bf16.msra.mxu0 0
    %1617 = vmatprep.subr.bf16.mxu0 0
    %1618 = vmatpush1.bf16.msra.mxu0 0
    %1619 = vmatprep.subr.bf16.mxu0 0
    %1620 = vmatpush1.bf16.msra.mxu0 0
    %1621 = vmatprep.subr.bf16.mxu0 0
    %1622 = vmatpush1.bf16.msra.mxu0 0
    %1623 = vmatprep.subr.bf16.mxu0 0
    %1624 = vmatpush1.bf16.msra.mxu0 0
    %1625 = vmatprep.subr.bf16.mxu0 0
    %1626 = vmatpush1.bf16.msra.mxu0 0
    %1627 = vmatprep.subr.bf16.mxu0 0
    %1628 = vmatpush1.bf16.msra.mxu0 0
    %1629 = vmatprep.subr.bf16.mxu0 0
    %1630 = vmatpush1.bf16.msra.mxu0 0
    %1631 = vmatprep.mubr.bf16.mxu0 0
    %1632 = vmatmul.mubr.bf16.gmra.mrb[0].mxu0 %v1461
    %v1633 = vpop.f32.mrb[0].mxu0
    %v1634 = vadd.f32 0.0, %v1633
    %v1635 = vpop.f32.mrb[0].mxu0
    %v1636 = vpop.f32.mrb[0].mxu0
    %v1637 = vadd.f32 0.0, %v1636
    %v1638 = vpop.f32.mrb[0].mxu0
    %1639 = vdwg.mxu0
    %1640 = vmatprep.subr.bf16.mxu0 0
    %1641 = vmatpush1.bf16.msra.mxu0 %v236
    %1642 = vmatprep.subr.bf16.mxu0 0
    %1643 = vmatpush1.bf16.msra.mxu0 %v237
    %1644 = vmatprep.subr.bf16.mxu0 0
    %1645 = vmatpush1.bf16.msra.mxu0 0
    %1646 = vmatprep.subr.bf16.mxu0 0
    %1647 = vmatpush1.bf16.msra.mxu0 0
    %1648 = vmatprep.subr.bf16.mxu0 0
    %1649 = vmatpush1.bf16.msra.mxu0 0
    %1650 = vmatprep.subr.bf16.mxu0 0
    %1651 = vmatpush1.bf16.msra.mxu0 0
    %1652 = vmatprep.subr.bf16.mxu0 0
    %1653 = vmatpush1.bf16.msra.mxu0 0
    %1654 = vmatprep.subr.bf16.mxu0 0
    %1655 = vmatpush1.bf16.msra.mxu0 0
    %1656 = vmatprep.subr.bf16.mxu0 0
    %1657 = vmatpush1.bf16.msra.mxu0 0
    %1658 = vmatprep.subr.bf16.mxu0 0
    %1659 = vmatpush1.bf16.msra.mxu0 0
    %1660 = vmatprep.subr.bf16.mxu0 0
    %1661 = vmatpush1.bf16.msra.mxu0 0
    %1662 = vmatprep.subr.bf16.mxu0 0
    %1663 = vmatpush1.bf16.msra.mxu0 0
    %1664 = vmatprep.subr.bf16.mxu0 0
    %1665 = vmatpush1.bf16.msra.mxu0 0
    %1666 = vmatprep.subr.bf16.mxu0 0
    %1667 = vmatpush1.bf16.msra.mxu0 0
    %1668 = vmatprep.subr.bf16.mxu0 0
    %1669 = vmatpush1.bf16.msra.mxu0 0
    %1670 = vmatprep.subr.bf16.mxu0 0
    %1671 = vmatpush1.bf16.msra.mxu0 0
    %1672 = vmatprep.mubr.bf16.mxu0 0
    %1673 = vmatmul.mubr.bf16.gmra.mrb[0].mxu0 %v1461
    %v1674 = vpop.f32.mrb[0].mxu0
    %v1675 = vadd.f32 0.0, %v1674
    %v1676 = vpop.f32.mrb[0].mxu0
    %v1677 = vpop.f32.mrb[0].mxu0
    %v1678 = vadd.f32 0.0, %v1677
    %v1679 = vpop.f32.mrb[0].mxu0
    %1680 = vdwg.mxu0
    %v1682 = vsel %vm179, %v1598, 0
    %1684 = vmatprep.subr.bf16.mxu0 0
    %1685 = vmatpush1.bf16.msra.mxu0 %v293
    %1686 = vmatprep.subr.bf16.mxu0 0
    %1687 = vmatpush1.bf16.msra.mxu0 %v294
    %1688 = vmatprep.subr.bf16.mxu0 0
    %1689 = vmatpush1.bf16.msra.mxu0 0
    %1690 = vmatprep.subr.bf16.mxu0 0
    %1691 = vmatpush1.bf16.msra.mxu0 0
    %1692 = vmatprep.subr.bf16.mxu0 0
    %1693 = vmatpush1.bf16.msra.mxu0 0
    %1694 = vmatprep.subr.bf16.mxu0 0
    %1695 = vmatpush1.bf16.msra.mxu0 0
    %1696 = vmatprep.subr.bf16.mxu0 0
    %1697 = vmatpush1.bf16.msra.mxu0 0
    %1698 = vmatprep.subr.bf16.mxu0 0
    %1699 = vmatpush1.bf16.msra.mxu0 0
    %1700 = vmatprep.subr.bf16.mxu0 0
    %1701 = vmatpush1.bf16.msra.mxu0 0
    %1702 = vmatprep.subr.bf16.mxu0 0
    %1703 = vmatpush1.bf16.msra.mxu0 0
    %1704 = vmatprep.subr.bf16.mxu0 0
    %1705 = vmatpush1.bf16.msra.mxu0 0
    %1706 = vmatprep.subr.bf16.mxu0 0
    %1707 = vmatpush1.bf16.msra.mxu0 0
    %1708 = vmatprep.subr.bf16.mxu0 0
    %1709 = vmatpush1.bf16.msra.mxu0 0
    %1710 = vmatprep.subr.bf16.mxu0 0
    %1711 = vmatpush1.bf16.msra.mxu0 0
    %1712 = vmatprep.subr.bf16.mxu0 0
    %1713 = vmatpush1.bf16.msra.mxu0 0
    %1714 = vmatprep.subr.bf16.mxu0 0
    %1715 = vmatpush1.bf16.msra.mxu0 0
    %1716 = vmatprep.mubr.bf16.mxu0 0
    %1717 = vmatmul.mubr.bf16.gmra.mrb[0].mxu0 %v1682
    %v1718 = vpop.f32.mrb[0].mxu0
    %v1719 = vadd.f32 %v1634, %v1718
    %v1720 = vpop.f32.mrb[0].mxu0
    %v1721 = vpop.f32.mrb[0].mxu0
    %v1722 = vadd.f32 %v1637, %v1721
    %v1723 = vpop.f32.mrb[0].mxu0
    %1724 = vdwg.mxu0
    %v1725 = vadd.f32 %v1719, %v345
    %v1726 = vadd.f32 %v1722, %v345
    %v1727 = vxor.u32 %v1725, 2147483648
    %v1728 = vxor.u32 %v1726, 2147483648
    %v1729 = vmul.f32 %v1727, 1.442695
    %v1730 = vpow.pop %v1729
    %v1731 = vmul.f32 %v1728, 1.442695
    %v1732 = vpow.pop %v1731
    %v1733 = vadd.f32 %v1730, 1.0
    %v1734 = vadd.f32 %v1732, 1.0
    %v1735 = vrcp.pop %v1733
    %v1736 = vmul.f32 1.0, %v1735
    %v1737 = vrcp.pop %v1734
    %v1738 = vmul.f32 1.0, %v1737
    %1739 = vmatprep.subr.bf16.mxu0 0
    %1740 = vmatpush1.bf16.msra.mxu0 %v369
    %1741 = vmatprep.subr.bf16.mxu0 0
    %1742 = vmatpush1.bf16.msra.mxu0 %v370
    %1743 = vmatprep.subr.bf16.mxu0 0
    %1744 = vmatpush1.bf16.msra.mxu0 0
    %1745 = vmatprep.subr.bf16.mxu0 0
    %1746 = vmatpush1.bf16.msra.mxu0 0
    %1747 = vmatprep.subr.bf16.mxu0 0
    %1748 = vmatpush1.bf16.msra.mxu0 0
    %1749 = vmatprep.subr.bf16.mxu0 0
    %1750 = vmatpush1.bf16.msra.mxu0 0
    %1751 = vmatprep.subr.bf16.mxu0 0
    %1752 = vmatpush1.bf16.msra.mxu0 0
    %1753 = vmatprep.subr.bf16.mxu0 0
    %1754 = vmatpush1.bf16.msra.mxu0 0
    %1755 = vmatprep.subr.bf16.mxu0 0
    %1756 = vmatpush1.bf16.msra.mxu0 0
    %1757 = vmatprep.subr.bf16.mxu0 0
    %1758 = vmatpush1.bf16.msra.mxu0 0
    %1759 = vmatprep.subr.bf16.mxu0 0
    %1760 = vmatpush1.bf16.msra.mxu0 0
    %1761 = vmatprep.subr.bf16.mxu0 0
    %1762 = vmatpush1.bf16.msra.mxu0 0
    %1763 = vmatprep.subr.bf16.mxu0 0
    %1764 = vmatpush1.bf16.msra.mxu0 0
    %1765 = vmatprep.subr.bf16.mxu0 0
    %1766 = vmatpush1.bf16.msra.mxu0 0
    %1767 = vmatprep.subr.bf16.mxu0 0
    %1768 = vmatpush1.bf16.msra.mxu0 0
    %1769 = vmatprep.subr.bf16.mxu0 0
    %1770 = vmatpush1.bf16.msra.mxu0 0
    %1771 = vmatprep.mubr.bf16.mxu0 0
    %1772 = vmatmul.mubr.bf16.gmra.mrb[0].mxu0 %v1682
    %v1773 = vpop.f32.mrb[0].mxu0
    %v1774 = vadd.f32 %v1675, %v1773
    %v1775 = vpop.f32.mrb[0].mxu0
    %v1776 = vpop.f32.mrb[0].mxu0
    %v1777 = vadd.f32 %v1678, %v1776
    %v1778 = vpop.f32.mrb[0].mxu0
    %1779 = vdwg.mxu0
    %v1780 = vadd.f32 %v1774, %v418
    %v1781 = vadd.f32 %v1777, %v418
    %v1782 = vxor.u32 %v1780, 2147483648
    %v1783 = vxor.u32 %v1781, 2147483648
    %v1784 = vmul.f32 %v1782, 1.442695
    %v1785 = vpow.pop %v1784
    %v1786 = vmul.f32 %v1783, 1.442695
    %v1787 = vpow.pop %v1786
    %v1788 = vadd.f32 %v1785, 1.0
    %v1789 = vadd.f32 %v1787, 1.0
    %v1790 = vrcp.pop %v1788
    %v1791 = vmul.f32 1.0, %v1790
    %v1792 = vrcp.pop %v1789
    %v1793 = vmul.f32 1.0, %v1792
    %1794 = vmatprep.subr.bf16.mxu0 0
    %1795 = vmatpush1.bf16.msra.mxu0 %v448
    %1796 = vmatprep.subr.bf16.mxu0 0
    %1797 = vmatpush1.bf16.msra.mxu0 %v449
    %1798 = vmatprep.subr.bf16.mxu0 0
    %1799 = vmatpush1.bf16.msra.mxu0 0
    %1800 = vmatprep.subr.bf16.mxu0 0
    %1801 = vmatpush1.bf16.msra.mxu0 0
    %1802 = vmatprep.subr.bf16.mxu0 0
    %1803 = vmatpush1.bf16.msra.mxu0 0
    %1804 = vmatprep.subr.bf16.mxu0 0
    %1805 = vmatpush1.bf16.msra.mxu0 0
    %1806 = vmatprep.subr.bf16.mxu0 0
    %1807 = vmatpush1.bf16.msra.mxu0 0
    %1808 = vmatprep.subr.bf16.mxu0 0
    %1809 = vmatpush1.bf16.msra.mxu0 0
    %1810 = vmatprep.subr.bf16.mxu0 0
    %1811 = vmatpush1.bf16.msra.mxu0 0
    %1812 = vmatprep.subr.bf16.mxu0 0
    %1813 = vmatpush1.bf16.msra.mxu0 0
    %1814 = vmatprep.subr.bf16.mxu0 0
    %1815 = vmatpush1.bf16.msra.mxu0 0
    %1816 = vmatprep.subr.bf16.mxu0 0
    %1817 = vmatpush1.bf16.msra.mxu0 0
    %1818 = vmatprep.subr.bf16.mxu0 0
    %1819 = vmatpush1.bf16.msra.mxu0 0
    %1820 = vmatprep.subr.bf16.mxu0 0
    %1821 = vmatpush1.bf16.msra.mxu0 0
    %1822 = vmatprep.subr.bf16.mxu0 0
    %1823 = vmatpush1.bf16.msra.mxu0 0
    %1824 = vmatprep.subr.bf16.mxu0 0
    %1825 = vmatpush1.bf16.msra.mxu0 0
    %1826 = vmatprep.mubr.bf16.mxu0 0
    %1827 = vmatmul.mubr.bf16.gmra.mrb[0].mxu0 %v1682
    %v1828 = vpop.f32.mrb[0].mxu0
    %v1829 = vadd.f32 %v438, %v1828
    %v1830 = vpop.f32.mrb[0].mxu0
    %v1831 = vpop.f32.mrb[0].mxu0
    %v1832 = vadd.f32 %v438, %v1831
    %v1833 = vpop.f32.mrb[0].mxu0
    %1834 = vdwg.mxu0
    %1835 = vmatprep.subr.bf16.mxu0 0
    %1836 = vmatpush1.bf16.msra.mxu0 %v507
    %1837 = vmatprep.subr.bf16.mxu0 0
    %1838 = vmatpush1.bf16.msra.mxu0 %v508
    %1839 = vmatprep.subr.bf16.mxu0 0
    %1840 = vmatpush1.bf16.msra.mxu0 0
    %1841 = vmatprep.subr.bf16.mxu0 0
    %1842 = vmatpush1.bf16.msra.mxu0 0
    %1843 = vmatprep.subr.bf16.mxu0 0
    %1844 = vmatpush1.bf16.msra.mxu0 0
    %1845 = vmatprep.subr.bf16.mxu0 0
    %1846 = vmatpush1.bf16.msra.mxu0 0
    %1847 = vmatprep.subr.bf16.mxu0 0
    %1848 = vmatpush1.bf16.msra.mxu0 0
    %1849 = vmatprep.subr.bf16.mxu0 0
    %1850 = vmatpush1.bf16.msra.mxu0 0
    %1851 = vmatprep.subr.bf16.mxu0 0
    %1852 = vmatpush1.bf16.msra.mxu0 0
    %1853 = vmatprep.subr.bf16.mxu0 0
    %1854 = vmatpush1.bf16.msra.mxu0 0
    %1855 = vmatprep.subr.bf16.mxu0 0
    %1856 = vmatpush1.bf16.msra.mxu0 0
    %1857 = vmatprep.subr.bf16.mxu0 0
    %1858 = vmatpush1.bf16.msra.mxu0 0
    %1859 = vmatprep.subr.bf16.mxu0 0
    %1860 = vmatpush1.bf16.msra.mxu0 0
    %1861 = vmatprep.subr.bf16.mxu0 0
    %1862 = vmatpush1.bf16.msra.mxu0 0
    %1863 = vmatprep.subr.bf16.mxu0 0
    %1864 = vmatpush1.bf16.msra.mxu0 0
    %1865 = vmatprep.subr.bf16.mxu0 0
    %1866 = vmatpush1.bf16.msra.mxu0 0
    %1867 = vmatprep.mubr.bf16.mxu0 0
    %1868 = vmatmul.mubr.bf16.gmra.mrb[0].mxu0 %v1461
    %v1869 = vpop.f32.mrb[0].mxu0
    %v1870 = vadd.f32 %v497, %v1869
    %v1871 = vpop.f32.mrb[0].mxu0
    %v1872 = vpop.f32.mrb[0].mxu0
    %v1873 = vadd.f32 %v497, %v1872
    %v1874 = vpop.f32.mrb[0].mxu0
    %1875 = vdwg.mxu0
    %v1876 = vmul.f32 %v1736, %v1870
    %v1877 = vmul.f32 %v1738, %v1873
    %v1878 = vadd.f32 %v1829, %v1876
    %v1879 = vadd.f32 %v1832, %v1877
    %v1880 = vtanh.pop %v1878
    %v1881 = vtanh.pop %v1879
    %v1882 = vsub.f32 1.0, %v1791
    %v1883 = vsub.f32 1.0, %v1793
    %v1884 = vmul.f32 %v1882, %v1880
    %v1885 = vmul.f32 %v1883, %v1881
    %v1886 = vmul.f32 %v1791, %v1457
    %v1887 = vmul.f32 %v1793, %v1458
    %v1888 = vadd.f32 %v1884, %v1886
    %v1889 = vadd.f32 %v1885, %v1887
    %v1890 = vpack.c.bf16 %v1889, %v1888
    %v1892 = vsel %vm179, %v1890, 0
    %1894 = vmatprep.subr.bf16.mxu0 0
    %1895 = vmatpush1.bf16.msra.mxu0 %v585
    %1896 = vmatprep.subr.bf16.mxu0 0
    %1897 = vmatpush1.bf16.msra.mxu0 %v586
    %1898 = vmatprep.subr.bf16.mxu0 0
    %1899 = vmatpush1.bf16.msra.mxu0 0
    %1900 = vmatprep.subr.bf16.mxu0 0
    %1901 = vmatpush1.bf16.msra.mxu0 0
    %1902 = vmatprep.subr.bf16.mxu0 0
    %1903 = vmatpush1.bf16.msra.mxu0 0
    %1904 = vmatprep.subr.bf16.mxu0 0
    %1905 = vmatpush1.bf16.msra.mxu0 0
    %1906 = vmatprep.subr.bf16.mxu0 0
    %1907 = vmatpush1.bf16.msra.mxu0 0
    %1908 = vmatprep.subr.bf16.mxu0 0
    %1909 = vmatpush1.bf16.msra.mxu0 0
    %1910 = vmatprep.subr.bf16.mxu0 0
    %1911 = vmatpush1.bf16.msra.mxu0 0
    %1912 = vmatprep.subr.bf16.mxu0 0
    %1913 = vmatpush1.bf16.msra.mxu0 0
    %1914 = vmatprep.subr.bf16.mxu0 0
    %1915 = vmatpush1.bf16.msra.mxu0 0
    %1916 = vmatprep.subr.bf16.mxu0 0
    %1917 = vmatpush1.bf16.msra.mxu0 0
    %1918 = vmatprep.subr.bf16.mxu0 0
    %1919 = vmatpush1.bf16.msra.mxu0 0
    %1920 = vmatprep.subr.bf16.mxu0 0
    %1921 = vmatpush1.bf16.msra.mxu0 0
    %1922 = vmatprep.subr.bf16.mxu0 0
    %1923 = vmatpush1.bf16.msra.mxu0 0
    %1924 = vmatprep.subr.bf16.mxu0 0
    %1925 = vmatpush1.bf16.msra.mxu0 0
    %1926 = vmatprep.mubr.bf16.mxu0 0
    %1927 = vmatmul.mubr.bf16.gmra.mrb[0].mxu0 %v1892
    %v1928 = vpop.f32.mrb[0].mxu0
    %v1929 = vadd.f32 %v575, %v1928
    %v1930 = vpop.f32.mrb[0].mxu0
    %v1931 = vpop.f32.mrb[0].mxu0
    %v1932 = vadd.f32 %v575, %v1931
    %v1933 = vpop.f32.mrb[0].mxu0
    %1934 = vdwg.mxu0
    %v1935 = vsel %vm633, %v1929, -inf
    %1936 = vmax.xlane.f32.xlu0 %v1935
    %v1937 = vpop.xlane.xlu0 %1936
    %v1938 = vsel %vm633, %v1932, -inf
    %1939 = vmax.xlane.f32.xlu0 %v1938
    %v1940 = vpop.xlane.xlu0 %1939
    %vm1941 = vcmp.eq.f32.partialorder %v1929, %v1937
    %vm1942 = vcmp.eq.f32.partialorder %v1932, %v1940
    %v1943 = vsel %vm1941, %v144, 16
    %v1944 = vsel %vm1942, %v144, 16
    %v1945 = vsel %vm633, %v1943, 2147483647
    %v1946 = vand.u32 %v1945, 65535
    %v1947 = vshra.s32 %v1945, 16
    %v1948 = vcvt.s32.f32 %v1946
    %v1949 = vcvt.s32.f32 %v1947
    %1950 = vmin.xlane.f32.xlu0 %v1949
    %v1951 = vpop.xlane.xlu0 %1950
    %vm1952 = vcmp.eq.f32.partialorder %v1949, %v1951
    %v1953 = vsel %vm1952, %v1948, inf
    %1954 = vmin.xlane.f32.xlu0 %v1953
    %v1955 = vpop.xlane.xlu0 %1954
    %v1956 = vcvt.f32.s32 %v1955
    %v1957 = vcvt.f32.s32 %v1951
    %v1958 = vshll.u32 %v1957, 16
    %v1959 = vadd.s32 %v1958, %v1956
    %v1960 = vsel %vm633, %v1944, 2147483647
    %v1961 = vand.u32 %v1960, 65535
    %v1962 = vshra.s32 %v1960, 16
    %v1963 = vcvt.s32.f32 %v1961
    %v1964 = vcvt.s32.f32 %v1962
    %1965 = vmin.xlane.f32.xlu0 %v1964
    %v1966 = vpop.xlane.xlu0 %1965
    %vm1967 = vcmp.eq.f32.partialorder %v1964, %v1966
    %v1968 = vsel %vm1967, %v1963, inf
    %1969 = vmin.xlane.f32.xlu0 %v1968
    %v1970 = vpop.xlane.xlu0 %1969
    %v1971 = vcvt.f32.s32 %v1970
    %v1972 = vcvt.f32.s32 %v1966
    %v1973 = vshll.u32 %v1972, 16
    %v1974 = vadd.s32 %v1973, %v1971
    %vm1975 = vcmp.eq.s32.totalorder %v144, 3
    %v1976 = vsel %vm1975, %v1959, %v1545
    %v1977 = vsel %vm1975, %v1974, %v1546
    %vm1978 = vcmp.eq.s32.totalorder %v144, %v1959
    %vm1979 = vcmp.eq.s32.totalorder %v144, %v1974
    %v1980 = vsel %vm1978, 1, 0
    %v1981 = vsel %vm1979, 1, 0
    %v1982 = vcvt.s32.f32 %v1980
    %v1983 = vcvt.s32.f32 %v1981
    %v1984 = vpack.c.bf16 %v1983, %v1982
    %v1986 = vsel %vm633, %v1984, 0
    %1988 = vmatprep.subr.bf16.mxu0 0
    %1989 = vmatpush1.bf16.msra.mxu0 %v690
    %1990 = vmatprep.subr.bf16.mxu0 0
    %1991 = vmatpush1.bf16.msra.mxu0 0
    %1992 = vmatprep.subr.bf16.mxu0 0
    %1993 = vmatpush1.bf16.msra.mxu0 0
    %1994 = vmatprep.subr.bf16.mxu0 0
    %1995 = vmatpush1.bf16.msra.mxu0 0
    %1996 = vmatprep.subr.bf16.mxu0 0
    %1997 = vmatpush1.bf16.msra.mxu0 0
    %1998 = vmatprep.subr.bf16.mxu0 0
    %1999 = vmatpush1.bf16.msra.mxu0 0
    %2000 = vmatprep.subr.bf16.mxu0 0
    %2001 = vmatpush1.bf16.msra.mxu0 0
    %2002 = vmatprep.subr.bf16.mxu0 0
    %2003 = vmatpush1.bf16.msra.mxu0 0
    %2004 = vmatprep.subr.bf16.mxu0 0
    %2005 = vmatpush1.bf16.msra.mxu0 0
    %2006 = vmatprep.subr.bf16.mxu0 0
    %2007 = vmatpush1.bf16.msra.mxu0 0
    %2008 = vmatprep.subr.bf16.mxu0 0
    %2009 = vmatpush1.bf16.msra.mxu0 0
    %2010 = vmatprep.subr.bf16.mxu0 0
    %2011 = vmatpush1.bf16.msra.mxu0 0
    %2012 = vmatprep.subr.bf16.mxu0 0
    %2013 = vmatpush1.bf16.msra.mxu0 0
    %2014 = vmatprep.subr.bf16.mxu0 0
    %2015 = vmatpush1.bf16.msra.mxu0 0
    %2016 = vmatprep.subr.bf16.mxu0 0
    %2017 = vmatpush1.bf16.msra.mxu0 0
    %2018 = vmatprep.subr.bf16.mxu0 0
    %2019 = vmatpush1.bf16.msra.mxu0 0
    %2020 = vmatprep.mubr.bf16.mxu0 0
    %2021 = vmatmul.mubr.bf16.gmra.mrb[0].mxu0 %v1986
    %v2022 = vpop.f32.mrb[0].mxu0
    %v2023 = vadd.f32 0.0, %v2022
    %v2024 = vpop.f32.mrb[0].mxu0
    %v2025 = vpop.f32.mrb[0].mxu0
    %v2026 = vadd.f32 0.0, %v2025
    %v2027 = vpop.f32.mrb[0].mxu0
    %2028 = vdwg.mxu0
    %v2029 = vpack.c.bf16 %v2026, %v2023
    %2030 = vmatprep.subr.bf16.mxu0 0
    %2031 = vmatpush1.bf16.msra.mxu0 %v175
    %2032 = vmatprep.subr.bf16.mxu0 0
    %2033 = vmatpush1.bf16.msra.mxu0 %v176
    %2034 = vmatprep.subr.bf16.mxu0 0
    %2035 = vmatpush1.bf16.msra.mxu0 0
    %2036 = vmatprep.subr.bf16.mxu0 0
    %2037 = vmatpush1.bf16.msra.mxu0 0
    %2038 = vmatprep.subr.bf16.mxu0 0
    %2039 = vmatpush1.bf16.msra.mxu0 0
    %2040 = vmatprep.subr.bf16.mxu0 0
    %2041 = vmatpush1.bf16.msra.mxu0 0
    %2042 = vmatprep.subr.bf16.mxu0 0
    %2043 = vmatpush1.bf16.msra.mxu0 0
    %2044 = vmatprep.subr.bf16.mxu0 0
    %2045 = vmatpush1.bf16.msra.mxu0 0
    %2046 = vmatprep.subr.bf16.mxu0 0
    %2047 = vmatpush1.bf16.msra.mxu0 0
    %2048 = vmatprep.subr.bf16.mxu0 0
    %2049 = vmatpush1.bf16.msra.mxu0 0
    %2050 = vmatprep.subr.bf16.mxu0 0
    %2051 = vmatpush1.bf16.msra.mxu0 0
    %2052 = vmatprep.subr.bf16.mxu0 0
    %2053 = vmatpush1.bf16.msra.mxu0 0
    %2054 = vmatprep.subr.bf16.mxu0 0
    %2055 = vmatpush1.bf16.msra.mxu0 0
    %2056 = vmatprep.subr.bf16.mxu0 0
    %2057 = vmatpush1.bf16.msra.mxu0 0
    %2058 = vmatprep.subr.bf16.mxu0 0
    %2059 = vmatpush1.bf16.msra.mxu0 0
    %2060 = vmatprep.subr.bf16.mxu0 0
    %2061 = vmatpush1.bf16.msra.mxu0 0
    %2062 = vmatprep.mubr.bf16.mxu0 0
    %2063 = vmatmul.mubr.bf16.gmra.mrb[0].mxu0 %v1892
    %v2064 = vpop.f32.mrb[0].mxu0
    %v2065 = vadd.f32 0.0, %v2064
    %v2066 = vpop.f32.mrb[0].mxu0
    %v2067 = vpop.f32.mrb[0].mxu0
    %v2068 = vadd.f32 0.0, %v2067
    %v2069 = vpop.f32.mrb[0].mxu0
    %2070 = vdwg.mxu0
    %2071 = vmatprep.subr.bf16.mxu0 0
    %2072 = vmatpush1.bf16.msra.mxu0 %v236
    %2073 = vmatprep.subr.bf16.mxu0 0
    %2074 = vmatpush1.bf16.msra.mxu0 %v237
    %2075 = vmatprep.subr.bf16.mxu0 0
    %2076 = vmatpush1.bf16.msra.mxu0 0
    %2077 = vmatprep.subr.bf16.mxu0 0
    %2078 = vmatpush1.bf16.msra.mxu0 0
    %2079 = vmatprep.subr.bf16.mxu0 0
    %2080 = vmatpush1.bf16.msra.mxu0 0
    %2081 = vmatprep.subr.bf16.mxu0 0
    %2082 = vmatpush1.bf16.msra.mxu0 0
    %2083 = vmatprep.subr.bf16.mxu0 0
    %2084 = vmatpush1.bf16.msra.mxu0 0
    %2085 = vmatprep.subr.bf16.mxu0 0
    %2086 = vmatpush1.bf16.msra.mxu0 0
    %2087 = vmatprep.subr.bf16.mxu0 0
    %2088 = vmatpush1.bf16.msra.mxu0 0
    %2089 = vmatprep.subr.bf16.mxu0 0
    %2090 = vmatpush1.bf16.msra.mxu0 0
    %2091 = vmatprep.subr.bf16.mxu0 0
    %2092 = vmatpush1.bf16.msra.mxu0 0
    %2093 = vmatprep.subr.bf16.mxu0 0
    %2094 = vmatpush1.bf16.msra.mxu0 0
    %2095 = vmatprep.subr.bf16.mxu0 0
    %2096 = vmatpush1.bf16.msra.mxu0 0
    %2097 = vmatprep.subr.bf16.mxu0 0
    %2098 = vmatpush1.bf16.msra.mxu0 0
    %2099 = vmatprep.subr.bf16.mxu0 0
    %2100 = vmatpush1.bf16.msra.mxu0 0
    %2101 = vmatprep.subr.bf16.mxu0 0
    %2102 = vmatpush1.bf16.msra.mxu0 0
    %2103 = vmatprep.mubr.bf16.mxu0 0
    %2104 = vmatmul.mubr.bf16.gmra.mrb[0].mxu0 %v1892
    %v2105 = vpop.f32.mrb[0].mxu0
    %v2106 = vadd.f32 0.0, %v2105
    %v2107 = vpop.f32.mrb[0].mxu0
    %v2108 = vpop.f32.mrb[0].mxu0
    %v2109 = vadd.f32 0.0, %v2108
    %v2110 = vpop.f32.mrb[0].mxu0
    %2111 = vdwg.mxu0
    %v2113 = vsel %vm179, %v2029, 0
    %2115 = vmatprep.subr.bf16.mxu0 0
    %2116 = vmatpush1.bf16.msra.mxu0 %v293
    %2117 = vmatprep.subr.bf16.mxu0 0
    %2118 = vmatpush1.bf16.msra.mxu0 %v294
    %2119 = vmatprep.subr.bf16.mxu0 0
    %2120 = vmatpush1.bf16.msra.mxu0 0
    %2121 = vmatprep.subr.bf16.mxu0 0
    %2122 = vmatpush1.bf16.msra.mxu0 0
    %2123 = vmatprep.subr.bf16.mxu0 0
    %2124 = vmatpush1.bf16.msra.mxu0 0
    %2125 = vmatprep.subr.bf16.mxu0 0
    %2126 = vmatpush1.bf16.msra.mxu0 0
    %2127 = vmatprep.subr.bf16.mxu0 0
    %2128 = vmatpush1.bf16.msra.mxu0 0
    %2129 = vmatprep.subr.bf16.mxu0 0
    %2130 = vmatpush1.bf16.msra.mxu0 0
    %2131 = vmatprep.subr.bf16.mxu0 0
    %2132 = vmatpush1.bf16.msra.mxu0 0
    %2133 = vmatprep.subr.bf16.mxu0 0
    %2134 = vmatpush1.bf16.msra.mxu0 0
    %2135 = vmatprep.subr.bf16.mxu0 0
    %2136 = vmatpush1.bf16.msra.mxu0 0
    %2137 = vmatprep.subr.bf16.mxu0 0
    %2138 = vmatpush1.bf16.msra.mxu0 0
    %2139 = vmatprep.subr.bf16.mxu0 0
    %2140 = vmatpush1.bf16.msra.mxu0 0
    %2141 = vmatprep.subr.bf16.mxu0 0
    %2142 = vmatpush1.bf16.msra.mxu0 0
    %2143 = vmatprep.subr.bf16.mxu0 0
    %2144 = vmatpush1.bf16.msra.mxu0 0
    %2145 = vmatprep.subr.bf16.mxu0 0
    %2146 = vmatpush1.bf16.msra.mxu0 0
    %2147 = vmatprep.mubr.bf16.mxu0 0
    %2148 = vmatmul.mubr.bf16.gmra.mrb[0].mxu0 %v2113
    %v2149 = vpop.f32.mrb[0].mxu0
    %v2150 = vadd.f32 %v2065, %v2149
    %v2151 = vpop.f32.mrb[0].mxu0
    %v2152 = vpop.f32.mrb[0].mxu0
    %v2153 = vadd.f32 %v2068, %v2152
    %v2154 = vpop.f32.mrb[0].mxu0
    %2155 = vdwg.mxu0
    %v2156 = vadd.f32 %v2150, %v345
    %v2157 = vadd.f32 %v2153, %v345
    %v2158 = vxor.u32 %v2156, 2147483648
    %v2159 = vxor.u32 %v2157, 2147483648
    %v2160 = vmul.f32 %v2158, 1.442695
    %v2161 = vpow.pop %v2160
    %v2162 = vmul.f32 %v2159, 1.442695
    %v2163 = vpow.pop %v2162
    %v2164 = vadd.f32 %v2161, 1.0
    %v2165 = vadd.f32 %v2163, 1.0
    %v2166 = vrcp.pop %v2164
    %v2167 = vmul.f32 1.0, %v2166
    %v2168 = vrcp.pop %v2165
    %v2169 = vmul.f32 1.0, %v2168
    %2170 = vmatprep.subr.bf16.mxu0 0
    %2171 = vmatpush1.bf16.msra.mxu0 %v369
    %2172 = vmatprep.subr.bf16.mxu0 0
    %2173 = vmatpush1.bf16.msra.mxu0 %v370
    %2174 = vmatprep.subr.bf16.mxu0 0
    %2175 = vmatpush1.bf16.msra.mxu0 0
    %2176 = vmatprep.subr.bf16.mxu0 0
    %2177 = vmatpush1.bf16.msra.mxu0 0
    %2178 = vmatprep.subr.bf16.mxu0 0
    %2179 = vmatpush1.bf16.msra.mxu0 0
    %2180 = vmatprep.subr.bf16.mxu0 0
    %2181 = vmatpush1.bf16.msra.mxu0 0
    %2182 = vmatprep.subr.bf16.mxu0 0
    %2183 = vmatpush1.bf16.msra.mxu0 0
    %2184 = vmatprep.subr.bf16.mxu0 0
    %2185 = vmatpush1.bf16.msra.mxu0 0
    %2186 = vmatprep.subr.bf16.mxu0 0
    %2187 = vmatpush1.bf16.msra.mxu0 0
    %2188 = vmatprep.subr.bf16.mxu0 0
    %2189 = vmatpush1.bf16.msra.mxu0 0
    %2190 = vmatprep.subr.bf16.mxu0 0
    %2191 = vmatpush1.bf16.msra.mxu0 0
    %2192 = vmatprep.subr.bf16.mxu0 0
    %2193 = vmatpush1.bf16.msra.mxu0 0
    %2194 = vmatprep.subr.bf16.mxu0 0
    %2195 = vmatpush1.bf16.msra.mxu0 0
    %2196 = vmatprep.subr.bf16.mxu0 0
    %2197 = vmatpush1.bf16.msra.mxu0 0
    %2198 = vmatprep.subr.bf16.mxu0 0
    %2199 = vmatpush1.bf16.msra.mxu0 0
    %2200 = vmatprep.subr.bf16.mxu0 0
    %2201 = vmatpush1.bf16.msra.mxu0 0
    %2202 = vmatprep.mubr.bf16.mxu0 0
    %2203 = vmatmul.mubr.bf16.gmra.mrb[0].mxu0 %v2113
    %v2204 = vpop.f32.mrb[0].mxu0
    %v2205 = vadd.f32 %v2106, %v2204
    %v2206 = vpop.f32.mrb[0].mxu0
    %v2207 = vpop.f32.mrb[0].mxu0
    %v2208 = vadd.f32 %v2109, %v2207
    %v2209 = vpop.f32.mrb[0].mxu0
    %2210 = vdwg.mxu0
    %v2211 = vadd.f32 %v2205, %v418
    %v2212 = vadd.f32 %v2208, %v418
    %v2213 = vxor.u32 %v2211, 2147483648
    %v2214 = vxor.u32 %v2212, 2147483648
    %v2215 = vmul.f32 %v2213, 1.442695
    %v2216 = vpow.pop %v2215
    %v2217 = vmul.f32 %v2214, 1.442695
    %v2218 = vpow.pop %v2217
    %v2219 = vadd.f32 %v2216, 1.0
    %v2220 = vadd.f32 %v2218, 1.0
    %v2221 = vrcp.pop %v2219
    %v2222 = vmul.f32 1.0, %v2221
    %v2223 = vrcp.pop %v2220
    %v2224 = vmul.f32 1.0, %v2223
    %2225 = vmatprep.subr.bf16.mxu0 0
    %2226 = vmatpush1.bf16.msra.mxu0 %v448
    %2227 = vmatprep.subr.bf16.mxu0 0
    %2228 = vmatpush1.bf16.msra.mxu0 %v449
    %2229 = vmatprep.subr.bf16.mxu0 0
    %2230 = vmatpush1.bf16.msra.mxu0 0
    %2231 = vmatprep.subr.bf16.mxu0 0
    %2232 = vmatpush1.bf16.msra.mxu0 0
    %2233 = vmatprep.subr.bf16.mxu0 0
    %2234 = vmatpush1.bf16.msra.mxu0 0
    %2235 = vmatprep.subr.bf16.mxu0 0
    %2236 = vmatpush1.bf16.msra.mxu0 0
    %2237 = vmatprep.subr.bf16.mxu0 0
    %2238 = vmatpush1.bf16.msra.mxu0 0
    %2239 = vmatprep.subr.bf16.mxu0 0
    %2240 = vmatpush1.bf16.msra.mxu0 0
    %2241 = vmatprep.subr.bf16.mxu0 0
    %2242 = vmatpush1.bf16.msra.mxu0 0
    %2243 = vmatprep.subr.bf16.mxu0 0
    %2244 = vmatpush1.bf16.msra.mxu0 0
    %2245 = vmatprep.subr.bf16.mxu0 0
    %2246 = vmatpush1.bf16.msra.mxu0 0
    %2247 = vmatprep.subr.bf16.mxu0 0
    %2248 = vmatpush1.bf16.msra.mxu0 0
    %2249 = vmatprep.subr.bf16.mxu0 0
    %2250 = vmatpush1.bf16.msra.mxu0 0
    %2251 = vmatprep.subr.bf16.mxu0 0
    %2252 = vmatpush1.bf16.msra.mxu0 0
    %2253 = vmatprep.subr.bf16.mxu0 0
    %2254 = vmatpush1.bf16.msra.mxu0 0
    %2255 = vmatprep.subr.bf16.mxu0 0
    %2256 = vmatpush1.bf16.msra.mxu0 0
    %2257 = vmatprep.mubr.bf16.mxu0 0
    %2258 = vmatmul.mubr.bf16.gmra.mrb[0].mxu0 %v2113
    %v2259 = vpop.f32.mrb[0].mxu0
    %v2260 = vadd.f32 %v438, %v2259
    %v2261 = vpop.f32.mrb[0].mxu0
    %v2262 = vpop.f32.mrb[0].mxu0
    %v2263 = vadd.f32 %v438, %v2262
    %v2264 = vpop.f32.mrb[0].mxu0
    %2265 = vdwg.mxu0
    %2266 = vmatprep.subr.bf16.mxu0 0
    %2267 = vmatpush1.bf16.msra.mxu0 %v507
    %2268 = vmatprep.subr.bf16.mxu0 0
    %2269 = vmatpush1.bf16.msra.mxu0 %v508
    %2270 = vmatprep.subr.bf16.mxu0 0
    %2271 = vmatpush1.bf16.msra.mxu0 0
    %2272 = vmatprep.subr.bf16.mxu0 0
    %2273 = vmatpush1.bf16.msra.mxu0 0
    %2274 = vmatprep.subr.bf16.mxu0 0
    %2275 = vmatpush1.bf16.msra.mxu0 0
    %2276 = vmatprep.subr.bf16.mxu0 0
    %2277 = vmatpush1.bf16.msra.mxu0 0
    %2278 = vmatprep.subr.bf16.mxu0 0
    %2279 = vmatpush1.bf16.msra.mxu0 0
    %2280 = vmatprep.subr.bf16.mxu0 0
    %2281 = vmatpush1.bf16.msra.mxu0 0
    %2282 = vmatprep.subr.bf16.mxu0 0
    %2283 = vmatpush1.bf16.msra.mxu0 0
    %2284 = vmatprep.subr.bf16.mxu0 0
    %2285 = vmatpush1.bf16.msra.mxu0 0
    %2286 = vmatprep.subr.bf16.mxu0 0
    %2287 = vmatpush1.bf16.msra.mxu0 0
    %2288 = vmatprep.subr.bf16.mxu0 0
    %2289 = vmatpush1.bf16.msra.mxu0 0
    %2290 = vmatprep.subr.bf16.mxu0 0
    %2291 = vmatpush1.bf16.msra.mxu0 0
    %2292 = vmatprep.subr.bf16.mxu0 0
    %2293 = vmatpush1.bf16.msra.mxu0 0
    %2294 = vmatprep.subr.bf16.mxu0 0
    %2295 = vmatpush1.bf16.msra.mxu0 0
    %2296 = vmatprep.subr.bf16.mxu0 0
    %2297 = vmatpush1.bf16.msra.mxu0 0
    %2298 = vmatprep.mubr.bf16.mxu0 0
    %2299 = vmatmul.mubr.bf16.gmra.mrb[0].mxu0 %v1892
    %v2300 = vpop.f32.mrb[0].mxu0
    %v2301 = vadd.f32 %v497, %v2300
    %v2302 = vpop.f32.mrb[0].mxu0
    %v2303 = vpop.f32.mrb[0].mxu0
    %v2304 = vadd.f32 %v497, %v2303
    %v2305 = vpop.f32.mrb[0].mxu0
    %2306 = vdwg.mxu0
    %v2307 = vmul.f32 %v2167, %v2301
    %v2308 = vmul.f32 %v2169, %v2304
    %v2309 = vadd.f32 %v2260, %v2307
    %v2310 = vadd.f32 %v2263, %v2308
    %v2311 = vtanh.pop %v2309
    %v2312 = vtanh.pop %v2310
    %v2313 = vsub.f32 1.0, %v2222
    %v2314 = vsub.f32 1.0, %v2224
    %v2315 = vmul.f32 %v2313, %v2311
    %v2316 = vmul.f32 %v2314, %v2312
    %v2317 = vmul.f32 %v2222, %v1888
    %v2318 = vmul.f32 %v2224, %v1889
    %v2319 = vadd.f32 %v2315, %v2317
    %v2320 = vadd.f32 %v2316, %v2318
    %v2321 = vpack.c.bf16 %v2320, %v2319
    %v2323 = vsel %vm179, %v2321, 0
    %2325 = vmatprep.subr.bf16.mxu0 0
    %2326 = vmatpush1.bf16.msra.mxu0 %v585
    %2327 = vmatprep.subr.bf16.mxu0 0
    %2328 = vmatpush1.bf16.msra.mxu0 %v586
    %2329 = vmatprep.subr.bf16.mxu0 0
    %2330 = vmatpush1.bf16.msra.mxu0 0
    %2331 = vmatprep.subr.bf16.mxu0 0
    %2332 = vmatpush1.bf16.msra.mxu0 0
    %2333 = vmatprep.subr.bf16.mxu0 0
    %2334 = vmatpush1.bf16.msra.mxu0 0
    %2335 = vmatprep.subr.bf16.mxu0 0
    %2336 = vmatpush1.bf16.msra.mxu0 0
    %2337 = vmatprep.subr.bf16.mxu0 0
    %2338 = vmatpush1.bf16.msra.mxu0 0
    %2339 = vmatprep.subr.bf16.mxu0 0
    %2340 = vmatpush1.bf16.msra.mxu0 0
    %2341 = vmatprep.subr.bf16.mxu0 0
    %2342 = vmatpush1.bf16.msra.mxu0 0
    %2343 = vmatprep.subr.bf16.mxu0 0
    %2344 = vmatpush1.bf16.msra.mxu0 0
    %2345 = vmatprep.subr.bf16.mxu0 0
    %2346 = vmatpush1.bf16.msra.mxu0 0
    %2347 = vmatprep.subr.bf16.mxu0 0
    %2348 = vmatpush1.bf16.msra.mxu0 0
    %2349 = vmatprep.subr.bf16.mxu0 0
    %2350 = vmatpush1.bf16.msra.mxu0 0
    %2351 = vmatprep.subr.bf16.mxu0 0
    %2352 = vmatpush1.bf16.msra.mxu0 0
    %2353 = vmatprep.subr.bf16.mxu0 0
    %2354 = vmatpush1.bf16.msra.mxu0 0
    %2355 = vmatprep.subr.bf16.mxu0 0
    %2356 = vmatpush1.bf16.msra.mxu0 0
    %2357 = vmatprep.mubr.bf16.mxu0 0
    %2358 = vmatmul.mubr.bf16.gmra.mrb[0].mxu0 %v2323
    %v2359 = vpop.f32.mrb[0].mxu0
    %v2360 = vadd.f32 %v575, %v2359
    %v2361 = vpop.f32.mrb[0].mxu0
    %v2362 = vpop.f32.mrb[0].mxu0
    %v2363 = vadd.f32 %v575, %v2362
    %v2364 = vpop.f32.mrb[0].mxu0
    %2365 = vdwg.mxu0
    %v2366 = vsel %vm633, %v2360, -inf
    %2367 = vmax.xlane.f32.xlu0 %v2366
    %v2368 = vpop.xlane.xlu0 %2367
    %v2369 = vsel %vm633, %v2363, -inf
    %2370 = vmax.xlane.f32.xlu0 %v2369
    %v2371 = vpop.xlane.xlu0 %2370
    %vm2372 = vcmp.eq.f32.partialorder %v2360, %v2368
    %vm2373 = vcmp.eq.f32.partialorder %v2363, %v2371
    %v2374 = vsel %vm2372, %v144, 16
    %v2375 = vsel %vm2373, %v144, 16
    %v2376 = vsel %vm633, %v2374, 2147483647
    %v2377 = vand.u32 %v2376, 65535
    %v2378 = vshra.s32 %v2376, 16
    %v2379 = vcvt.s32.f32 %v2377
    %v2380 = vcvt.s32.f32 %v2378
    %2381 = vmin.xlane.f32.xlu0 %v2380
    %v2382 = vpop.xlane.xlu0 %2381
    %vm2383 = vcmp.eq.f32.partialorder %v2380, %v2382
    %v2384 = vsel %vm2383, %v2379, inf
    %2385 = vmin.xlane.f32.xlu0 %v2384
    %v2386 = vpop.xlane.xlu0 %2385
    %v2387 = vcvt.f32.s32 %v2386
    %v2388 = vcvt.f32.s32 %v2382
    %v2389 = vshll.u32 %v2388, 16
    %v2390 = vadd.s32 %v2389, %v2387
    %v2391 = vsel %vm633, %v2375, 2147483647
    %v2392 = vand.u32 %v2391, 65535
    %v2393 = vshra.s32 %v2391, 16
    %v2394 = vcvt.s32.f32 %v2392
    %v2395 = vcvt.s32.f32 %v2393
    %2396 = vmin.xlane.f32.xlu0 %v2395
    %v2397 = vpop.xlane.xlu0 %2396
    %vm2398 = vcmp.eq.f32.partialorder %v2395, %v2397
    %v2399 = vsel %vm2398, %v2394, inf
    %2400 = vmin.xlane.f32.xlu0 %v2399
    %v2401 = vpop.xlane.xlu0 %2400
    %v2402 = vcvt.f32.s32 %v2401
    %v2403 = vcvt.f32.s32 %v2397
    %v2404 = vshll.u32 %v2403, 16
    %v2405 = vadd.s32 %v2404, %v2402
    %vm2406 = vcmp.eq.s32.totalorder %v144, 4
    %v2407 = vsel %vm2406, %v2390, %v1976
    %v2408 = vsel %vm2406, %v2405, %v1977
    %vm2409 = vcmp.eq.s32.totalorder %v144, %v2390
    %vm2410 = vcmp.eq.s32.totalorder %v144, %v2405
    %v2411 = vsel %vm2409, 1, 0
    %v2412 = vsel %vm2410, 1, 0
    %v2413 = vcvt.s32.f32 %v2411
    %v2414 = vcvt.s32.f32 %v2412
    %v2415 = vpack.c.bf16 %v2414, %v2413
    %v2417 = vsel %vm633, %v2415, 0
    %2419 = vmatprep.subr.bf16.mxu0 0
    %2420 = vmatpush1.bf16.msra.mxu0 %v690
    %2421 = vmatprep.subr.bf16.mxu0 0
    %2422 = vmatpush1.bf16.msra.mxu0 0
    %2423 = vmatprep.subr.bf16.mxu0 0
    %2424 = vmatpush1.bf16.msra.mxu0 0
    %2425 = vmatprep.subr.bf16.mxu0 0
    %2426 = vmatpush1.bf16.msra.mxu0 0
    %2427 = vmatprep.subr.bf16.mxu0 0
    %2428 = vmatpush1.bf16.msra.mxu0 0
    %2429 = vmatprep.subr.bf16.mxu0 0
    %2430 = vmatpush1.bf16.msra.mxu0 0
    %2431 = vmatprep.subr.bf16.mxu0 0
    %2432 = vmatpush1.bf16.msra.mxu0 0
    %2433 = vmatprep.subr.bf16.mxu0 0
    %2434 = vmatpush1.bf16.msra.mxu0 0
    %2435 = vmatprep.subr.bf16.mxu0 0
    %2436 = vmatpush1.bf16.msra.mxu0 0
    %2437 = vmatprep.subr.bf16.mxu0 0
    %2438 = vmatpush1.bf16.msra.mxu0 0
    %2439 = vmatprep.subr.bf16.mxu0 0
    %2440 = vmatpush1.bf16.msra.mxu0 0
    %2441 = vmatprep.subr.bf16.mxu0 0
    %2442 = vmatpush1.bf16.msra.mxu0 0
    %2443 = vmatprep.subr.bf16.mxu0 0
    %2444 = vmatpush1.bf16.msra.mxu0 0
    %2445 = vmatprep.subr.bf16.mxu0 0
    %2446 = vmatpush1.bf16.msra.mxu0 0
    %2447 = vmatprep.subr.bf16.mxu0 0
    %2448 = vmatpush1.bf16.msra.mxu0 0
    %2449 = vmatprep.subr.bf16.mxu0 0
    %2450 = vmatpush1.bf16.msra.mxu0 0
    %2451 = vmatprep.mubr.bf16.mxu0 0
    %2452 = vmatmul.mubr.bf16.gmra.mrb[0].mxu0 %v2417
    %v2453 = vpop.f32.mrb[0].mxu0
    %v2454 = vadd.f32 0.0, %v2453
    %v2455 = vpop.f32.mrb[0].mxu0
    %v2456 = vpop.f32.mrb[0].mxu0
    %v2457 = vadd.f32 0.0, %v2456
    %v2458 = vpop.f32.mrb[0].mxu0
    %2459 = vdwg.mxu0
    %v2460 = vpack.c.bf16 %v2457, %v2454
    %2461 = vmatprep.subr.bf16.mxu0 0
    %2462 = vmatpush1.bf16.msra.mxu0 %v175
    %2463 = vmatprep.subr.bf16.mxu0 0
    %2464 = vmatpush1.bf16.msra.mxu0 %v176
    %2465 = vmatprep.subr.bf16.mxu0 0
    %2466 = vmatpush1.bf16.msra.mxu0 0
    %2467 = vmatprep.subr.bf16.mxu0 0
    %2468 = vmatpush1.bf16.msra.mxu0 0
    %2469 = vmatprep.subr.bf16.mxu0 0
    %2470 = vmatpush1.bf16.msra.mxu0 0
    %2471 = vmatprep.subr.bf16.mxu0 0
    %2472 = vmatpush1.bf16.msra.mxu0 0
    %2473 = vmatprep.subr.bf16.mxu0 0
    %2474 = vmatpush1.bf16.msra.mxu0 0
    %2475 = vmatprep.subr.bf16.mxu0 0
    %2476 = vmatpush1.bf16.msra.mxu0 0
    %2477 = vmatprep.subr.bf16.mxu0 0
    %2478 = vmatpush1.bf16.msra.mxu0 0
    %2479 = vmatprep.subr.bf16.mxu0 0
    %2480 = vmatpush1.bf16.msra.mxu0 0
    %2481 = vmatprep.subr.bf16.mxu0 0
    %2482 = vmatpush1.bf16.msra.mxu0 0
    %2483 = vmatprep.subr.bf16.mxu0 0
    %2484 = vmatpush1.bf16.msra.mxu0 0
    %2485 = vmatprep.subr.bf16.mxu0 0
    %2486 = vmatpush1.bf16.msra.mxu0 0
    %2487 = vmatprep.subr.bf16.mxu0 0
    %2488 = vmatpush1.bf16.msra.mxu0 0
    %2489 = vmatprep.subr.bf16.mxu0 0
    %2490 = vmatpush1.bf16.msra.mxu0 0
    %2491 = vmatprep.subr.bf16.mxu0 0
    %2492 = vmatpush1.bf16.msra.mxu0 0
    %2493 = vmatprep.mubr.bf16.mxu0 0
    %2494 = vmatmul.mubr.bf16.gmra.mrb[0].mxu0 %v2323
    %v2495 = vpop.f32.mrb[0].mxu0
    %v2496 = vadd.f32 0.0, %v2495
    %v2497 = vpop.f32.mrb[0].mxu0
    %v2498 = vpop.f32.mrb[0].mxu0
    %v2499 = vadd.f32 0.0, %v2498
    %v2500 = vpop.f32.mrb[0].mxu0
    %2501 = vdwg.mxu0
    %2502 = vmatprep.subr.bf16.mxu0 0
    %2503 = vmatpush1.bf16.msra.mxu0 %v236
    %2504 = vmatprep.subr.bf16.mxu0 0
    %2505 = vmatpush1.bf16.msra.mxu0 %v237
    %2506 = vmatprep.subr.bf16.mxu0 0
    %2507 = vmatpush1.bf16.msra.mxu0 0
    %2508 = vmatprep.subr.bf16.mxu0 0
    %2509 = vmatpush1.bf16.msra.mxu0 0
    %2510 = vmatprep.subr.bf16.mxu0 0
    %2511 = vmatpush1.bf16.msra.mxu0 0
    %2512 = vmatprep.subr.bf16.mxu0 0
    %2513 = vmatpush1.bf16.msra.mxu0 0
    %2514 = vmatprep.subr.bf16.mxu0 0
    %2515 = vmatpush1.bf16.msra.mxu0 0
    %2516 = vmatprep.subr.bf16.mxu0 0
    %2517 = vmatpush1.bf16.msra.mxu0 0
    %2518 = vmatprep.subr.bf16.mxu0 0
    %2519 = vmatpush1.bf16.msra.mxu0 0
    %2520 = vmatprep.subr.bf16.mxu0 0
    %2521 = vmatpush1.bf16.msra.mxu0 0
    %2522 = vmatprep.subr.bf16.mxu0 0
    %2523 = vmatpush1.bf16.msra.mxu0 0
    %2524 = vmatprep.subr.bf16.mxu0 0
    %2525 = vmatpush1.bf16.msra.mxu0 0
    %2526 = vmatprep.subr.bf16.mxu0 0
    %2527 = vmatpush1.bf16.msra.mxu0 0
    %2528 = vmatprep.subr.bf16.mxu0 0
    %2529 = vmatpush1.bf16.msra.mxu0 0
    %2530 = vmatprep.subr.bf16.mxu0 0
    %2531 = vmatpush1.bf16.msra.mxu0 0
    %2532 = vmatprep.subr.bf16.mxu0 0
    %2533 = vmatpush1.bf16.msra.mxu0 0
    %2534 = vmatprep.mubr.bf16.mxu0 0
    %2535 = vmatmul.mubr.bf16.gmra.mrb[0].mxu0 %v2323
    %v2536 = vpop.f32.mrb[0].mxu0
    %v2537 = vadd.f32 0.0, %v2536
    %v2538 = vpop.f32.mrb[0].mxu0
    %v2539 = vpop.f32.mrb[0].mxu0
    %v2540 = vadd.f32 0.0, %v2539
    %v2541 = vpop.f32.mrb[0].mxu0
    %2542 = vdwg.mxu0
    %v2544 = vsel %vm179, %v2460, 0
    %2546 = vmatprep.subr.bf16.mxu0 0
    %2547 = vmatpush1.bf16.msra.mxu0 %v293
    %2548 = vmatprep.subr.bf16.mxu0 0
    %2549 = vmatpush1.bf16.msra.mxu0 %v294
    %2550 = vmatprep.subr.bf16.mxu0 0
    %2551 = vmatpush1.bf16.msra.mxu0 0
    %2552 = vmatprep.subr.bf16.mxu0 0
    %2553 = vmatpush1.bf16.msra.mxu0 0
    %2554 = vmatprep.subr.bf16.mxu0 0
    %2555 = vmatpush1.bf16.msra.mxu0 0
    %2556 = vmatprep.subr.bf16.mxu0 0
    %2557 = vmatpush1.bf16.msra.mxu0 0
    %2558 = vmatprep.subr.bf16.mxu0 0
    %2559 = vmatpush1.bf16.msra.mxu0 0
    %2560 = vmatprep.subr.bf16.mxu0 0
    %2561 = vmatpush1.bf16.msra.mxu0 0
    %2562 = vmatprep.subr.bf16.mxu0 0
    %2563 = vmatpush1.bf16.msra.mxu0 0
    %2564 = vmatprep.subr.bf16.mxu0 0
    %2565 = vmatpush1.bf16.msra.mxu0 0
    %2566 = vmatprep.subr.bf16.mxu0 0
    %2567 = vmatpush1.bf16.msra.mxu0 0
    %2568 = vmatprep.subr.bf16.mxu0 0
    %2569 = vmatpush1.bf16.msra.mxu0 0
    %2570 = vmatprep.subr.bf16.mxu0 0
    %2571 = vmatpush1.bf16.msra.mxu0 0
    %2572 = vmatprep.subr.bf16.mxu0 0
    %2573 = vmatpush1.bf16.msra.mxu0 0
    %2574 = vmatprep.subr.bf16.mxu0 0
    %2575 = vmatpush1.bf16.msra.mxu0 0
    %2576 = vmatprep.subr.bf16.mxu0 0
    %2577 = vmatpush1.bf16.msra.mxu0 0
    %2578 = vmatprep.mubr.bf16.mxu0 0
    %2579 = vmatmul.mubr.bf16.gmra.mrb[0].mxu0 %v2544
    %v2580 = vpop.f32.mrb[0].mxu0
    %v2581 = vadd.f32 %v2496, %v2580
    %v2582 = vpop.f32.mrb[0].mxu0
    %v2583 = vpop.f32.mrb[0].mxu0
    %v2584 = vadd.f32 %v2499, %v2583
    %v2585 = vpop.f32.mrb[0].mxu0
    %2586 = vdwg.mxu0
    %v2587 = vadd.f32 %v2581, %v345
    %v2588 = vadd.f32 %v2584, %v345
    %v2589 = vxor.u32 %v2587, 2147483648
    %v2590 = vxor.u32 %v2588, 2147483648
    %v2591 = vmul.f32 %v2589, 1.442695
    %v2592 = vpow.pop %v2591
    %v2593 = vmul.f32 %v2590, 1.442695
    %v2594 = vpow.pop %v2593
    %v2595 = vadd.f32 %v2592, 1.0
    %v2596 = vadd.f32 %v2594, 1.0
    %v2597 = vrcp.pop %v2595
    %v2598 = vmul.f32 1.0, %v2597
    %v2599 = vrcp.pop %v2596
    %v2600 = vmul.f32 1.0, %v2599
    %2601 = vmatprep.subr.bf16.mxu0 0
    %2602 = vmatpush1.bf16.msra.mxu0 %v369
    %2603 = vmatprep.subr.bf16.mxu0 0
    %2604 = vmatpush1.bf16.msra.mxu0 %v370
    %2605 = vmatprep.subr.bf16.mxu0 0
    %2606 = vmatpush1.bf16.msra.mxu0 0
    %2607 = vmatprep.subr.bf16.mxu0 0
    %2608 = vmatpush1.bf16.msra.mxu0 0
    %2609 = vmatprep.subr.bf16.mxu0 0
    %2610 = vmatpush1.bf16.msra.mxu0 0
    %2611 = vmatprep.subr.bf16.mxu0 0
    %2612 = vmatpush1.bf16.msra.mxu0 0
    %2613 = vmatprep.subr.bf16.mxu0 0
    %2614 = vmatpush1.bf16.msra.mxu0 0
    %2615 = vmatprep.subr.bf16.mxu0 0
    %2616 = vmatpush1.bf16.msra.mxu0 0
    %2617 = vmatprep.subr.bf16.mxu0 0
    %2618 = vmatpush1.bf16.msra.mxu0 0
    %2619 = vmatprep.subr.bf16.mxu0 0
    %2620 = vmatpush1.bf16.msra.mxu0 0
    %2621 = vmatprep.subr.bf16.mxu0 0
    %2622 = vmatpush1.bf16.msra.mxu0 0
    %2623 = vmatprep.subr.bf16.mxu0 0
    %2624 = vmatpush1.bf16.msra.mxu0 0
    %2625 = vmatprep.subr.bf16.mxu0 0
    %2626 = vmatpush1.bf16.msra.mxu0 0
    %2627 = vmatprep.subr.bf16.mxu0 0
    %2628 = vmatpush1.bf16.msra.mxu0 0
    %2629 = vmatprep.subr.bf16.mxu0 0
    %2630 = vmatpush1.bf16.msra.mxu0 0
    %2631 = vmatprep.subr.bf16.mxu0 0
    %2632 = vmatpush1.bf16.msra.mxu0 0
    %2633 = vmatprep.mubr.bf16.mxu0 0
    %2634 = vmatmul.mubr.bf16.gmra.mrb[0].mxu0 %v2544
    %v2635 = vpop.f32.mrb[0].mxu0
    %v2636 = vadd.f32 %v2537, %v2635
    %v2637 = vpop.f32.mrb[0].mxu0
    %v2638 = vpop.f32.mrb[0].mxu0
    %v2639 = vadd.f32 %v2540, %v2638
    %v2640 = vpop.f32.mrb[0].mxu0
    %2641 = vdwg.mxu0
    %v2642 = vadd.f32 %v2636, %v418
    %v2643 = vadd.f32 %v2639, %v418
    %v2644 = vxor.u32 %v2642, 2147483648
    %v2645 = vxor.u32 %v2643, 2147483648
    %v2646 = vmul.f32 %v2644, 1.442695
    %v2647 = vpow.pop %v2646
    %v2648 = vmul.f32 %v2645, 1.442695
    %v2649 = vpow.pop %v2648
    %v2650 = vadd.f32 %v2647, 1.0
    %v2651 = vadd.f32 %v2649, 1.0
    %v2652 = vrcp.pop %v2650
    %v2653 = vmul.f32 1.0, %v2652
    %v2654 = vrcp.pop %v2651
    %v2655 = vmul.f32 1.0, %v2654
    %2656 = vmatprep.subr.bf16.mxu0 0
    %2657 = vmatpush1.bf16.msra.mxu0 %v448
    %2658 = vmatprep.subr.bf16.mxu0 0
    %2659 = vmatpush1.bf16.msra.mxu0 %v449
    %2660 = vmatprep.subr.bf16.mxu0 0
    %2661 = vmatpush1.bf16.msra.mxu0 0
    %2662 = vmatprep.subr.bf16.mxu0 0
    %2663 = vmatpush1.bf16.msra.mxu0 0
    %2664 = vmatprep.subr.bf16.mxu0 0
    %2665 = vmatpush1.bf16.msra.mxu0 0
    %2666 = vmatprep.subr.bf16.mxu0 0
    %2667 = vmatpush1.bf16.msra.mxu0 0
    %2668 = vmatprep.subr.bf16.mxu0 0
    %2669 = vmatpush1.bf16.msra.mxu0 0
    %2670 = vmatprep.subr.bf16.mxu0 0
    %2671 = vmatpush1.bf16.msra.mxu0 0
    %2672 = vmatprep.subr.bf16.mxu0 0
    %2673 = vmatpush1.bf16.msra.mxu0 0
    %2674 = vmatprep.subr.bf16.mxu0 0
    %2675 = vmatpush1.bf16.msra.mxu0 0
    %2676 = vmatprep.subr.bf16.mxu0 0
    %2677 = vmatpush1.bf16.msra.mxu0 0
    %2678 = vmatprep.subr.bf16.mxu0 0
    %2679 = vmatpush1.bf16.msra.mxu0 0
    %2680 = vmatprep.subr.bf16.mxu0 0
    %2681 = vmatpush1.bf16.msra.mxu0 0
    %2682 = vmatprep.subr.bf16.mxu0 0
    %2683 = vmatpush1.bf16.msra.mxu0 0
    %2684 = vmatprep.subr.bf16.mxu0 0
    %2685 = vmatpush1.bf16.msra.mxu0 0
    %2686 = vmatprep.subr.bf16.mxu0 0
    %2687 = vmatpush1.bf16.msra.mxu0 0
    %2688 = vmatprep.mubr.bf16.mxu0 0
    %2689 = vmatmul.mubr.bf16.gmra.mrb[0].mxu0 %v2544
    %v2690 = vpop.f32.mrb[0].mxu0
    %v2691 = vadd.f32 %v438, %v2690
    %v2692 = vpop.f32.mrb[0].mxu0
    %v2693 = vpop.f32.mrb[0].mxu0
    %v2694 = vadd.f32 %v438, %v2693
    %v2695 = vpop.f32.mrb[0].mxu0
    %2696 = vdwg.mxu0
    %2697 = vmatprep.subr.bf16.mxu0 0
    %2698 = vmatpush1.bf16.msra.mxu0 %v507
    %2699 = vmatprep.subr.bf16.mxu0 0
    %2700 = vmatpush1.bf16.msra.mxu0 %v508
    %2701 = vmatprep.subr.bf16.mxu0 0
    %2702 = vmatpush1.bf16.msra.mxu0 0
    %2703 = vmatprep.subr.bf16.mxu0 0
    %2704 = vmatpush1.bf16.msra.mxu0 0
    %2705 = vmatprep.subr.bf16.mxu0 0
    %2706 = vmatpush1.bf16.msra.mxu0 0
    %2707 = vmatprep.subr.bf16.mxu0 0
    %2708 = vmatpush1.bf16.msra.mxu0 0
    %2709 = vmatprep.subr.bf16.mxu0 0
    %2710 = vmatpush1.bf16.msra.mxu0 0
    %2711 = vmatprep.subr.bf16.mxu0 0
    %2712 = vmatpush1.bf16.msra.mxu0 0
    %2713 = vmatprep.subr.bf16.mxu0 0
    %2714 = vmatpush1.bf16.msra.mxu0 0
    %2715 = vmatprep.subr.bf16.mxu0 0
    %2716 = vmatpush1.bf16.msra.mxu0 0
    %2717 = vmatprep.subr.bf16.mxu0 0
    %2718 = vmatpush1.bf16.msra.mxu0 0
    %2719 = vmatprep.subr.bf16.mxu0 0
    %2720 = vmatpush1.bf16.msra.mxu0 0
    %2721 = vmatprep.subr.bf16.mxu0 0
    %2722 = vmatpush1.bf16.msra.mxu0 0
    %2723 = vmatprep.subr.bf16.mxu0 0
    %2724 = vmatpush1.bf16.msra.mxu0 0
    %2725 = vmatprep.subr.bf16.mxu0 0
    %2726 = vmatpush1.bf16.msra.mxu0 0
    %2727 = vmatprep.subr.bf16.mxu0 0
    %2728 = vmatpush1.bf16.msra.mxu0 0
    %2729 = vmatprep.mubr.bf16.mxu0 0
    %2730 = vmatmul.mubr.bf16.gmra.mrb[0].mxu0 %v2323
    %v2731 = vpop.f32.mrb[0].mxu0
    %v2732 = vadd.f32 %v497, %v2731
    %v2733 = vpop.f32.mrb[0].mxu0
    %v2734 = vpop.f32.mrb[0].mxu0
    %v2735 = vadd.f32 %v497, %v2734
    %v2736 = vpop.f32.mrb[0].mxu0
    %2737 = vdwg.mxu0
    %v2738 = vmul.f32 %v2598, %v2732
    %v2739 = vmul.f32 %v2600, %v2735
    %v2740 = vadd.f32 %v2691, %v2738
    %v2741 = vadd.f32 %v2694, %v2739
    %v2742 = vtanh.pop %v2740
    %v2743 = vtanh.pop %v2741
    %v2744 = vsub.f32 1.0, %v2653
    %v2745 = vsub.f32 1.0, %v2655
    %v2746 = vmul.f32 %v2744, %v2742
    %v2747 = vmul.f32 %v2745, %v2743
    %v2748 = vmul.f32 %v2653, %v2319
    %v2749 = vmul.f32 %v2655, %v2320
    %v2750 = vadd.f32 %v2746, %v2748
    %v2751 = vadd.f32 %v2747, %v2749
    %v2752 = vpack.c.bf16 %v2751, %v2750
    %v2754 = vsel %vm179, %v2752, 0
    %2756 = vmatprep.subr.bf16.mxu0 0
    %2757 = vmatpush1.bf16.msra.mxu0 %v585
    %2758 = vmatprep.subr.bf16.mxu0 0
    %2759 = vmatpush1.bf16.msra.mxu0 %v586
    %2760 = vmatprep.subr.bf16.mxu0 0
    %2761 = vmatpush1.bf16.msra.mxu0 0
    %2762 = vmatprep.subr.bf16.mxu0 0
    %2763 = vmatpush1.bf16.msra.mxu0 0
    %2764 = vmatprep.subr.bf16.mxu0 0
    %2765 = vmatpush1.bf16.msra.mxu0 0
    %2766 = vmatprep.subr.bf16.mxu0 0
    %2767 = vmatpush1.bf16.msra.mxu0 0
    %2768 = vmatprep.subr.bf16.mxu0 0
    %2769 = vmatpush1.bf16.msra.mxu0 0
    %2770 = vmatprep.subr.bf16.mxu0 0
    %2771 = vmatpush1.bf16.msra.mxu0 0
    %2772 = vmatprep.subr.bf16.mxu0 0
    %2773 = vmatpush1.bf16.msra.mxu0 0
    %2774 = vmatprep.subr.bf16.mxu0 0
    %2775 = vmatpush1.bf16.msra.mxu0 0
    %2776 = vmatprep.subr.bf16.mxu0 0
    %2777 = vmatpush1.bf16.msra.mxu0 0
    %2778 = vmatprep.subr.bf16.mxu0 0
    %2779 = vmatpush1.bf16.msra.mxu0 0
    %2780 = vmatprep.subr.bf16.mxu0 0
    %2781 = vmatpush1.bf16.msra.mxu0 0
    %2782 = vmatprep.subr.bf16.mxu0 0
    %2783 = vmatpush1.bf16.msra.mxu0 0
    %2784 = vmatprep.subr.bf16.mxu0 0
    %2785 = vmatpush1.bf16.msra.mxu0 0
    %2786 = vmatprep.subr.bf16.mxu0 0
    %2787 = vmatpush1.bf16.msra.mxu0 0
    %2788 = vmatprep.mubr.bf16.mxu0 0
    %2789 = vmatmul.mubr.bf16.gmra.mrb[0].mxu0 %v2754
    %v2790 = vpop.f32.mrb[0].mxu0
    %v2791 = vadd.f32 %v575, %v2790
    %v2792 = vpop.f32.mrb[0].mxu0
    %v2793 = vpop.f32.mrb[0].mxu0
    %v2794 = vadd.f32 %v575, %v2793
    %v2795 = vpop.f32.mrb[0].mxu0
    %2796 = vdwg.mxu0
    %v2797 = vsel %vm633, %v2791, -inf
    %2798 = vmax.xlane.f32.xlu0 %v2797
    %v2799 = vpop.xlane.xlu0 %2798
    %v2800 = vsel %vm633, %v2794, -inf
    %2801 = vmax.xlane.f32.xlu0 %v2800
    %v2802 = vpop.xlane.xlu0 %2801
    %vm2803 = vcmp.eq.f32.partialorder %v2791, %v2799
    %vm2804 = vcmp.eq.f32.partialorder %v2794, %v2802
    %v2805 = vsel %vm2803, %v144, 16
    %v2806 = vsel %vm2804, %v144, 16
    %v2807 = vsel %vm633, %v2805, 2147483647
    %v2808 = vand.u32 %v2807, 65535
    %v2809 = vshra.s32 %v2807, 16
    %v2810 = vcvt.s32.f32 %v2808
    %v2811 = vcvt.s32.f32 %v2809
    %2812 = vmin.xlane.f32.xlu0 %v2811
    %v2813 = vpop.xlane.xlu0 %2812
    %vm2814 = vcmp.eq.f32.partialorder %v2811, %v2813
    %v2815 = vsel %vm2814, %v2810, inf
    %2816 = vmin.xlane.f32.xlu0 %v2815
    %v2817 = vpop.xlane.xlu0 %2816
    %v2818 = vcvt.f32.s32 %v2817
    %v2819 = vcvt.f32.s32 %v2813
    %v2820 = vshll.u32 %v2819, 16
    %v2821 = vadd.s32 %v2820, %v2818
    %v2822 = vsel %vm633, %v2806, 2147483647
    %v2823 = vand.u32 %v2822, 65535
    %v2824 = vshra.s32 %v2822, 16
    %v2825 = vcvt.s32.f32 %v2823
    %v2826 = vcvt.s32.f32 %v2824
    %2827 = vmin.xlane.f32.xlu0 %v2826
    %v2828 = vpop.xlane.xlu0 %2827
    %vm2829 = vcmp.eq.f32.partialorder %v2826, %v2828
    %v2830 = vsel %vm2829, %v2825, inf
    %2831 = vmin.xlane.f32.xlu0 %v2830
    %v2832 = vpop.xlane.xlu0 %2831
    %v2833 = vcvt.f32.s32 %v2832
    %v2834 = vcvt.f32.s32 %v2828
    %v2835 = vshll.u32 %v2834, 16
    %v2836 = vadd.s32 %v2835, %v2833
    %vm2837 = vcmp.eq.s32.totalorder %v144, 5
    %v2838 = vsel %vm2837, %v2821, %v2407
    %v2839 = vsel %vm2837, %v2836, %v2408
    %vm2840 = vcmp.eq.s32.totalorder %v144, %v2821
    %vm2841 = vcmp.eq.s32.totalorder %v144, %v2836
    %v2842 = vsel %vm2840, 1, 0
    %v2843 = vsel %vm2841, 1, 0
    %v2844 = vcvt.s32.f32 %v2842
    %v2845 = vcvt.s32.f32 %v2843
    %v2846 = vpack.c.bf16 %v2845, %v2844
    %v2848 = vsel %vm633, %v2846, 0
    %2850 = vmatprep.subr.bf16.mxu0 0
    %2851 = vmatpush1.bf16.msra.mxu0 %v690
    %2852 = vmatprep.subr.bf16.mxu0 0
    %2853 = vmatpush1.bf16.msra.mxu0 0
    %2854 = vmatprep.subr.bf16.mxu0 0
    %2855 = vmatpush1.bf16.msra.mxu0 0
    %2856 = vmatprep.subr.bf16.mxu0 0
    %2857 = vmatpush1.bf16.msra.mxu0 0
    %2858 = vmatprep.subr.bf16.mxu0 0
    %2859 = vmatpush1.bf16.msra.mxu0 0
    %2860 = vmatprep.subr.bf16.mxu0 0
    %2861 = vmatpush1.bf16.msra.mxu0 0
    %2862 = vmatprep.subr.bf16.mxu0 0
    %2863 = vmatpush1.bf16.msra.mxu0 0
    %2864 = vmatprep.subr.bf16.mxu0 0
    %2865 = vmatpush1.bf16.msra.mxu0 0
    %2866 = vmatprep.subr.bf16.mxu0 0
    %2867 = vmatpush1.bf16.msra.mxu0 0
    %2868 = vmatprep.subr.bf16.mxu0 0
    %2869 = vmatpush1.bf16.msra.mxu0 0
    %2870 = vmatprep.subr.bf16.mxu0 0
    %2871 = vmatpush1.bf16.msra.mxu0 0
    %2872 = vmatprep.subr.bf16.mxu0 0
    %2873 = vmatpush1.bf16.msra.mxu0 0
    %2874 = vmatprep.subr.bf16.mxu0 0
    %2875 = vmatpush1.bf16.msra.mxu0 0
    %2876 = vmatprep.subr.bf16.mxu0 0
    %2877 = vmatpush1.bf16.msra.mxu0 0
    %2878 = vmatprep.subr.bf16.mxu0 0
    %2879 = vmatpush1.bf16.msra.mxu0 0
    %2880 = vmatprep.subr.bf16.mxu0 0
    %2881 = vmatpush1.bf16.msra.mxu0 0
    %2882 = vmatprep.mubr.bf16.mxu0 0
    %2883 = vmatmul.mubr.bf16.gmra.mrb[0].mxu0 %v2848
    %v2884 = vpop.f32.mrb[0].mxu0
    %v2885 = vadd.f32 0.0, %v2884
    %v2886 = vpop.f32.mrb[0].mxu0
    %v2887 = vpop.f32.mrb[0].mxu0
    %v2888 = vadd.f32 0.0, %v2887
    %v2889 = vpop.f32.mrb[0].mxu0
    %2890 = vdwg.mxu0
    %v2891 = vpack.c.bf16 %v2888, %v2885
    %2892 = vmatprep.subr.bf16.mxu0 0
    %2893 = vmatpush1.bf16.msra.mxu0 %v175
    %2894 = vmatprep.subr.bf16.mxu0 0
    %2895 = vmatpush1.bf16.msra.mxu0 %v176
    %2896 = vmatprep.subr.bf16.mxu0 0
    %2897 = vmatpush1.bf16.msra.mxu0 0
    %2898 = vmatprep.subr.bf16.mxu0 0
    %2899 = vmatpush1.bf16.msra.mxu0 0
    %2900 = vmatprep.subr.bf16.mxu0 0
    %2901 = vmatpush1.bf16.msra.mxu0 0
    %2902 = vmatprep.subr.bf16.mxu0 0
    %2903 = vmatpush1.bf16.msra.mxu0 0
    %2904 = vmatprep.subr.bf16.mxu0 0
    %2905 = vmatpush1.bf16.msra.mxu0 0
    %2906 = vmatprep.subr.bf16.mxu0 0
    %2907 = vmatpush1.bf16.msra.mxu0 0
    %2908 = vmatprep.subr.bf16.mxu0 0
    %2909 = vmatpush1.bf16.msra.mxu0 0
    %2910 = vmatprep.subr.bf16.mxu0 0
    %2911 = vmatpush1.bf16.msra.mxu0 0
    %2912 = vmatprep.subr.bf16.mxu0 0
    %2913 = vmatpush1.bf16.msra.mxu0 0
    %2914 = vmatprep.subr.bf16.mxu0 0
    %2915 = vmatpush1.bf16.msra.mxu0 0
    %2916 = vmatprep.subr.bf16.mxu0 0
    %2917 = vmatpush1.bf16.msra.mxu0 0
    %2918 = vmatprep.subr.bf16.mxu0 0
    %2919 = vmatpush1.bf16.msra.mxu0 0
    %2920 = vmatprep.subr.bf16.mxu0 0
    %2921 = vmatpush1.bf16.msra.mxu0 0
    %2922 = vmatprep.subr.bf16.mxu0 0
    %2923 = vmatpush1.bf16.msra.mxu0 0
    %2924 = vmatprep.mubr.bf16.mxu0 0
    %2925 = vmatmul.mubr.bf16.gmra.mrb[0].mxu0 %v2754
    %v2926 = vpop.f32.mrb[0].mxu0
    %v2927 = vadd.f32 0.0, %v2926
    %v2928 = vpop.f32.mrb[0].mxu0
    %v2929 = vpop.f32.mrb[0].mxu0
    %v2930 = vadd.f32 0.0, %v2929
    %v2931 = vpop.f32.mrb[0].mxu0
    %2932 = vdwg.mxu0
    %2933 = vmatprep.subr.bf16.mxu0 0
    %2934 = vmatpush1.bf16.msra.mxu0 %v236
    %2935 = vmatprep.subr.bf16.mxu0 0
    %2936 = vmatpush1.bf16.msra.mxu0 %v237
    %2937 = vmatprep.subr.bf16.mxu0 0
    %2938 = vmatpush1.bf16.msra.mxu0 0
    %2939 = vmatprep.subr.bf16.mxu0 0
    %2940 = vmatpush1.bf16.msra.mxu0 0
    %2941 = vmatprep.subr.bf16.mxu0 0
    %2942 = vmatpush1.bf16.msra.mxu0 0
    %2943 = vmatprep.subr.bf16.mxu0 0
    %2944 = vmatpush1.bf16.msra.mxu0 0
    %2945 = vmatprep.subr.bf16.mxu0 0
    %2946 = vmatpush1.bf16.msra.mxu0 0
    %2947 = vmatprep.subr.bf16.mxu0 0
    %2948 = vmatpush1.bf16.msra.mxu0 0
    %2949 = vmatprep.subr.bf16.mxu0 0
    %2950 = vmatpush1.bf16.msra.mxu0 0
    %2951 = vmatprep.subr.bf16.mxu0 0
    %2952 = vmatpush1.bf16.msra.mxu0 0
    %2953 = vmatprep.subr.bf16.mxu0 0
    %2954 = vmatpush1.bf16.msra.mxu0 0
    %2955 = vmatprep.subr.bf16.mxu0 0
    %2956 = vmatpush1.bf16.msra.mxu0 0
    %2957 = vmatprep.subr.bf16.mxu0 0
    %2958 = vmatpush1.bf16.msra.mxu0 0
    %2959 = vmatprep.subr.bf16.mxu0 0
    %2960 = vmatpush1.bf16.msra.mxu0 0
    %2961 = vmatprep.subr.bf16.mxu0 0
    %2962 = vmatpush1.bf16.msra.mxu0 0
    %2963 = vmatprep.subr.bf16.mxu0 0
    %2964 = vmatpush1.bf16.msra.mxu0 0
    %2965 = vmatprep.mubr.bf16.mxu0 0
    %2966 = vmatmul.mubr.bf16.gmra.mrb[0].mxu0 %v2754
    %v2967 = vpop.f32.mrb[0].mxu0
    %v2968 = vadd.f32 0.0, %v2967
    %v2969 = vpop.f32.mrb[0].mxu0
    %v2970 = vpop.f32.mrb[0].mxu0
    %v2971 = vadd.f32 0.0, %v2970
    %v2972 = vpop.f32.mrb[0].mxu0
    %2973 = vdwg.mxu0
    %v2975 = vsel %vm179, %v2891, 0
    %2977 = vmatprep.subr.bf16.mxu0 0
    %2978 = vmatpush1.bf16.msra.mxu0 %v293
    %2979 = vmatprep.subr.bf16.mxu0 0
    %2980 = vmatpush1.bf16.msra.mxu0 %v294
    %2981 = vmatprep.subr.bf16.mxu0 0
    %2982 = vmatpush1.bf16.msra.mxu0 0
    %2983 = vmatprep.subr.bf16.mxu0 0
    %2984 = vmatpush1.bf16.msra.mxu0 0
    %2985 = vmatprep.subr.bf16.mxu0 0
    %2986 = vmatpush1.bf16.msra.mxu0 0
    %2987 = vmatprep.subr.bf16.mxu0 0
    %2988 = vmatpush1.bf16.msra.mxu0 0
    %2989 = vmatprep.subr.bf16.mxu0 0
    %2990 = vmatpush1.bf16.msra.mxu0 0
    %2991 = vmatprep.subr.bf16.mxu0 0
    %2992 = vmatpush1.bf16.msra.mxu0 0
    %2993 = vmatprep.subr.bf16.mxu0 0
    %2994 = vmatpush1.bf16.msra.mxu0 0
    %2995 = vmatprep.subr.bf16.mxu0 0
    %2996 = vmatpush1.bf16.msra.mxu0 0
    %2997 = vmatprep.subr.bf16.mxu0 0
    %2998 = vmatpush1.bf16.msra.mxu0 0
    %2999 = vmatprep.subr.bf16.mxu0 0
    %3000 = vmatpush1.bf16.msra.mxu0 0
    %3001 = vmatprep.subr.bf16.mxu0 0
    %3002 = vmatpush1.bf16.msra.mxu0 0
    %3003 = vmatprep.subr.bf16.mxu0 0
    %3004 = vmatpush1.bf16.msra.mxu0 0
    %3005 = vmatprep.subr.bf16.mxu0 0
    %3006 = vmatpush1.bf16.msra.mxu0 0
    %3007 = vmatprep.subr.bf16.mxu0 0
    %3008 = vmatpush1.bf16.msra.mxu0 0
    %3009 = vmatprep.mubr.bf16.mxu0 0
    %3010 = vmatmul.mubr.bf16.gmra.mrb[0].mxu0 %v2975
    %v3011 = vpop.f32.mrb[0].mxu0
    %v3012 = vadd.f32 %v2927, %v3011
    %v3013 = vpop.f32.mrb[0].mxu0
    %v3014 = vpop.f32.mrb[0].mxu0
    %v3015 = vadd.f32 %v2930, %v3014
    %v3016 = vpop.f32.mrb[0].mxu0
    %3017 = vdwg.mxu0
    %v3018 = vadd.f32 %v3012, %v345
    %v3019 = vadd.f32 %v3015, %v345
    %v3020 = vxor.u32 %v3018, 2147483648
    %v3021 = vxor.u32 %v3019, 2147483648
    %v3022 = vmul.f32 %v3020, 1.442695
    %v3023 = vpow.pop %v3022
    %v3024 = vmul.f32 %v3021, 1.442695
    %v3025 = vpow.pop %v3024
    %v3026 = vadd.f32 %v3023, 1.0
    %v3027 = vadd.f32 %v3025, 1.0
    %v3028 = vrcp.pop %v3026
    %v3029 = vmul.f32 1.0, %v3028
    %v3030 = vrcp.pop %v3027
    %v3031 = vmul.f32 1.0, %v3030
    %3032 = vmatprep.subr.bf16.mxu0 0
    %3033 = vmatpush1.bf16.msra.mxu0 %v369
    %3034 = vmatprep.subr.bf16.mxu0 0
    %3035 = vmatpush1.bf16.msra.mxu0 %v370
    %3036 = vmatprep.subr.bf16.mxu0 0
    %3037 = vmatpush1.bf16.msra.mxu0 0
    %3038 = vmatprep.subr.bf16.mxu0 0
    %3039 = vmatpush1.bf16.msra.mxu0 0
    %3040 = vmatprep.subr.bf16.mxu0 0
    %3041 = vmatpush1.bf16.msra.mxu0 0
    %3042 = vmatprep.subr.bf16.mxu0 0
    %3043 = vmatpush1.bf16.msra.mxu0 0
    %3044 = vmatprep.subr.bf16.mxu0 0
    %3045 = vmatpush1.bf16.msra.mxu0 0
    %3046 = vmatprep.subr.bf16.mxu0 0
    %3047 = vmatpush1.bf16.msra.mxu0 0
    %3048 = vmatprep.subr.bf16.mxu0 0
    %3049 = vmatpush1.bf16.msra.mxu0 0
    %3050 = vmatprep.subr.bf16.mxu0 0
    %3051 = vmatpush1.bf16.msra.mxu0 0
    %3052 = vmatprep.subr.bf16.mxu0 0
    %3053 = vmatpush1.bf16.msra.mxu0 0
    %3054 = vmatprep.subr.bf16.mxu0 0
    %3055 = vmatpush1.bf16.msra.mxu0 0
    %3056 = vmatprep.subr.bf16.mxu0 0
    %3057 = vmatpush1.bf16.msra.mxu0 0
    %3058 = vmatprep.subr.bf16.mxu0 0
    %3059 = vmatpush1.bf16.msra.mxu0 0
    %3060 = vmatprep.subr.bf16.mxu0 0
    %3061 = vmatpush1.bf16.msra.mxu0 0
    %3062 = vmatprep.subr.bf16.mxu0 0
    %3063 = vmatpush1.bf16.msra.mxu0 0
    %3064 = vmatprep.mubr.bf16.mxu0 0
    %3065 = vmatmul.mubr.bf16.gmra.mrb[0].mxu0 %v2975
    %v3066 = vpop.f32.mrb[0].mxu0
    %v3067 = vadd.f32 %v2968, %v3066
    %v3068 = vpop.f32.mrb[0].mxu0
    %v3069 = vpop.f32.mrb[0].mxu0
    %v3070 = vadd.f32 %v2971, %v3069
    %v3071 = vpop.f32.mrb[0].mxu0
    %3072 = vdwg.mxu0
    %v3073 = vadd.f32 %v3067, %v418
    %v3074 = vadd.f32 %v3070, %v418
    %v3075 = vxor.u32 %v3073, 2147483648
    %v3076 = vxor.u32 %v3074, 2147483648
    %v3077 = vmul.f32 %v3075, 1.442695
    %v3078 = vpow.pop %v3077
    %v3079 = vmul.f32 %v3076, 1.442695
    %v3080 = vpow.pop %v3079
    %v3081 = vadd.f32 %v3078, 1.0
    %v3082 = vadd.f32 %v3080, 1.0
    %v3083 = vrcp.pop %v3081
    %v3084 = vmul.f32 1.0, %v3083
    %v3085 = vrcp.pop %v3082
    %v3086 = vmul.f32 1.0, %v3085
    %3087 = vmatprep.subr.bf16.mxu0 0
    %3088 = vmatpush1.bf16.msra.mxu0 %v448
    %3089 = vmatprep.subr.bf16.mxu0 0
    %3090 = vmatpush1.bf16.msra.mxu0 %v449
    %3091 = vmatprep.subr.bf16.mxu0 0
    %3092 = vmatpush1.bf16.msra.mxu0 0
    %3093 = vmatprep.subr.bf16.mxu0 0
    %3094 = vmatpush1.bf16.msra.mxu0 0
    %3095 = vmatprep.subr.bf16.mxu0 0
    %3096 = vmatpush1.bf16.msra.mxu0 0
    %3097 = vmatprep.subr.bf16.mxu0 0
    %3098 = vmatpush1.bf16.msra.mxu0 0
    %3099 = vmatprep.subr.bf16.mxu0 0
    %3100 = vmatpush1.bf16.msra.mxu0 0
    %3101 = vmatprep.subr.bf16.mxu0 0
    %3102 = vmatpush1.bf16.msra.mxu0 0
    %3103 = vmatprep.subr.bf16.mxu0 0
    %3104 = vmatpush1.bf16.msra.mxu0 0
    %3105 = vmatprep.subr.bf16.mxu0 0
    %3106 = vmatpush1.bf16.msra.mxu0 0
    %3107 = vmatprep.subr.bf16.mxu0 0
    %3108 = vmatpush1.bf16.msra.mxu0 0
    %3109 = vmatprep.subr.bf16.mxu0 0
    %3110 = vmatpush1.bf16.msra.mxu0 0
    %3111 = vmatprep.subr.bf16.mxu0 0
    %3112 = vmatpush1.bf16.msra.mxu0 0
    %3113 = vmatprep.subr.bf16.mxu0 0
    %3114 = vmatpush1.bf16.msra.mxu0 0
    %3115 = vmatprep.subr.bf16.mxu0 0
    %3116 = vmatpush1.bf16.msra.mxu0 0
    %3117 = vmatprep.subr.bf16.mxu0 0
    %3118 = vmatpush1.bf16.msra.mxu0 0
    %3119 = vmatprep.mubr.bf16.mxu0 0
    %3120 = vmatmul.mubr.bf16.gmra.mrb[0].mxu0 %v2975
    %v3121 = vpop.f32.mrb[0].mxu0
    %v3122 = vadd.f32 %v438, %v3121
    %v3123 = vpop.f32.mrb[0].mxu0
    %v3124 = vpop.f32.mrb[0].mxu0
    %v3125 = vadd.f32 %v438, %v3124
    %v3126 = vpop.f32.mrb[0].mxu0
    %3127 = vdwg.mxu0
    %3128 = vmatprep.subr.bf16.mxu0 0
    %3129 = vmatpush1.bf16.msra.mxu0 %v507
    %3130 = vmatprep.subr.bf16.mxu0 0
    %3131 = vmatpush1.bf16.msra.mxu0 %v508
    %3132 = vmatprep.subr.bf16.mxu0 0
    %3133 = vmatpush1.bf16.msra.mxu0 0
    %3134 = vmatprep.subr.bf16.mxu0 0
    %3135 = vmatpush1.bf16.msra.mxu0 0
    %3136 = vmatprep.subr.bf16.mxu0 0
    %3137 = vmatpush1.bf16.msra.mxu0 0
    %3138 = vmatprep.subr.bf16.mxu0 0
    %3139 = vmatpush1.bf16.msra.mxu0 0
    %3140 = vmatprep.subr.bf16.mxu0 0
    %3141 = vmatpush1.bf16.msra.mxu0 0
    %3142 = vmatprep.subr.bf16.mxu0 0
    %3143 = vmatpush1.bf16.msra.mxu0 0
    %3144 = vmatprep.subr.bf16.mxu0 0
    %3145 = vmatpush1.bf16.msra.mxu0 0
    %3146 = vmatprep.subr.bf16.mxu0 0
    %3147 = vmatpush1.bf16.msra.mxu0 0
    %3148 = vmatprep.subr.bf16.mxu0 0
    %3149 = vmatpush1.bf16.msra.mxu0 0
    %3150 = vmatprep.subr.bf16.mxu0 0
    %3151 = vmatpush1.bf16.msra.mxu0 0
    %3152 = vmatprep.subr.bf16.mxu0 0
    %3153 = vmatpush1.bf16.msra.mxu0 0
    %3154 = vmatprep.subr.bf16.mxu0 0
    %3155 = vmatpush1.bf16.msra.mxu0 0
    %3156 = vmatprep.subr.bf16.mxu0 0
    %3157 = vmatpush1.bf16.msra.mxu0 0
    %3158 = vmatprep.subr.bf16.mxu0 0
    %3159 = vmatpush1.bf16.msra.mxu0 0
    %3160 = vmatprep.mubr.bf16.mxu0 0
    %3161 = vmatmul.mubr.bf16.gmra.mrb[0].mxu0 %v2754
    %v3162 = vpop.f32.mrb[0].mxu0
    %v3163 = vadd.f32 %v497, %v3162
    %v3164 = vpop.f32.mrb[0].mxu0
    %v3165 = vpop.f32.mrb[0].mxu0
    %v3166 = vadd.f32 %v497, %v3165
    %v3167 = vpop.f32.mrb[0].mxu0
    %3168 = vdwg.mxu0
    %v3169 = vmul.f32 %v3029, %v3163
    %v3170 = vmul.f32 %v3031, %v3166
    %v3171 = vadd.f32 %v3122, %v3169
    %v3172 = vadd.f32 %v3125, %v3170
    %v3173 = vtanh.pop %v3171
    %v3174 = vtanh.pop %v3172
    %v3175 = vsub.f32 1.0, %v3084
    %v3176 = vsub.f32 1.0, %v3086
    %v3177 = vmul.f32 %v3175, %v3173
    %v3178 = vmul.f32 %v3176, %v3174
    %v3179 = vmul.f32 %v3084, %v2750
    %v3180 = vmul.f32 %v3086, %v2751
    %v3181 = vadd.f32 %v3177, %v3179
    %v3182 = vadd.f32 %v3178, %v3180
    %v3183 = vpack.c.bf16 %v3182, %v3181
    %v3185 = vsel %vm179, %v3183, 0
    %3187 = vmatprep.subr.bf16.mxu0 0
    %3188 = vmatpush1.bf16.msra.mxu0 %v585
    %3189 = vmatprep.subr.bf16.mxu0 0
    %3190 = vmatpush1.bf16.msra.mxu0 %v586
    %3191 = vmatprep.subr.bf16.mxu0 0
    %3192 = vmatpush1.bf16.msra.mxu0 0
    %3193 = vmatprep.subr.bf16.mxu0 0
    %3194 = vmatpush1.bf16.msra.mxu0 0
    %3195 = vmatprep.subr.bf16.mxu0 0
    %3196 = vmatpush1.bf16.msra.mxu0 0
    %3197 = vmatprep.subr.bf16.mxu0 0
    %3198 = vmatpush1.bf16.msra.mxu0 0
    %3199 = vmatprep.subr.bf16.mxu0 0
    %3200 = vmatpush1.bf16.msra.mxu0 0
    %3201 = vmatprep.subr.bf16.mxu0 0
    %3202 = vmatpush1.bf16.msra.mxu0 0
    %3203 = vmatprep.subr.bf16.mxu0 0
    %3204 = vmatpush1.bf16.msra.mxu0 0
    %3205 = vmatprep.subr.bf16.mxu0 0
    %3206 = vmatpush1.bf16.msra.mxu0 0
    %3207 = vmatprep.subr.bf16.mxu0 0
    %3208 = vmatpush1.bf16.msra.mxu0 0
    %3209 = vmatprep.subr.bf16.mxu0 0
    %3210 = vmatpush1.bf16.msra.mxu0 0
    %3211 = vmatprep.subr.bf16.mxu0 0
    %3212 = vmatpush1.bf16.msra.mxu0 0
    %3213 = vmatprep.subr.bf16.mxu0 0
    %3214 = vmatpush1.bf16.msra.mxu0 0
    %3215 = vmatprep.subr.bf16.mxu0 0
    %3216 = vmatpush1.bf16.msra.mxu0 0
    %3217 = vmatprep.subr.bf16.mxu0 0
    %3218 = vmatpush1.bf16.msra.mxu0 0
    %3219 = vmatprep.mubr.bf16.mxu0 0
    %3220 = vmatmul.mubr.bf16.gmra.mrb[0].mxu0 %v3185
    %v3221 = vpop.f32.mrb[0].mxu0
    %v3222 = vadd.f32 %v575, %v3221
    %v3223 = vpop.f32.mrb[0].mxu0
    %v3224 = vpop.f32.mrb[0].mxu0
    %v3225 = vadd.f32 %v575, %v3224
    %v3226 = vpop.f32.mrb[0].mxu0
    %3227 = vdwg.mxu0
    %v3228 = vsel %vm633, %v3222, -inf
    %3229 = vmax.xlane.f32.xlu0 %v3228
    %v3230 = vpop.xlane.xlu0 %3229
    %v3231 = vsel %vm633, %v3225, -inf
    %3232 = vmax.xlane.f32.xlu0 %v3231
    %v3233 = vpop.xlane.xlu0 %3232
    %vm3234 = vcmp.eq.f32.partialorder %v3222, %v3230
    %vm3235 = vcmp.eq.f32.partialorder %v3225, %v3233
    %v3236 = vsel %vm3234, %v144, 16
    %v3237 = vsel %vm3235, %v144, 16
    %v3238 = vsel %vm633, %v3236, 2147483647
    %v3239 = vand.u32 %v3238, 65535
    %v3240 = vshra.s32 %v3238, 16
    %v3241 = vcvt.s32.f32 %v3239
    %v3242 = vcvt.s32.f32 %v3240
    %3243 = vmin.xlane.f32.xlu0 %v3242
    %v3244 = vpop.xlane.xlu0 %3243
    %vm3245 = vcmp.eq.f32.partialorder %v3242, %v3244
    %v3246 = vsel %vm3245, %v3241, inf
    %3247 = vmin.xlane.f32.xlu0 %v3246
    %v3248 = vpop.xlane.xlu0 %3247
    %v3249 = vcvt.f32.s32 %v3248
    %v3250 = vcvt.f32.s32 %v3244
    %v3251 = vshll.u32 %v3250, 16
    %v3252 = vadd.s32 %v3251, %v3249
    %v3253 = vsel %vm633, %v3237, 2147483647
    %v3254 = vand.u32 %v3253, 65535
    %v3255 = vshra.s32 %v3253, 16
    %v3256 = vcvt.s32.f32 %v3254
    %v3257 = vcvt.s32.f32 %v3255
    %3258 = vmin.xlane.f32.xlu0 %v3257
    %v3259 = vpop.xlane.xlu0 %3258
    %vm3260 = vcmp.eq.f32.partialorder %v3257, %v3259
    %v3261 = vsel %vm3260, %v3256, inf
    %3262 = vmin.xlane.f32.xlu0 %v3261
    %v3263 = vpop.xlane.xlu0 %3262
    %v3264 = vcvt.f32.s32 %v3263
    %v3265 = vcvt.f32.s32 %v3259
    %v3266 = vshll.u32 %v3265, 16
    %v3267 = vadd.s32 %v3266, %v3264
    %vm3268 = vcmp.eq.s32.totalorder %v144, 6
    %v3269 = vsel %vm3268, %v3252, %v2838
    %v3270 = vsel %vm3268, %v3267, %v2839
    %vm3271 = vcmp.eq.s32.totalorder %v144, %v3252
    %vm3272 = vcmp.eq.s32.totalorder %v144, %v3267
    %v3273 = vsel %vm3271, 1, 0
    %v3274 = vsel %vm3272, 1, 0
    %v3275 = vcvt.s32.f32 %v3273
    %v3276 = vcvt.s32.f32 %v3274
    %v3277 = vpack.c.bf16 %v3276, %v3275
    %v3279 = vsel %vm633, %v3277, 0
    %3281 = vmatprep.subr.bf16.mxu0 0
    %3282 = vmatpush1.bf16.msra.mxu0 %v690
    %3283 = vmatprep.subr.bf16.mxu0 0
    %3284 = vmatpush1.bf16.msra.mxu0 0
    %3285 = vmatprep.subr.bf16.mxu0 0
    %3286 = vmatpush1.bf16.msra.mxu0 0
    %3287 = vmatprep.subr.bf16.mxu0 0
    %3288 = vmatpush1.bf16.msra.mxu0 0
    %3289 = vmatprep.subr.bf16.mxu0 0
    %3290 = vmatpush1.bf16.msra.mxu0 0
    %3291 = vmatprep.subr.bf16.mxu0 0
    %3292 = vmatpush1.bf16.msra.mxu0 0
    %3293 = vmatprep.subr.bf16.mxu0 0
    %3294 = vmatpush1.bf16.msra.mxu0 0
    %3295 = vmatprep.subr.bf16.mxu0 0
    %3296 = vmatpush1.bf16.msra.mxu0 0
    %3297 = vmatprep.subr.bf16.mxu0 0
    %3298 = vmatpush1.bf16.msra.mxu0 0
    %3299 = vmatprep.subr.bf16.mxu0 0
    %3300 = vmatpush1.bf16.msra.mxu0 0
    %3301 = vmatprep.subr.bf16.mxu0 0
    %3302 = vmatpush1.bf16.msra.mxu0 0
    %3303 = vmatprep.subr.bf16.mxu0 0
    %3304 = vmatpush1.bf16.msra.mxu0 0
    %3305 = vmatprep.subr.bf16.mxu0 0
    %3306 = vmatpush1.bf16.msra.mxu0 0
    %3307 = vmatprep.subr.bf16.mxu0 0
    %3308 = vmatpush1.bf16.msra.mxu0 0
    %3309 = vmatprep.subr.bf16.mxu0 0
    %3310 = vmatpush1.bf16.msra.mxu0 0
    %3311 = vmatprep.subr.bf16.mxu0 0
    %3312 = vmatpush1.bf16.msra.mxu0 0
    %3313 = vmatprep.mubr.bf16.mxu0 0
    %3314 = vmatmul.mubr.bf16.gmra.mrb[0].mxu0 %v3279
    %v3315 = vpop.f32.mrb[0].mxu0
    %v3316 = vadd.f32 0.0, %v3315
    %v3317 = vpop.f32.mrb[0].mxu0
    %v3318 = vpop.f32.mrb[0].mxu0
    %v3319 = vadd.f32 0.0, %v3318
    %v3320 = vpop.f32.mrb[0].mxu0
    %3321 = vdwg.mxu0
    %v3322 = vpack.c.bf16 %v3319, %v3316
    %3323 = vmatprep.subr.bf16.mxu0 0
    %3324 = vmatpush1.bf16.msra.mxu0 %v175
    %3325 = vmatprep.subr.bf16.mxu0 0
    %3326 = vmatpush1.bf16.msra.mxu0 %v176
    %3327 = vmatprep.subr.bf16.mxu0 0
    %3328 = vmatpush1.bf16.msra.mxu0 0
    %3329 = vmatprep.subr.bf16.mxu0 0
    %3330 = vmatpush1.bf16.msra.mxu0 0
    %3331 = vmatprep.subr.bf16.mxu0 0
    %3332 = vmatpush1.bf16.msra.mxu0 0
    %3333 = vmatprep.subr.bf16.mxu0 0
    %3334 = vmatpush1.bf16.msra.mxu0 0
    %3335 = vmatprep.subr.bf16.mxu0 0
    %3336 = vmatpush1.bf16.msra.mxu0 0
    %3337 = vmatprep.subr.bf16.mxu0 0
    %3338 = vmatpush1.bf16.msra.mxu0 0
    %3339 = vmatprep.subr.bf16.mxu0 0
    %3340 = vmatpush1.bf16.msra.mxu0 0
    %3341 = vmatprep.subr.bf16.mxu0 0
    %3342 = vmatpush1.bf16.msra.mxu0 0
    %3343 = vmatprep.subr.bf16.mxu0 0
    %3344 = vmatpush1.bf16.msra.mxu0 0
    %3345 = vmatprep.subr.bf16.mxu0 0
    %3346 = vmatpush1.bf16.msra.mxu0 0
    %3347 = vmatprep.subr.bf16.mxu0 0
    %3348 = vmatpush1.bf16.msra.mxu0 0
    %3349 = vmatprep.subr.bf16.mxu0 0
    %3350 = vmatpush1.bf16.msra.mxu0 0
    %3351 = vmatprep.subr.bf16.mxu0 0
    %3352 = vmatpush1.bf16.msra.mxu0 0
    %3353 = vmatprep.subr.bf16.mxu0 0
    %3354 = vmatpush1.bf16.msra.mxu0 0
    %3355 = vmatprep.mubr.bf16.mxu0 0
    %3356 = vmatmul.mubr.bf16.gmra.mrb[0].mxu0 %v3185
    %v3357 = vpop.f32.mrb[0].mxu0
    %v3358 = vadd.f32 0.0, %v3357
    %v3359 = vpop.f32.mrb[0].mxu0
    %v3360 = vpop.f32.mrb[0].mxu0
    %v3361 = vadd.f32 0.0, %v3360
    %v3362 = vpop.f32.mrb[0].mxu0
    %3363 = vdwg.mxu0
    %3364 = vmatprep.subr.bf16.mxu0 0
    %3365 = vmatpush1.bf16.msra.mxu0 %v236
    %3366 = vmatprep.subr.bf16.mxu0 0
    %3367 = vmatpush1.bf16.msra.mxu0 %v237
    %3368 = vmatprep.subr.bf16.mxu0 0
    %3369 = vmatpush1.bf16.msra.mxu0 0
    %3370 = vmatprep.subr.bf16.mxu0 0
    %3371 = vmatpush1.bf16.msra.mxu0 0
    %3372 = vmatprep.subr.bf16.mxu0 0
    %3373 = vmatpush1.bf16.msra.mxu0 0
    %3374 = vmatprep.subr.bf16.mxu0 0
    %3375 = vmatpush1.bf16.msra.mxu0 0
    %3376 = vmatprep.subr.bf16.mxu0 0
    %3377 = vmatpush1.bf16.msra.mxu0 0
    %3378 = vmatprep.subr.bf16.mxu0 0
    %3379 = vmatpush1.bf16.msra.mxu0 0
    %3380 = vmatprep.subr.bf16.mxu0 0
    %3381 = vmatpush1.bf16.msra.mxu0 0
    %3382 = vmatprep.subr.bf16.mxu0 0
    %3383 = vmatpush1.bf16.msra.mxu0 0
    %3384 = vmatprep.subr.bf16.mxu0 0
    %3385 = vmatpush1.bf16.msra.mxu0 0
    %3386 = vmatprep.subr.bf16.mxu0 0
    %3387 = vmatpush1.bf16.msra.mxu0 0
    %3388 = vmatprep.subr.bf16.mxu0 0
    %3389 = vmatpush1.bf16.msra.mxu0 0
    %3390 = vmatprep.subr.bf16.mxu0 0
    %3391 = vmatpush1.bf16.msra.mxu0 0
    %3392 = vmatprep.subr.bf16.mxu0 0
    %3393 = vmatpush1.bf16.msra.mxu0 0
    %3394 = vmatprep.subr.bf16.mxu0 0
    %3395 = vmatpush1.bf16.msra.mxu0 0
    %3396 = vmatprep.mubr.bf16.mxu0 0
    %3397 = vmatmul.mubr.bf16.gmra.mrb[0].mxu0 %v3185
    %v3398 = vpop.f32.mrb[0].mxu0
    %v3399 = vadd.f32 0.0, %v3398
    %v3400 = vpop.f32.mrb[0].mxu0
    %v3401 = vpop.f32.mrb[0].mxu0
    %v3402 = vadd.f32 0.0, %v3401
    %v3403 = vpop.f32.mrb[0].mxu0
    %3404 = vdwg.mxu0
    %v3406 = vsel %vm179, %v3322, 0
    %3408 = vmatprep.subr.bf16.mxu0 0
    %3409 = vmatpush1.bf16.msra.mxu0 %v293
    %3410 = vmatprep.subr.bf16.mxu0 0
    %3411 = vmatpush1.bf16.msra.mxu0 %v294
    %3412 = vmatprep.subr.bf16.mxu0 0
    %3413 = vmatpush1.bf16.msra.mxu0 0
    %3414 = vmatprep.subr.bf16.mxu0 0
    %3415 = vmatpush1.bf16.msra.mxu0 0
    %3416 = vmatprep.subr.bf16.mxu0 0
    %3417 = vmatpush1.bf16.msra.mxu0 0
    %3418 = vmatprep.subr.bf16.mxu0 0
    %3419 = vmatpush1.bf16.msra.mxu0 0
    %3420 = vmatprep.subr.bf16.mxu0 0
    %3421 = vmatpush1.bf16.msra.mxu0 0
    %3422 = vmatprep.subr.bf16.mxu0 0
    %3423 = vmatpush1.bf16.msra.mxu0 0
    %3424 = vmatprep.subr.bf16.mxu0 0
    %3425 = vmatpush1.bf16.msra.mxu0 0
    %3426 = vmatprep.subr.bf16.mxu0 0
    %3427 = vmatpush1.bf16.msra.mxu0 0
    %3428 = vmatprep.subr.bf16.mxu0 0
    %3429 = vmatpush1.bf16.msra.mxu0 0
    %3430 = vmatprep.subr.bf16.mxu0 0
    %3431 = vmatpush1.bf16.msra.mxu0 0
    %3432 = vmatprep.subr.bf16.mxu0 0
    %3433 = vmatpush1.bf16.msra.mxu0 0
    %3434 = vmatprep.subr.bf16.mxu0 0
    %3435 = vmatpush1.bf16.msra.mxu0 0
    %3436 = vmatprep.subr.bf16.mxu0 0
    %3437 = vmatpush1.bf16.msra.mxu0 0
    %3438 = vmatprep.subr.bf16.mxu0 0
    %3439 = vmatpush1.bf16.msra.mxu0 0
    %3440 = vmatprep.mubr.bf16.mxu0 0
    %3441 = vmatmul.mubr.bf16.gmra.mrb[0].mxu0 %v3406
    %v3442 = vpop.f32.mrb[0].mxu0
    %v3443 = vadd.f32 %v3358, %v3442
    %v3444 = vpop.f32.mrb[0].mxu0
    %v3445 = vpop.f32.mrb[0].mxu0
    %v3446 = vadd.f32 %v3361, %v3445
    %v3447 = vpop.f32.mrb[0].mxu0
    %3448 = vdwg.mxu0
    %v3449 = vadd.f32 %v3443, %v345
    %v3450 = vadd.f32 %v3446, %v345
    %v3451 = vxor.u32 %v3449, 2147483648
    %v3452 = vxor.u32 %v3450, 2147483648
    %v3453 = vmul.f32 %v3451, 1.442695
    %v3454 = vpow.pop %v3453
    %v3455 = vmul.f32 %v3452, 1.442695
    %v3456 = vpow.pop %v3455
    %v3457 = vadd.f32 %v3454, 1.0
    %v3458 = vadd.f32 %v3456, 1.0
    %v3459 = vrcp.pop %v3457
    %v3460 = vmul.f32 1.0, %v3459
    %v3461 = vrcp.pop %v3458
    %v3462 = vmul.f32 1.0, %v3461
    %3463 = vmatprep.subr.bf16.mxu0 0
    %3464 = vmatpush1.bf16.msra.mxu0 %v369
    %3465 = vmatprep.subr.bf16.mxu0 0
    %3466 = vmatpush1.bf16.msra.mxu0 %v370
    %3467 = vmatprep.subr.bf16.mxu0 0
    %3468 = vmatpush1.bf16.msra.mxu0 0
    %3469 = vmatprep.subr.bf16.mxu0 0
    %3470 = vmatpush1.bf16.msra.mxu0 0
    %3471 = vmatprep.subr.bf16.mxu0 0
    %3472 = vmatpush1.bf16.msra.mxu0 0
    %3473 = vmatprep.subr.bf16.mxu0 0
    %3474 = vmatpush1.bf16.msra.mxu0 0
    %3475 = vmatprep.subr.bf16.mxu0 0
    %3476 = vmatpush1.bf16.msra.mxu0 0
    %3477 = vmatprep.subr.bf16.mxu0 0
    %3478 = vmatpush1.bf16.msra.mxu0 0
    %3479 = vmatprep.subr.bf16.mxu0 0
    %3480 = vmatpush1.bf16.msra.mxu0 0
    %3481 = vmatprep.subr.bf16.mxu0 0
    %3482 = vmatpush1.bf16.msra.mxu0 0
    %3483 = vmatprep.subr.bf16.mxu0 0
    %3484 = vmatpush1.bf16.msra.mxu0 0
    %3485 = vmatprep.subr.bf16.mxu0 0
    %3486 = vmatpush1.bf16.msra.mxu0 0
    %3487 = vmatprep.subr.bf16.mxu0 0
    %3488 = vmatpush1.bf16.msra.mxu0 0
    %3489 = vmatprep.subr.bf16.mxu0 0
    %3490 = vmatpush1.bf16.msra.mxu0 0
    %3491 = vmatprep.subr.bf16.mxu0 0
    %3492 = vmatpush1.bf16.msra.mxu0 0
    %3493 = vmatprep.subr.bf16.mxu0 0
    %3494 = vmatpush1.bf16.msra.mxu0 0
    %3495 = vmatprep.mubr.bf16.mxu0 0
    %3496 = vmatmul.mubr.bf16.gmra.mrb[0].mxu0 %v3406
    %v3497 = vpop.f32.mrb[0].mxu0
    %v3498 = vadd.f32 %v3399, %v3497
    %v3499 = vpop.f32.mrb[0].mxu0
    %v3500 = vpop.f32.mrb[0].mxu0
    %v3501 = vadd.f32 %v3402, %v3500
    %v3502 = vpop.f32.mrb[0].mxu0
    %3503 = vdwg.mxu0
    %v3504 = vadd.f32 %v3498, %v418
    %v3505 = vadd.f32 %v3501, %v418
    %v3506 = vxor.u32 %v3504, 2147483648
    %v3507 = vxor.u32 %v3505, 2147483648
    %v3508 = vmul.f32 %v3506, 1.442695
    %v3509 = vpow.pop %v3508
    %v3510 = vmul.f32 %v3507, 1.442695
    %v3511 = vpow.pop %v3510
    %v3512 = vadd.f32 %v3509, 1.0
    %v3513 = vadd.f32 %v3511, 1.0
    %v3514 = vrcp.pop %v3512
    %v3515 = vmul.f32 1.0, %v3514
    %v3516 = vrcp.pop %v3513
    %v3517 = vmul.f32 1.0, %v3516
    %3518 = vmatprep.subr.bf16.mxu0 0
    %3519 = vmatpush1.bf16.msra.mxu0 %v448
    %3520 = vmatprep.subr.bf16.mxu0 0
    %3521 = vmatpush1.bf16.msra.mxu0 %v449
    %3522 = vmatprep.subr.bf16.mxu0 0
    %3523 = vmatpush1.bf16.msra.mxu0 0
    %3524 = vmatprep.subr.bf16.mxu0 0
    %3525 = vmatpush1.bf16.msra.mxu0 0
    %3526 = vmatprep.subr.bf16.mxu0 0
    %3527 = vmatpush1.bf16.msra.mxu0 0
    %3528 = vmatprep.subr.bf16.mxu0 0
    %3529 = vmatpush1.bf16.msra.mxu0 0
    %3530 = vmatprep.subr.bf16.mxu0 0
    %3531 = vmatpush1.bf16.msra.mxu0 0
    %3532 = vmatprep.subr.bf16.mxu0 0
    %3533 = vmatpush1.bf16.msra.mxu0 0
    %3534 = vmatprep.subr.bf16.mxu0 0
    %3535 = vmatpush1.bf16.msra.mxu0 0
    %3536 = vmatprep.subr.bf16.mxu0 0
    %3537 = vmatpush1.bf16.msra.mxu0 0
    %3538 = vmatprep.subr.bf16.mxu0 0
    %3539 = vmatpush1.bf16.msra.mxu0 0
    %3540 = vmatprep.subr.bf16.mxu0 0
    %3541 = vmatpush1.bf16.msra.mxu0 0
    %3542 = vmatprep.subr.bf16.mxu0 0
    %3543 = vmatpush1.bf16.msra.mxu0 0
    %3544 = vmatprep.subr.bf16.mxu0 0
    %3545 = vmatpush1.bf16.msra.mxu0 0
    %3546 = vmatprep.subr.bf16.mxu0 0
    %3547 = vmatpush1.bf16.msra.mxu0 0
    %3548 = vmatprep.subr.bf16.mxu0 0
    %3549 = vmatpush1.bf16.msra.mxu0 0
    %3550 = vmatprep.mubr.bf16.mxu0 0
    %3551 = vmatmul.mubr.bf16.gmra.mrb[0].mxu0 %v3406
    %v3552 = vpop.f32.mrb[0].mxu0
    %v3553 = vadd.f32 %v438, %v3552
    %v3554 = vpop.f32.mrb[0].mxu0
    %v3555 = vpop.f32.mrb[0].mxu0
    %v3556 = vadd.f32 %v438, %v3555
    %v3557 = vpop.f32.mrb[0].mxu0
    %3558 = vdwg.mxu0
    %3559 = vmatprep.subr.bf16.mxu0 0
    %3560 = vmatpush1.bf16.msra.mxu0 %v507
    %3561 = vmatprep.subr.bf16.mxu0 0
    %3562 = vmatpush1.bf16.msra.mxu0 %v508
    %3563 = vmatprep.subr.bf16.mxu0 0
    %3564 = vmatpush1.bf16.msra.mxu0 0
    %3565 = vmatprep.subr.bf16.mxu0 0
    %3566 = vmatpush1.bf16.msra.mxu0 0
    %3567 = vmatprep.subr.bf16.mxu0 0
    %3568 = vmatpush1.bf16.msra.mxu0 0
    %3569 = vmatprep.subr.bf16.mxu0 0
    %3570 = vmatpush1.bf16.msra.mxu0 0
    %3571 = vmatprep.subr.bf16.mxu0 0
    %3572 = vmatpush1.bf16.msra.mxu0 0
    %3573 = vmatprep.subr.bf16.mxu0 0
    %3574 = vmatpush1.bf16.msra.mxu0 0
    %3575 = vmatprep.subr.bf16.mxu0 0
    %3576 = vmatpush1.bf16.msra.mxu0 0
    %3577 = vmatprep.subr.bf16.mxu0 0
    %3578 = vmatpush1.bf16.msra.mxu0 0
    %3579 = vmatprep.subr.bf16.mxu0 0
    %3580 = vmatpush1.bf16.msra.mxu0 0
    %3581 = vmatprep.subr.bf16.mxu0 0
    %3582 = vmatpush1.bf16.msra.mxu0 0
    %3583 = vmatprep.subr.bf16.mxu0 0
    %3584 = vmatpush1.bf16.msra.mxu0 0
    %3585 = vmatprep.subr.bf16.mxu0 0
    %3586 = vmatpush1.bf16.msra.mxu0 0
    %3587 = vmatprep.subr.bf16.mxu0 0
    %3588 = vmatpush1.bf16.msra.mxu0 0
    %3589 = vmatprep.subr.bf16.mxu0 0
    %3590 = vmatpush1.bf16.msra.mxu0 0
    %3591 = vmatprep.mubr.bf16.mxu0 0
    %3592 = vmatmul.mubr.bf16.gmra.mrb[0].mxu0 %v3185
    %v3593 = vpop.f32.mrb[0].mxu0
    %v3594 = vadd.f32 %v497, %v3593
    %v3595 = vpop.f32.mrb[0].mxu0
    %v3596 = vpop.f32.mrb[0].mxu0
    %v3597 = vadd.f32 %v497, %v3596
    %v3598 = vpop.f32.mrb[0].mxu0
    %3599 = vdwg.mxu0
    %v3600 = vmul.f32 %v3460, %v3594
    %v3601 = vmul.f32 %v3462, %v3597
    %v3602 = vadd.f32 %v3553, %v3600
    %v3603 = vadd.f32 %v3556, %v3601
    %v3604 = vtanh.pop %v3602
    %v3605 = vtanh.pop %v3603
    %v3606 = vsub.f32 1.0, %v3515
    %v3607 = vsub.f32 1.0, %v3517
    %v3608 = vmul.f32 %v3606, %v3604
    %v3609 = vmul.f32 %v3607, %v3605
    %v3610 = vmul.f32 %v3515, %v3181
    %v3611 = vmul.f32 %v3517, %v3182
    %v3612 = vadd.f32 %v3608, %v3610
    %v3613 = vadd.f32 %v3609, %v3611
    %v3614 = vpack.c.bf16 %v3613, %v3612
    %v3616 = vsel %vm179, %v3614, 0
    %3618 = vmatprep.subr.bf16.mxu0 0
    %3619 = vmatpush1.bf16.msra.mxu0 %v585
    %3620 = vmatprep.subr.bf16.mxu0 0
    %3621 = vmatpush1.bf16.msra.mxu0 %v586
    %3622 = vmatprep.subr.bf16.mxu0 0
    %3623 = vmatpush1.bf16.msra.mxu0 0
    %3624 = vmatprep.subr.bf16.mxu0 0
    %3625 = vmatpush1.bf16.msra.mxu0 0
    %3626 = vmatprep.subr.bf16.mxu0 0
    %3627 = vmatpush1.bf16.msra.mxu0 0
    %3628 = vmatprep.subr.bf16.mxu0 0
    %3629 = vmatpush1.bf16.msra.mxu0 0
    %3630 = vmatprep.subr.bf16.mxu0 0
    %3631 = vmatpush1.bf16.msra.mxu0 0
    %3632 = vmatprep.subr.bf16.mxu0 0
    %3633 = vmatpush1.bf16.msra.mxu0 0
    %3634 = vmatprep.subr.bf16.mxu0 0
    %3635 = vmatpush1.bf16.msra.mxu0 0
    %3636 = vmatprep.subr.bf16.mxu0 0
    %3637 = vmatpush1.bf16.msra.mxu0 0
    %3638 = vmatprep.subr.bf16.mxu0 0
    %3639 = vmatpush1.bf16.msra.mxu0 0
    %3640 = vmatprep.subr.bf16.mxu0 0
    %3641 = vmatpush1.bf16.msra.mxu0 0
    %3642 = vmatprep.subr.bf16.mxu0 0
    %3643 = vmatpush1.bf16.msra.mxu0 0
    %3644 = vmatprep.subr.bf16.mxu0 0
    %3645 = vmatpush1.bf16.msra.mxu0 0
    %3646 = vmatprep.subr.bf16.mxu0 0
    %3647 = vmatpush1.bf16.msra.mxu0 0
    %3648 = vmatprep.subr.bf16.mxu0 0
    %3649 = vmatpush1.bf16.msra.mxu0 0
    %3650 = vmatprep.mubr.bf16.mxu0 0
    %3651 = vmatmul.mubr.bf16.gmra.mrb[0].mxu0 %v3616
    %v3652 = vpop.f32.mrb[0].mxu0
    %v3653 = vadd.f32 %v575, %v3652
    %v3654 = vpop.f32.mrb[0].mxu0
    %v3655 = vpop.f32.mrb[0].mxu0
    %v3656 = vadd.f32 %v575, %v3655
    %v3657 = vpop.f32.mrb[0].mxu0
    %3658 = vdwg.mxu0
    %v3659 = vsel %vm633, %v3653, -inf
    %3660 = vmax.xlane.f32.xlu0 %v3659
    %v3661 = vpop.xlane.xlu0 %3660
    %v3662 = vsel %vm633, %v3656, -inf
    %3663 = vmax.xlane.f32.xlu0 %v3662
    %v3664 = vpop.xlane.xlu0 %3663
    %vm3665 = vcmp.eq.f32.partialorder %v3653, %v3661
    %vm3666 = vcmp.eq.f32.partialorder %v3656, %v3664
    %v3667 = vsel %vm3665, %v144, 16
    %v3668 = vsel %vm3666, %v144, 16
    %v3669 = vsel %vm633, %v3667, 2147483647
    %v3670 = vand.u32 %v3669, 65535
    %v3671 = vshra.s32 %v3669, 16
    %v3672 = vcvt.s32.f32 %v3670
    %v3673 = vcvt.s32.f32 %v3671
    %3674 = vmin.xlane.f32.xlu0 %v3673
    %v3675 = vpop.xlane.xlu0 %3674
    %vm3676 = vcmp.eq.f32.partialorder %v3673, %v3675
    %v3677 = vsel %vm3676, %v3672, inf
    %3678 = vmin.xlane.f32.xlu0 %v3677
    %v3679 = vpop.xlane.xlu0 %3678
    %v3680 = vcvt.f32.s32 %v3679
    %v3681 = vcvt.f32.s32 %v3675
    %v3682 = vshll.u32 %v3681, 16
    %v3683 = vadd.s32 %v3682, %v3680
    %v3684 = vsel %vm633, %v3668, 2147483647
    %v3685 = vand.u32 %v3684, 65535
    %v3686 = vshra.s32 %v3684, 16
    %v3687 = vcvt.s32.f32 %v3685
    %v3688 = vcvt.s32.f32 %v3686
    %3689 = vmin.xlane.f32.xlu0 %v3688
    %v3690 = vpop.xlane.xlu0 %3689
    %vm3691 = vcmp.eq.f32.partialorder %v3688, %v3690
    %v3692 = vsel %vm3691, %v3687, inf
    %3693 = vmin.xlane.f32.xlu0 %v3692
    %v3694 = vpop.xlane.xlu0 %3693
    %v3695 = vcvt.f32.s32 %v3694
    %v3696 = vcvt.f32.s32 %v3690
    %v3697 = vshll.u32 %v3696, 16
    %v3698 = vadd.s32 %v3697, %v3695
    %vm3699 = vcmp.eq.s32.totalorder %v144, 7
    %v3700 = vsel %vm3699, %v3683, %v3269
    %v3701 = vsel %vm3699, %v3698, %v3270
    %vm3702 = vcmask 64512
    %3703 = vst.msk [vmem:[%s15] sm:$0xff] %vm3702, %v3700
    %3704 = vst.msk [vmem:[%s15 + $0x8] sm:$0xff] %vm3702, %v3701
    %3705 = vst.msk [vmem:[%s16] sm:$0xff] %vm179, %v3612
    %3706 = vst.msk [vmem:[%s16 + $0x8] sm:$0xff] %vm179, %v3613
    // Predicated region
    $region90: #{text_decoder_forward.1} parent=1 // pred_check
      _
    $region91: #{text_decoder_forward.1} parent=1 // pred_check_branch
      %3708 = sbr.rel (0) target = $region93
    $region92: #{text_decoder_forward.1} parent=1 // pred_region
      _
    $region93: #{text_decoder_forward.1} parent=1 // pred_fallthru
      _
    // Predicated region
    $region94: #{text_decoder_forward.1} parent=1 // pred_check
      _
    $region95: #{text_decoder_forward.1} parent=1 // pred_check_branch
      %3710 = sbr.rel (0) target = $region97
    $region96: #{text_decoder_forward.1} parent=1 // pred_region
      _
    $region97: #{text_decoder_forward.1} parent=1 // pred_fallthru
      _
    // Predicated region
    $region98: #{text_decoder_forward.1} parent=1 // pred_check
      _
    $region99: #{text_decoder_forward.1} parent=1 // pred_check_branch
      %3712 = sbr.rel (0) target = $region101
    $region100: #{text_decoder_forward.1} parent=1 // pred_region
      _
    $region101: #{text_decoder_forward.1} parent=1 // pred_fallthru
      _
    // Predicated region
    $region102: #{text_decoder_forward.1} parent=1 // pred_check
      _
    $region103: #{text_decoder_forward.1} parent=1 // pred_check_branch
      %3714 = sbr.rel (0) target = $region105
    $region104: #{text_decoder_forward.1} parent=1 // pred_region
      _
    $region105: #{text_decoder_forward.1} parent=1 // pred_fallthru
      _
    %3715 = vsyncpa [#allocation3], 1
    %3716 = vsyncpa [#allocation5], 1
    %3717 = vsyncpa [#allocation8], 1
    %3718 = vsyncpa [#allocation11], 1

</llo_original>
